<compile_context>
chip_gen: v5e
topology: v5e:2x2
jax: 0.10.0
libtpu: 0.0.40
codegen_flags: <defaults>
</compile_context>

<pallas_src>
import jax
import jax.numpy as jnp
import numpy as np
from jax.experimental import pallas as pl
from jax.experimental.pallas import tpu as pltpu


# ----------------------------------------------------------------------------- kernel


def _domain_classifier_kernel(
    b4_ref,                # SMEM (1,)      final-layer bias (f32)
    x_ref,                 # (TB, Din)      input row-tile (bf16)
    w1_ref, t1_ref,        # (Din, Db) bf16, (1, Db) f32    bottleneck Linear (BN scale folded) + shift
    w2_ref, t2_ref,        # (Db, Dh)  bf16, (1, Dh) f32    discriminator layer 1
    w3_ref, t3_ref,        # (Dh, Dh)  bf16, (1, Dh) f32    discriminator layer 2
    w4_ref,                # (1, Dh)   f32                  final Linear weight (row layout)
    pred_ref,              # (TB, 1)   f32                  sigmoid predictions
    f_ref,                 # (TB, Db)  f32                  bottleneck features
):
    x = x_ref[...]                                                     # bf16

    # bottleneck: Linear (BN scale pre-folded into weight) -> +shift -> ReLU
    f = jnp.dot(x, w1_ref[...], preferred_element_type=jnp.float32)    # MXU, f32 acc
    f = jnp.maximum(f + t1_ref[...], 0.0)
    f_ref[...] = f.astype(f_ref.dtype)

    # domain discriminator hidden layers (bf16 MXU inputs, f32 accumulation + epilogue)
    h = jnp.dot(f.astype(jnp.bfloat16), w2_ref[...], preferred_element_type=jnp.float32)
    h = jnp.maximum(h + t2_ref[...], 0.0)
    h = jnp.dot(h.astype(jnp.bfloat16), w3_ref[...], preferred_element_type=jnp.float32)
    h = jnp.maximum(h + t3_ref[...], 0.0)

    # Final Linear(Dh -> 1): VPU multiply + lane reduction (N=1 on the MXU would waste
    # all but one output column and force a lane-padded (Dh, 1) weight tile).
    logits = jnp.sum(h * w4_ref[...], axis=-1, keepdims=True) + b4_ref[0]

    # Numerically-stable sigmoid via EUP exp + EUP approximate reciprocal.
    z = jnp.exp(-jnp.abs(logits))
    inv = pl.reciprocal(1.0 + z, approx=True)
    pred_ref[...] = jnp.where(logits >= 0.0, inv, z * inv).astype(pred_ref.dtype)


# ----------------------------------------------------------------------------- wrapper


def _round_up(n, m):
    return ((n + m - 1) // m) * m


def _fold_bn(w, b, gamma, beta, mean, var, eps=1e-5):
    """Fold eval-mode BatchNorm1d after a Linear directly into the weight + a shift:
       BN(x @ W^T + b) == x @ (W^T * scale) + shift."""
    scale = gamma / jnp.sqrt(var + eps)                                 # (Dout,)
    w_folded = (w.T.astype(jnp.float32) * scale[None, :]).astype(jnp.bfloat16)   # (Din, Dout)
    shift = (beta + (b - mean) * scale)[None, :].astype(jnp.float32)    # (1, Dout)
    return w_folded, shift


def domain_classifier_forward(x, params, *, block_b=256):
    """Fused DomainClassifier forward. Returns (predictions (B,1), f (B,bottleneck_dim))."""
    B, Din = x.shape

    w1, t1 = _fold_bn(params["w1"], params["b1"], params["bn1_gamma"],
                      params["bn1_beta"], params["bn1_mean"], params["bn1_var"])
    w2, t2 = _fold_bn(params["w2"], params["b2"], params["bn2_gamma"],
                      params["bn2_beta"], params["bn2_mean"], params["bn2_var"])
    w3, t3 = _fold_bn(params["w3"], params["b3"], params["bn3_gamma"],
                      params["bn3_beta"], params["bn3_mean"], params["bn3_var"])
    w4 = params["w4"].reshape(1, -1).astype(jnp.float32)          # (1, Dh) row layout
    b4 = params["b4"].reshape(1).astype(jnp.float32)              # (1,) scalar -> SMEM

    Db = w1.shape[1]
    Dh = w2.shape[1]

    # Feed the MXU bf16: cast x at the boundary (no-op if already bf16).
    x_bf = x if x.dtype == jnp.bfloat16 else x.astype(jnp.bfloat16)

    # Batch tiling: pad ragged batches up to the row tile; never collapse a large batch
    # into a single grid step.  16-row alignment matches bf16 sublane packing.
    tb = min(block_b, _round_up(B, 16))
    B_pad = _round_up(B, tb)
    if B_pad != B:
        x_bf = jnp.pad(x_bf, ((0, B_pad - B), (0, 0)))
    grid = (B_pad // tb,)

    # Grid-invariant operands: constant index_map + single buffer (no revolving DMA).
    def resident(shape):
        return pl.BlockSpec(shape, lambda i: (0, 0), pipeline_mode=pl.Buffered(1))

    # Explicit VMEM budget: conservative (double-buffer everything) + headroom.
    weight_bytes = sum(int(a.size) * a.dtype.itemsize for a in (w1, t1, w2, t2, w3, t3, w4))
    io_bytes = tb * Din * 2 + tb * Db * 4 + tb * 128 * 4           # x + f + lane-padded pred
    vmem_limit = int(min(64 << 20, max(32 << 20, 2 * (weight_bytes + 2 * io_bytes) + (16 << 20))))

    pred, f = pl.pallas_call(
        _domain_classifier_kernel,
        grid=grid,
        in_specs=[
            pl.BlockSpec(memory_space=pltpu.SMEM),                 # b4 scalar
            pl.BlockSpec((tb, Din), lambda i: (i, 0)),             # x row-tile (bf16)
            resident((Din, Db)), resident((1, Db)),                # w1 (folded), shift1
            resident((Db, Dh)), resident((1, Dh)),                 # w2 (folded), shift2
            resident((Dh, Dh)), resident((1, Dh)),                 # w3 (folded), shift3
            resident((1, Dh)),                                     # w4 row
        ],
        out_specs=(
            pl.BlockSpec((tb, 1), lambda i: (i, 0)),               # predictions
            pl.BlockSpec((tb, Db), lambda i: (i, 0)),              # bottleneck features
        ),
        out_shape=(
            jax.ShapeDtypeStruct((B_pad, 1), jnp.float32),
            jax.ShapeDtypeStruct((B_pad, Db), jnp.float32),
        ),
        compiler_params=pltpu.CompilerParams(
            dimension_semantics=("parallel",),
            vmem_limit_bytes=vmem_limit,
        ),
    )(b4, x_bf, w1, t1, w2, t2, w3, t3, w4)

    if B_pad != B:
        pred = pred[:B]
        f = f[:B]
    return pred, f


# ----------------------------------------------------------------------------- reference & test


def _reference_forward(x, p, eps=1e-5):
    def block(y, w, b, gamma, beta, mean, var):
        y = y @ w.T + b
        y = (y - mean) / jnp.sqrt(var + eps) * gamma + beta
        return jnp.maximum(y, 0.0)

    f = block(x, p["w1"], p["b1"], p["bn1_gamma"], p["bn1_beta"], p["bn1_mean"], p["bn1_var"])
    h = block(f, p["w2"], p["b2"], p["bn2_gamma"], p["bn2_beta"], p["bn2_mean"], p["bn2_var"])
    h = block(h, p["w3"], p["b3"], p["bn3_gamma"], p["bn3_beta"], p["bn3_mean"], p["bn3_var"])
    logits = h @ p["w4"].T + p["b4"]
    return jax.nn.sigmoid(logits), f


def make_params(key, in_feature, bottleneck_dim=256, hidden_size=1024):
    keys = iter(jax.random.split(key, 24))
    nk = lambda: next(keys)

    def linear(dout, din, w_std):
        return (jax.random.normal(nk(), (dout, din), jnp.float32) * w_std,
                jax.random.normal(nk(), (dout,), jnp.float32) * 0.02)

    def bn(prefix, d, out):
        out[f"{prefix}_gamma"] = 1.0 + 0.1 * jax.random.normal(nk(), (d,), jnp.float32)
        out[f"{prefix}_beta"] = 0.05 * jax.random.normal(nk(), (d,), jnp.float32)
        out[f"{prefix}_mean"] = 0.05 * jax.random.normal(nk(), (d,), jnp.float32)
        out[f"{prefix}_var"] = jax.random.uniform(nk(), (d,), jnp.float32, minval=0.5, maxval=1.5)

    p = {}
    p["w1"], p["b1"] = linear(bottleneck_dim, in_feature, 0.05)
    bn("bn1", bottleneck_dim, p)
    p["w2"], p["b2"] = linear(hidden_size, bottleneck_dim, 0.03)
    bn("bn2", hidden_size, p)
    p["w3"], p["b3"] = linear(hidden_size, hidden_size, 0.03)
    bn("bn3", hidden_size, p)
    p["w4"], p["b4"] = linear(1, hidden_size, 0.05)
    return p


if __name__ == "__main__":
    key = jax.random.PRNGKey(0)
    k_p, k_x, k_x2, k_x3 = jax.random.split(key, 4)

    in_feature = 128          # free parameter of the module
    bottleneck_dim = 256      # module default
    hidden_size = 1024        # module default (DomainDiscriminator hidden_size)
    params = make_params(k_p, in_feature, bottleneck_dim, hidden_size)

    def check(x, **kw):
        pred, f = domain_classifier_forward(x, params, **kw)
        jax.block_until_ready((pred, f))
        pred_ref, f_ref = _reference_forward(x, params)
        np.testing.assert_allclose(np.asarray(pred), np.asarray(pred_ref), rtol=2e-2, atol=2e-2)
        np.testing.assert_allclose(np.asarray(f), np.asarray(f_ref), rtol=2e-2, atol=2e-2)

    # Small batch: single whole-batch tile (grid = 1).
    check(jax.random.normal(k_x, (16, in_feature), jnp.float32))

    # Ragged batch: exercises the pad-and-slice path.
    check(jax.random.normal(k_x3, (200, in_feature), jnp.float32))

    # Larger batch: exercises the row-tiled "parallel" grid path (2 grid steps at tb=256).
    check(jax.random.normal(k_x2, (512, in_feature), jnp.float32), block_b=256)

    print("KERNEL_OK")
</pallas_src>

<mosaic_0001>
module attributes {stable_mosaic.version = 11 : i64} {
  func.func @_domain_classifier_kernel(%arg0: i32, %arg1: memref<1xf32, #tpu.memory_space<smem>>, %arg2: memref<16x128xbf16, #tpu.memory_space<vmem>>, %arg3: memref<128x256xbf16, #tpu.memory_space<vmem>>, %arg4: memref<1x256xf32, #tpu.memory_space<vmem>>, %arg5: memref<256x1024xbf16, #tpu.memory_space<vmem>>, %arg6: memref<1x1024xf32, #tpu.memory_space<vmem>>, %arg7: memref<1024x1024xbf16, #tpu.memory_space<vmem>>, %arg8: memref<1x1024xf32, #tpu.memory_space<vmem>>, %arg9: memref<1x1024xf32, #tpu.memory_space<vmem>>, %arg10: memref<16x1xf32, #tpu.memory_space<vmem>>, %arg11: memref<16x256xf32, #tpu.memory_space<vmem>>) attributes {dimension_semantics = [#tpu.dimension_semantics<parallel>], iteration_bounds = array<i64: 1>, scalar_prefetch = 0 : i64, scratch_operands = 0 : i64, tpu.core_type = #tpu.core_type<tc>, window_params = [{transform_indices = @transform_0, window_bounds = array<i64: 1>}, {transform_indices = @transform_1, window_bounds = array<i64: 16, 128>}, {pipeline_mode = #tpu.pipeline_mode<synchronous>, transform_indices = @transform_2, window_bounds = array<i64: 128, 256>}, {pipeline_mode = #tpu.pipeline_mode<synchronous>, transform_indices = @transform_3, window_bounds = array<i64: 1, 256>}, {pipeline_mode = #tpu.pipeline_mode<synchronous>, transform_indices = @transform_4, window_bounds = array<i64: 256, 1024>}, {pipeline_mode = #tpu.pipeline_mode<synchronous>, transform_indices = @transform_5, window_bounds = array<i64: 1, 1024>}, {pipeline_mode = #tpu.pipeline_mode<synchronous>, transform_indices = @transform_6, window_bounds = array<i64: 1024, 1024>}, {pipeline_mode = #tpu.pipeline_mode<synchronous>, transform_indices = @transform_7, window_bounds = array<i64: 1, 1024>}, {pipeline_mode = #tpu.pipeline_mode<synchronous>, transform_indices = @transform_8, window_bounds = array<i64: 1, 1024>}, {transform_indices = @transform_9, window_bounds = array<i64: 16, 1>}, {transform_indices = @transform_10, window_bounds = array<i64: 16, 256>}]} {
    %c0 = arith.constant 0 : index
    %c0_0 = arith.constant 0 : index
    %0 = vector.load %arg2[%c0, %c0_0] : memref<16x128xbf16, #tpu.memory_space<vmem>>, vector<16x128xbf16>
    %c0_1 = arith.constant 0 : index
    %c0_2 = arith.constant 0 : index
    %1 = vector.load %arg3[%c0_1, %c0_2] : memref<128x256xbf16, #tpu.memory_space<vmem>>, vector<128x256xbf16>
    %cst = arith.constant dense<0.000000e+00> : vector<16x256xf32>
    %2 = tpu.matmul %0, %1, %cst {dimension_numbers = #tpu.dot_dimension_numbers<[1], [0], [0], [1], [0, 0, 1, 1], [], []>} : vector<16x128xbf16>, vector<128x256xbf16>, vector<16x256xf32> -> vector<16x256xf32>
    %c0_3 = arith.constant 0 : index
    %c0_4 = arith.constant 0 : index
    %3 = vector.load %arg4[%c0_3, %c0_4] : memref<1x256xf32, #tpu.memory_space<vmem>>, vector<1x256xf32>
    %4 = vector.broadcast %3 : vector<1x256xf32> to vector<16x256xf32>
    %5 = arith.addf %2, %4 : vector<16x256xf32>
    %cst_5 = arith.constant 0.000000e+00 : f32
    %6 = vector.broadcast %cst_5 : f32 to vector<16x256xf32>
    %7 = arith.maximumf %5, %6 : vector<16x256xf32>
    %c0_6 = arith.constant 0 : index
    %c0_7 = arith.constant 0 : index
    %8 = vector.load %arg11[%c0_6, %c0_7] : memref<16x256xf32, #tpu.memory_space<vmem>>, vector<16x256xf32>
    tpu.vector_store %arg11[%c0_6, %c0_7], %7 {strides = array<i32>} : memref<16x256xf32, #tpu.memory_space<vmem>>, vector<16x256xf32>,
    %9 = arith.truncf %7 : vector<16x256xf32> to vector<16x256xbf16>
    %c0_8 = arith.constant 0 : index
    %c0_9 = arith.constant 0 : index
    %10 = vector.load %arg5[%c0_8, %c0_9] : memref<256x1024xbf16, #tpu.memory_space<vmem>>, vector<256x1024xbf16>
    %cst_10 = arith.constant dense<0.000000e+00> : vector<16x1024xf32>
    %11 = tpu.matmul %9, %10, %cst_10 {dimension_numbers = #tpu.dot_dimension_numbers<[1], [0], [0], [1], [0, 0, 1, 1], [], []>} : vector<16x256xbf16>, vector<256x1024xbf16>, vector<16x1024xf32> -> vector<16x1024xf32>
    %c0_11 = arith.constant 0 : index
    %c0_12 = arith.constant 0 : index
    %12 = vector.load %arg6[%c0_11, %c0_12] : memref<1x1024xf32, #tpu.memory_space<vmem>>, vector<1x1024xf32>
    %13 = vector.broadcast %12 : vector<1x1024xf32> to vector<16x1024xf32>
    %14 = arith.addf %11, %13 : vector<16x1024xf32>
    %cst_13 = arith.constant 0.000000e+00 : f32
    %15 = vector.broadcast %cst_13 : f32 to vector<16x1024xf32>
    %16 = arith.maximumf %14, %15 : vector<16x1024xf32>
    %17 = arith.truncf %16 : vector<16x1024xf32> to vector<16x1024xbf16>
    %c0_14 = arith.constant 0 : index
    %c0_15 = arith.constant 0 : index
    %18 = vector.load %arg7[%c0_14, %c0_15] : memref<1024x1024xbf16, #tpu.memory_space<vmem>>, vector<1024x1024xbf16>
    %cst_16 = arith.constant dense<0.000000e+00> : vector<16x1024xf32>
    %19 = tpu.matmul %17, %18, %cst_16 {dimension_numbers = #tpu.dot_dimension_numbers<[1], [0], [0], [1], [0, 0, 1, 1], [], []>} : vector<16x1024xbf16>, vector<1024x1024xbf16>, vector<16x1024xf32> -> vector<16x1024xf32>
    %c0_17 = arith.constant 0 : index
    %c0_18 = arith.constant 0 : index
    %20 = vector.load %arg8[%c0_17, %c0_18] : memref<1x1024xf32, #tpu.memory_space<vmem>>, vector<1x1024xf32>
    %21 = vector.broadcast %20 : vector<1x1024xf32> to vector<16x1024xf32>
    %22 = arith.addf %19, %21 : vector<16x1024xf32>
    %cst_19 = arith.constant 0.000000e+00 : f32
    %23 = vector.broadcast %cst_19 : f32 to vector<16x1024xf32>
    %24 = arith.maximumf %22, %23 : vector<16x1024xf32>
    %c0_20 = arith.constant 0 : index
    %c0_21 = arith.constant 0 : index
    %25 = vector.load %arg9[%c0_20, %c0_21] : memref<1x1024xf32, #tpu.memory_space<vmem>>, vector<1x1024xf32>
    %26 = vector.broadcast %25 : vector<1x1024xf32> to vector<16x1024xf32>
    %27 = arith.mulf %24, %26 : vector<16x1024xf32>
    %cst_22 = arith.constant dense<0.000000e+00> : vector<16xf32>
    %28 = vector.multi_reduction <add>, %27, %cst_22 [1] : vector<16x1024xf32> to vector<16xf32>
    %29 = vector.shape_cast %28 : vector<16xf32> to vector<16x1xf32>
    %c0_23 = arith.constant 0 : index
    %30 = memref.load %arg1[%c0_23] : memref<1xf32, #tpu.memory_space<smem>>
    %31 = vector.broadcast %30 : f32 to vector<16x1xf32>
    %32 = arith.addf %29, %31 : vector<16x1xf32>
    %33 = math.absf %32 : vector<16x1xf32>
    %cst_24 = arith.constant 0.000000e+00 : f32
    %34 = vector.broadcast %cst_24 : f32 to vector<16x1xf32>
    %35 = arith.subf %34, %33 : vector<16x1xf32>
    %36 = math.exp %35 : vector<16x1xf32>
    %cst_25 = arith.constant 1.000000e+00 : f32
    %37 = vector.broadcast %cst_25 : f32 to vector<16x1xf32>
    %38 = arith.addf %37, %36 : vector<16x1xf32>
    %39 = tpu.reciprocal %38 {approx = true} : vector<16x1xf32> -> vector<16x1xf32>
    %cst_26 = arith.constant 0.000000e+00 : f32
    %40 = vector.broadcast %cst_26 : f32 to vector<16x1xf32>
    %41 = arith.cmpf oge, %32, %40 : vector<16x1xf32>
    %42 = arith.mulf %36, %39 : vector<16x1xf32>
    %43 = arith.select %41, %39, %42 : vector<16x1xi1>, vector<16x1xf32>
    %c0_27 = arith.constant 0 : index
    %c0_28 = arith.constant 0 : index
    %44 = vector.load %arg10[%c0_27, %c0_28] : memref<16x1xf32, #tpu.memory_space<vmem>>, vector<16x1xf32>
    tpu.vector_store %arg10[%c0_27, %c0_28], %43 {strides = array<i32>} : memref<16x1xf32, #tpu.memory_space<vmem>>, vector<16x1xf32>,
    return
  }
  func.func @transform_0(%arg0: i32) -> i32 {
    %c0_i32 = arith.constant 0 : i32
    %c0_i32_0 = arith.constant 0 : i32
    return %c0_i32 : i32
  }
  func.func @transform_1(%arg0: i32) -> (i32, i32) {
    %c0_i32 = arith.constant 0 : i32
    %c0_i32_0 = arith.constant 0 : i32
    return %arg0, %c0_i32 : i32, i32
  }
  func.func @transform_2(%arg0: i32) -> (i32, i32) {
    %c0_i32 = arith.constant 0 : i32
    %c0_i32_0 = arith.constant 0 : i32
    %c0_i32_1 = arith.constant 0 : i32
    return %c0_i32, %c0_i32_0 : i32, i32
  }
  func.func @transform_3(%arg0: i32) -> (i32, i32) {
    %c0_i32 = arith.constant 0 : i32
    %c0_i32_0 = arith.constant 0 : i32
    %c0_i32_1 = arith.constant 0 : i32
    return %c0_i32, %c0_i32_0 : i32, i32
  }
  func.func @transform_4(%arg0: i32) -> (i32, i32) {
    %c0_i32 = arith.constant 0 : i32
    %c0_i32_0 = arith.constant 0 : i32
    %c0_i32_1 = arith.constant 0 : i32
    return %c0_i32, %c0_i32_0 : i32, i32
  }
  func.func @transform_5(%arg0: i32) -> (i32, i32) {
    %c0_i32 = arith.constant 0 : i32
    %c0_i32_0 = arith.constant 0 : i32
    %c0_i32_1 = arith.constant 0 : i32
    return %c0_i32, %c0_i32_0 : i32, i32
  }
  func.func @transform_6(%arg0: i32) -> (i32, i32) {
    %c0_i32 = arith.constant 0 : i32
    %c0_i32_0 = arith.constant 0 : i32
    %c0_i32_1 = arith.constant 0 : i32
    return %c0_i32, %c0_i32_0 : i32, i32
  }
  func.func @transform_7(%arg0: i32) -> (i32, i32) {
    %c0_i32 = arith.constant 0 : i32
    %c0_i32_0 = arith.constant 0 : i32
    %c0_i32_1 = arith.constant 0 : i32
    return %c0_i32, %c0_i32_0 : i32, i32
  }
  func.func @transform_8(%arg0: i32) -> (i32, i32) {
    %c0_i32 = arith.constant 0 : i32
    %c0_i32_0 = arith.constant 0 : i32
    %c0_i32_1 = arith.constant 0 : i32
    return %c0_i32, %c0_i32_0 : i32, i32
  }
  func.func @transform_9(%arg0: i32) -> (i32, i32) {
    %c0_i32 = arith.constant 0 : i32
    %c0_i32_0 = arith.constant 0 : i32
    return %arg0, %c0_i32 : i32, i32
  }
  func.func @transform_10(%arg0: i32) -> (i32, i32) {
    %c0_i32 = arith.constant 0 : i32
    %c0_i32_0 = arith.constant 0 : i32
    return %arg0, %c0_i32 : i32, i32
  }
}

</mosaic_0001>

<llo_original>
// kernel: tpu_custom_call.1
$region0: #{tpu_custom_call.1}
  #allocation0 [shape = 'u32[]', space=smem, size = 0x4, offset = 0x4, fixed_abs, tag = 'smem constant byte address 0x4 - core index']
  #allocation1 [shape = 'u32[72,128]{1,0:T(1,128)}', space=vmem, size = 0x9000, scoped, tag = 'internal scratch']
  #allocation2 [shape = 'f32[1]{0:T(128)S(6)}', space=smem, size = 0x200, scoped, tag = 'scoped memory for tpu_custom_call.1']
  %s0 = inlined_call_operand.<no memory space> [shape: f32[1], index: 0, kind: input, shape index: {}]
  %s1 = inlined_call_operand.hbm [shape: bf16[16,128], index: 1, kind: input, shape index: {}]
  %s2 = inlined_call_operand.hbm [shape: bf16[128,256], index: 2, kind: input, shape index: {}]
  %s3 = inlined_call_operand.hbm [shape: f32[1,256], index: 3, kind: input, shape index: {}]
  %s4 = inlined_call_operand.hbm [shape: bf16[256,1024], index: 4, kind: input, shape index: {}]
  %s5 = inlined_call_operand.hbm [shape: f32[1,1024], index: 5, kind: input, shape index: {}]
  %s6 = inlined_call_operand.hbm [shape: bf16[1024,1024], index: 6, kind: input, shape index: {}]
  %s7 = inlined_call_operand.hbm [shape: f32[1,1024], index: 7, kind: input, shape index: {}]
  %s8 = inlined_call_operand.hbm [shape: f32[1,1024], index: 8, kind: input, shape index: {}]
  %s9 = inlined_call_operand.vmem [shape: f32[16,1], index: 9, kind: output, shape index: {0}]
  %s10 = inlined_call_operand.hbm [shape: f32[16,256], index: 10, kind: output, shape index: {1}]
  %11 = xla_tuple %s9, %s10
  %s12 = sld [smem:[#allocation0]]
  $region86: #{tpu_custom_call.1} parent=0
    _
  %s14 = ssub.s32 1, %s12
  %s15 = scalar_select 0, %s14, %s12
  %16 = sst [smem:[#allocation2]] %s0
  $region1: #{tpu_custom_call.1} parent=0
    #allocation3 [shape = 'u8[4096]{0}', space=vmem, size = 0x1000, scoped, tag = 'input window, operand 1, single buffered']
    #allocation4 [shape = 's32[1]{0}', space=sflag, size = 0x4, scoped, tag = 'scoped memory for tpu_custom_call.1']
    #allocation5 [shape = 's32[1]{0}', space=sflag, size = 0x4, scoped, tag = 'scoped memory for tpu_custom_call.1']
    #allocation6 [shape = 'u8[65536]{0}', space=vmem, size = 0x10000, scoped, tag = 'input window, operand 2, single buffered']
    #allocation7 [shape = 's32[1]{0}', space=sflag, size = 0x4, scoped, tag = 'scoped memory for tpu_custom_call.1']
    #allocation8 [shape = 'u8[1024]{0}', space=vmem, size = 0x400, scoped, tag = 'input window, operand 3, single buffered']
    #allocation9 [shape = 'u8[524288]{0}', space=vmem, size = 0x80000, scoped, tag = 'input window, operand 4, single buffered']
    #allocation10 [shape = 's32[1]{0}', space=sflag, size = 0x4, scoped, tag = 'scoped memory for tpu_custom_call.1']
    #allocation11 [shape = 'u8[4096]{0}', space=vmem, size = 0x1000, scoped, tag = 'input window, operand 5, single buffered']
    #allocation12 [shape = 'u8[2097152]{0}', space=vmem, size = 0x200000, scoped, tag = 'input window, operand 6, single buffered']
    #allocation13 [shape = 's32[1]{0}', space=sflag, size = 0x4, scoped, tag = 'scoped memory for tpu_custom_call.1']
    #allocation14 [shape = 'u8[4096]{0}', space=vmem, size = 0x1000, scoped, tag = 'input window, operand 7, single buffered']
    #allocation15 [shape = 'u8[4096]{0}', space=vmem, size = 0x1000, scoped, tag = 'input window, operand 8, single buffered']
    #allocation16 [shape = 's32[1]{0}', space=sflag, size = 0x4, scoped, tag = 'scoped memory for tpu_custom_call.1']
    #allocation17 [shape = 'u8[16384]{0}', space=vmem, size = 0x4000, scoped, tag = 'output window, operand 1, single buffered']
    %17 = vsyncpa [#allocation4], 0
    %18 = vsyncpa [#allocation7], 0
    %19 = vsyncpa [#allocation10], 0
    %20 = vsyncpa [#allocation13], 0
    %21 = vsyncpa [#allocation16], 0
    %22 = vsyncpa [#allocation5], 0
    // Predicated region
    $region2: #{tpu_custom_call.1} parent=1 // pred_check
      _
    $region3: #{tpu_custom_call.1} parent=1 // pred_check_branch
      %24 = sbr.rel (0) target = $region5
    $region4: #{tpu_custom_call.1} parent=1 // pred_region
      _
    $region5: #{tpu_custom_call.1} parent=1 // pred_fallthru
      _
    // Predicated region
    $region6: #{tpu_custom_call.1} parent=1 // pred_check
      _
    $region7: #{tpu_custom_call.1} parent=1 // pred_check_branch
      %26 = sbr.rel (0) target = $region9
    $region8: #{tpu_custom_call.1} parent=1 // pred_region
      %28 = vsyncadd [#allocation4], 0
      %s29 = sshll.u32 %s1, 4
      %s30 = int_to_ptr.hbm [resolvable:$true] %s29
      %s31 = sshll.u32 [#allocation3], 4
      %s32 = int_to_ptr.vmem [resolvable:$true] %s31
      %37 = dma.hbm_to_vmem [thread:$0]  %s30, 128, %s32, [#allocation4], 64, 64, 4
    $region9: #{tpu_custom_call.1} parent=1 // pred_fallthru
      _
    // Predicated region
    $region10: #{tpu_custom_call.1} parent=1 // pred_check
      _
    $region11: #{tpu_custom_call.1} parent=1 // pred_check_branch
      %39 = sbr.rel (0) target = $region13
    $region12: #{tpu_custom_call.1} parent=1 // pred_region
      %41 = vsyncadd [#allocation7], 0
      %s42 = sshll.u32 %s2, 4
      %s43 = int_to_ptr.hbm [resolvable:$true] %s42
      %s44 = sshll.u32 [#allocation6], 4
      %s45 = int_to_ptr.vmem [resolvable:$true] %s44
      %50 = dma.hbm_to_vmem [thread:$0]  %s43, 2048, %s45, [#allocation7], 128, 128, 8
    $region13: #{tpu_custom_call.1} parent=1 // pred_fallthru
      _
    // Predicated region
    $region14: #{tpu_custom_call.1} parent=1 // pred_check
      _
    $region15: #{tpu_custom_call.1} parent=1 // pred_check_branch
      %52 = sbr.rel (0) target = $region17
    $region16: #{tpu_custom_call.1} parent=1 // pred_region
      %54 = vsyncadd [#allocation7], 0
      %s56 = sshll.u32 %s3, 4
      %s57 = int_to_ptr.hbm [resolvable:$true] %s56
      %s58 = sshll.u32 [#allocation8], 4
      %s59 = int_to_ptr.vmem [resolvable:$true] %s58
      %61 = dma.hbm_to_vmem [thread:$0]  %s57, 32, %s59, [#allocation7]
    $region17: #{tpu_custom_call.1} parent=1 // pred_fallthru
      _
    // Predicated region
    $region18: #{tpu_custom_call.1} parent=1 // pred_check
      _
    $region19: #{tpu_custom_call.1} parent=1 // pred_check_branch
      %63 = sbr.rel (0) target = $region21
    $region20: #{tpu_custom_call.1} parent=1 // pred_region
      %65 = vsyncadd [#allocation10], 0
      %s66 = sshll.u32 %s4, 4
      %s67 = int_to_ptr.hbm [resolvable:$true] %s66
      %s68 = sshll.u32 [#allocation9], 4
      %s69 = int_to_ptr.vmem [resolvable:$true] %s68
      %74 = dma.hbm_to_vmem [thread:$0]  %s67, 16384, %s69, [#allocation10], 512, 512, 32
    $region21: #{tpu_custom_call.1} parent=1 // pred_fallthru
      _
    // Predicated region
    $region22: #{tpu_custom_call.1} parent=1 // pred_check
      _
    $region23: #{tpu_custom_call.1} parent=1 // pred_check_branch
      %76 = sbr.rel (0) target = $region25
    $region24: #{tpu_custom_call.1} parent=1 // pred_region
      %78 = vsyncadd [#allocation10], 0
      %s80 = sshll.u32 %s5, 4
      %s81 = int_to_ptr.hbm [resolvable:$true] %s80
      %s82 = sshll.u32 [#allocation11], 4
      %s83 = int_to_ptr.vmem [resolvable:$true] %s82
      %85 = dma.hbm_to_vmem [thread:$0]  %s81, 128, %s83, [#allocation10]
    $region25: #{tpu_custom_call.1} parent=1 // pred_fallthru
      _
    // Predicated region
    $region26: #{tpu_custom_call.1} parent=1 // pred_check
      _
    $region27: #{tpu_custom_call.1} parent=1 // pred_check_branch
      %87 = sbr.rel (0) target = $region29
    $region28: #{tpu_custom_call.1} parent=1 // pred_region
      %89 = vsyncadd [#allocation13], 0
      %s90 = sshll.u32 %s6, 4
      %s91 = int_to_ptr.hbm [resolvable:$true] %s90
      %s92 = sshll.u32 [#allocation12], 4
      %s93 = int_to_ptr.vmem [resolvable:$true] %s92
      %98 = dma.hbm_to_vmem [thread:$0]  %s91, 65536, %s93, [#allocation13], 512, 512, 32
    $region29: #{tpu_custom_call.1} parent=1 // pred_fallthru
      _
    // Predicated region
    $region30: #{tpu_custom_call.1} parent=1 // pred_check
      _
    $region31: #{tpu_custom_call.1} parent=1 // pred_check_branch
      %100 = sbr.rel (0) target = $region33
    $region32: #{tpu_custom_call.1} parent=1 // pred_region
      %102 = vsyncadd [#allocation13], 0
      %s104 = sshll.u32 %s7, 4
      %s105 = int_to_ptr.hbm [resolvable:$true] %s104
      %s106 = sshll.u32 [#allocation14], 4
      %s107 = int_to_ptr.vmem [resolvable:$true] %s106
      %109 = dma.hbm_to_vmem [thread:$0]  %s105, 128, %s107, [#allocation13]
    $region33: #{tpu_custom_call.1} parent=1 // pred_fallthru
      _
    // Predicated region
    $region34: #{tpu_custom_call.1} parent=1 // pred_check
      _
    $region35: #{tpu_custom_call.1} parent=1 // pred_check_branch
      %111 = sbr.rel (0) target = $region37
    $region36: #{tpu_custom_call.1} parent=1 // pred_region
      %113 = vsyncadd [#allocation16], 0
      %s115 = sshll.u32 %s8, 4
      %s116 = int_to_ptr.hbm [resolvable:$true] %s115
      %s117 = sshll.u32 [#allocation15], 4
      %s118 = int_to_ptr.vmem [resolvable:$true] %s117
      %120 = dma.hbm_to_vmem [thread:$0]  %s116, 128, %s118, [#allocation16]
    $region37: #{tpu_custom_call.1} parent=1 // pred_fallthru
      _
    // Predicated region
    $region38: #{tpu_custom_call.1} parent=1 // pred_check
      _
    $region39: #{tpu_custom_call.1} parent=1 // pred_check_branch
      %122 = sbr.rel (0) target = $region41
    $region40: #{tpu_custom_call.1} parent=1 // pred_region
      %124 = dma.done [#allocation4], 128
    $region41: #{tpu_custom_call.1} parent=1 // pred_fallthru
      _
    // Predicated region
    $region42: #{tpu_custom_call.1} parent=1 // pred_check
      _
    $region43: #{tpu_custom_call.1} parent=1 // pred_check_branch
      %126 = sbr.rel (0) target = $region45
    $region44: #{tpu_custom_call.1} parent=1 // pred_region
      %128 = dma.done [#allocation7], 2048
    $region45: #{tpu_custom_call.1} parent=1 // pred_fallthru
      _
    // Predicated region
    $region46: #{tpu_custom_call.1} parent=1 // pred_check
      _
    $region47: #{tpu_custom_call.1} parent=1 // pred_check_branch
      %130 = sbr.rel (0) target = $region49
    $region48: #{tpu_custom_call.1} parent=1 // pred_region
      %132 = dma.done [#allocation7], 32
    $region49: #{tpu_custom_call.1} parent=1 // pred_fallthru
      _
    // Predicated region
    $region50: #{tpu_custom_call.1} parent=1 // pred_check
      _
    $region51: #{tpu_custom_call.1} parent=1 // pred_check_branch
      %134 = sbr.rel (0) target = $region53
    $region52: #{tpu_custom_call.1} parent=1 // pred_region
      %136 = dma.done [#allocation10], 16384
    $region53: #{tpu_custom_call.1} parent=1 // pred_fallthru
      _
    // Predicated region
    $region54: #{tpu_custom_call.1} parent=1 // pred_check
      _
    $region55: #{tpu_custom_call.1} parent=1 // pred_check_branch
      %138 = sbr.rel (0) target = $region57
    $region56: #{tpu_custom_call.1} parent=1 // pred_region
      %140 = dma.done [#allocation10], 128
    $region57: #{tpu_custom_call.1} parent=1 // pred_fallthru
      _
    // Predicated region
    $region58: #{tpu_custom_call.1} parent=1 // pred_check
      _
    $region59: #{tpu_custom_call.1} parent=1 // pred_check_branch
      %142 = sbr.rel (0) target = $region61
    $region60: #{tpu_custom_call.1} parent=1 // pred_region
      %144 = dma.done [#allocation13], 65536
    $region61: #{tpu_custom_call.1} parent=1 // pred_fallthru
      _
    // Predicated region
    $region62: #{tpu_custom_call.1} parent=1 // pred_check
      _
    $region63: #{tpu_custom_call.1} parent=1 // pred_check_branch
      %146 = sbr.rel (0) target = $region65
    $region64: #{tpu_custom_call.1} parent=1 // pred_region
      %148 = dma.done [#allocation13], 128
    $region65: #{tpu_custom_call.1} parent=1 // pred_fallthru
      _
    // Predicated region
    $region66: #{tpu_custom_call.1} parent=1 // pred_check
      _
    $region67: #{tpu_custom_call.1} parent=1 // pred_check_branch
      %150 = sbr.rel (0) target = $region69
    $region68: #{tpu_custom_call.1} parent=1 // pred_region
      %152 = dma.done [#allocation16], 128
    $region69: #{tpu_custom_call.1} parent=1 // pred_fallthru
      _
    %v153 = vld [vmem:[#allocation3] sm:$0xf]
    %v154 = vld [vmem:[#allocation3 + $0x4] sm:$0xf]
    %v155 = vld [vmem:[#allocation6] sm:$0xff]
    %v156 = vld [vmem:[#allocation6 + $0x8] sm:$0xff]
    %v157 = vld [vmem:[#allocation6 + $0x10] sm:$0xff]
    %v158 = vld [vmem:[#allocation6 + $0x18] sm:$0xff]
    %v159 = vld [vmem:[#allocation6 + $0x20] sm:$0xff]
    %v160 = vld [vmem:[#allocation6 + $0x28] sm:$0xff]
    %v161 = vld [vmem:[#allocation6 + $0x30] sm:$0xff]
    %v162 = vld [vmem:[#allocation6 + $0x38] sm:$0xff]
    %v163 = vld [vmem:[#allocation6 + $0x40] sm:$0xff]
    %v164 = vld [vmem:[#allocation6 + $0x48] sm:$0xff]
    %v165 = vld [vmem:[#allocation6 + $0x50] sm:$0xff]
    %v166 = vld [vmem:[#allocation6 + $0x58] sm:$0xff]
    %v167 = vld [vmem:[#allocation6 + $0x60] sm:$0xff]
    %v168 = vld [vmem:[#allocation6 + $0x68] sm:$0xff]
    %v169 = vld [vmem:[#allocation6 + $0x70] sm:$0xff]
    %v170 = vld [vmem:[#allocation6 + $0x78] sm:$0xff]
    %v171 = vld [vmem:[#allocation8] sm:$0x3]
    %v173 = vperm.slane %v171, 0
    %v174 = vperm.slane %v171, 1
    %v179 = vunpack.c.l.b16 %v153
    %v180 = vunpack.c.l.b16 %v154
    %v181 = vpack.c.b16 %v180, %v179
    %v199 = vunpack.c.l.b16 %v155
    %v200 = vunpack.c.h.b16 %v155
    %v201 = vunpack.c.l.b16 %v156
    %v202 = vunpack.c.h.b16 %v156
    %v203 = vunpack.c.l.b16 %v157
    %v204 = vunpack.c.h.b16 %v157
    %v205 = vunpack.c.l.b16 %v158
    %v206 = vunpack.c.h.b16 %v158
    %v207 = vunpack.c.l.b16 %v159
    %v208 = vunpack.c.h.b16 %v159
    %v209 = vunpack.c.l.b16 %v160
    %v210 = vunpack.c.h.b16 %v160
    %v211 = vunpack.c.l.b16 %v161
    %v212 = vunpack.c.h.b16 %v161
    %v213 = vunpack.c.l.b16 %v162
    %v214 = vunpack.c.h.b16 %v162
    %v215 = vunpack.c.l.b16 %v163
    %v216 = vunpack.c.h.b16 %v163
    %v217 = vunpack.c.l.b16 %v164
    %v218 = vunpack.c.h.b16 %v164
    %v219 = vunpack.c.l.b16 %v165
    %v220 = vunpack.c.h.b16 %v165
    %v221 = vunpack.c.l.b16 %v166
    %v222 = vunpack.c.h.b16 %v166
    %v223 = vunpack.c.l.b16 %v167
    %v224 = vunpack.c.h.b16 %v167
    %v225 = vunpack.c.l.b16 %v168
    %v226 = vunpack.c.h.b16 %v168
    %v227 = vunpack.c.l.b16 %v169
    %v228 = vunpack.c.h.b16 %v169
    %v229 = vunpack.c.l.b16 %v170
    %v230 = vunpack.c.h.b16 %v170
    %v231 = vpack.c.b16 %v201, %v199
    %v232 = vpack.c.b16 %v202, %v200
    %v233 = vpack.c.b16 %v205, %v203
    %v234 = vpack.c.b16 %v206, %v204
    %v235 = vpack.c.b16 %v209, %v207
    %v236 = vpack.c.b16 %v210, %v208
    %v237 = vpack.c.b16 %v213, %v211
    %v238 = vpack.c.b16 %v214, %v212
    %v239 = vpack.c.b16 %v217, %v215
    %v240 = vpack.c.b16 %v218, %v216
    %v241 = vpack.c.b16 %v221, %v219
    %v242 = vpack.c.b16 %v222, %v220
    %v243 = vpack.c.b16 %v225, %v223
    %v244 = vpack.c.b16 %v226, %v224
    %v245 = vpack.c.b16 %v229, %v227
    %v246 = vpack.c.b16 %v230, %v228
    %263 = vmatpush.bf16.msra.mxu0 %v245
    %264 = vmatpush.bf16.msra.mxu0 %v243
    %265 = vmatpush.bf16.msra.mxu0 %v241
    %266 = vmatpush.bf16.msra.mxu0 %v239
    %267 = vmatpush.bf16.msra.mxu0 %v237
    %268 = vmatpush.bf16.msra.mxu0 %v235
    %269 = vmatpush.bf16.msra.mxu0 %v233
    %270 = vmatpush.bf16.msra.mxu0 %v231
    %271 = vmatmul.bf16.gmra.mxu0 %v181
    %v272 = vpop.f32.mrf.mxu0
    %v273 = vadd.f32 %v173, %v272
    %v274 = vpop.f32.mrf.mxu0
    %v275 = vadd.f32 %v173, %v274
    %276 = vdwg.mxu0
    %277 = vmatpush.bf16.msra.mxu0 %v246
    %278 = vmatpush.bf16.msra.mxu0 %v244
    %279 = vmatpush.bf16.msra.mxu0 %v242
    %280 = vmatpush.bf16.msra.mxu0 %v240
    %281 = vmatpush.bf16.msra.mxu0 %v238
    %282 = vmatpush.bf16.msra.mxu0 %v236
    %283 = vmatpush.bf16.msra.mxu0 %v234
    %284 = vmatpush.bf16.msra.mxu0 %v232
    %285 = vmatmul.bf16.gmra.mxu0 %v181
    %v286 = vpop.f32.mrf.mxu0
    %v287 = vadd.f32 %v174, %v286
    %v288 = vpop.f32.mrf.mxu0
    %v289 = vadd.f32 %v174, %v288
    %290 = vdwg.mxu0
    %v291 = vmax.f32 %v273, 0.0
    %v292 = vmax.f32 %v287, 0.0
    %v293 = vmax.f32 %v275, 0.0
    %v294 = vmax.f32 %v289, 0.0
    %295 = vst [vmem:[#allocation17] sm:$0xff] %v291
    %296 = vst [vmem:[#allocation17 + $0x8] sm:$0xff] %v292
    %297 = vst [vmem:[#allocation17 + $0x10] sm:$0xff] %v293
    %298 = vst [vmem:[#allocation17 + $0x18] sm:$0xff] %v294
    %v299 = vpack.c.bf16 %v293, %v291
    %v300 = vpack.c.bf16 %v294, %v292
    %v301 = vld [vmem:[#allocation9] sm:$0xff]
    %v302 = vld [vmem:[#allocation9 + $0x8] sm:$0xff]
    %v303 = vld [vmem:[#allocation9 + $0x10] sm:$0xff]
    %v304 = vld [vmem:[#allocation9 + $0x18] sm:$0xff]
    %v305 = vld [vmem:[#allocation9 + $0x20] sm:$0xff]
    %v306 = vld [vmem:[#allocation9 + $0x28] sm:$0xff]
    %v307 = vld [vmem:[#allocation9 + $0x30] sm:$0xff]
    %v308 = vld [vmem:[#allocation9 + $0x38] sm:$0xff]
    %v309 = vld [vmem:[#allocation9 + $0x40] sm:$0xff]
    %v310 = vld [vmem:[#allocation9 + $0x48] sm:$0xff]
    %v311 = vld [vmem:[#allocation9 + $0x50] sm:$0xff]
    %v312 = vld [vmem:[#allocation9 + $0x58] sm:$0xff]
    %v313 = vld [vmem:[#allocation9 + $0x60] sm:$0xff]
    %v314 = vld [vmem:[#allocation9 + $0x68] sm:$0xff]
    %v315 = vld [vmem:[#allocation9 + $0x70] sm:$0xff]
    %v316 = vld [vmem:[#allocation9 + $0x78] sm:$0xff]
    %v317 = vld [vmem:[#allocation9 + $0x80] sm:$0xff]
    %v318 = vld [vmem:[#allocation9 + $0x88] sm:$0xff]
    %v319 = vld [vmem:[#allocation9 + $0x90] sm:$0xff]
    %v320 = vld [vmem:[#allocation9 + $0x98] sm:$0xff]
    %v321 = vld [vmem:[#allocation9 + $0xa0] sm:$0xff]
    %v322 = vld [vmem:[#allocation9 + $0xa8] sm:$0xff]
    %v323 = vld [vmem:[#allocation9 + $0xb0] sm:$0xff]
    %v324 = vld [vmem:[#allocation9 + $0xb8] sm:$0xff]
    %v325 = vld [vmem:[#allocation9 + $0xc0] sm:$0xff]
    %v326 = vld [vmem:[#allocation9 + $0xc8] sm:$0xff]
    %v327 = vld [vmem:[#allocation9 + $0xd0] sm:$0xff]
    %v328 = vld [vmem:[#allocation9 + $0xd8] sm:$0xff]
    %v329 = vld [vmem:[#allocation9 + $0xe0] sm:$0xff]
    %v330 = vld [vmem:[#allocation9 + $0xe8] sm:$0xff]
    %v331 = vld [vmem:[#allocation9 + $0xf0] sm:$0xff]
    %v332 = vld [vmem:[#allocation9 + $0xf8] sm:$0xff]
    %v333 = vld [vmem:[#allocation9 + $0x100] sm:$0xff]
    %v334 = vld [vmem:[#allocation9 + $0x108] sm:$0xff]
    %v335 = vld [vmem:[#allocation9 + $0x110] sm:$0xff]
    %v336 = vld [vmem:[#allocation9 + $0x118] sm:$0xff]
    %v337 = vld [vmem:[#allocation9 + $0x120] sm:$0xff]
    %v338 = vld [vmem:[#allocation9 + $0x128] sm:$0xff]
    %v339 = vld [vmem:[#allocation9 + $0x130] sm:$0xff]
    %v340 = vld [vmem:[#allocation9 + $0x138] sm:$0xff]
    %v341 = vld [vmem:[#allocation9 + $0x140] sm:$0xff]
    %v342 = vld [vmem:[#allocation9 + $0x148] sm:$0xff]
    %v343 = vld [vmem:[#allocation9 + $0x150] sm:$0xff]
    %v344 = vld [vmem:[#allocation9 + $0x158] sm:$0xff]
    %v345 = vld [vmem:[#allocation9 + $0x160] sm:$0xff]
    %v346 = vld [vmem:[#allocation9 + $0x168] sm:$0xff]
    %v347 = vld [vmem:[#allocation9 + $0x170] sm:$0xff]
    %v348 = vld [vmem:[#allocation9 + $0x178] sm:$0xff]
    %v349 = vld [vmem:[#allocation9 + $0x180] sm:$0xff]
    %v350 = vld [vmem:[#allocation9 + $0x188] sm:$0xff]
    %v351 = vld [vmem:[#allocation9 + $0x190] sm:$0xff]
    %v352 = vld [vmem:[#allocation9 + $0x198] sm:$0xff]
    %v353 = vld [vmem:[#allocation9 + $0x1a0] sm:$0xff]
    %v354 = vld [vmem:[#allocation9 + $0x1a8] sm:$0xff]
    %v355 = vld [vmem:[#allocation9 + $0x1b0] sm:$0xff]
    %v356 = vld [vmem:[#allocation9 + $0x1b8] sm:$0xff]
    %v357 = vld [vmem:[#allocation9 + $0x1c0] sm:$0xff]
    %v358 = vld [vmem:[#allocation9 + $0x1c8] sm:$0xff]
    %v359 = vld [vmem:[#allocation9 + $0x1d0] sm:$0xff]
    %v360 = vld [vmem:[#allocation9 + $0x1d8] sm:$0xff]
    %v361 = vld [vmem:[#allocation9 + $0x1e0] sm:$0xff]
    %v362 = vld [vmem:[#allocation9 + $0x1e8] sm:$0xff]
    %v363 = vld [vmem:[#allocation9 + $0x1f0] sm:$0xff]
    %v364 = vld [vmem:[#allocation9 + $0x1f8] sm:$0xff]
    %v365 = vld [vmem:[#allocation9 + $0x200] sm:$0xff]
    %v366 = vld [vmem:[#allocation9 + $0x208] sm:$0xff]
    %v367 = vld [vmem:[#allocation9 + $0x210] sm:$0xff]
    %v368 = vld [vmem:[#allocation9 + $0x218] sm:$0xff]
    %v369 = vld [vmem:[#allocation9 + $0x220] sm:$0xff]
    %v370 = vld [vmem:[#allocation9 + $0x228] sm:$0xff]
    %v371 = vld [vmem:[#allocation9 + $0x230] sm:$0xff]
    %v372 = vld [vmem:[#allocation9 + $0x238] sm:$0xff]
    %v373 = vld [vmem:[#allocation9 + $0x240] sm:$0xff]
    %v374 = vld [vmem:[#allocation9 + $0x248] sm:$0xff]
    %v375 = vld [vmem:[#allocation9 + $0x250] sm:$0xff]
    %v376 = vld [vmem:[#allocation9 + $0x258] sm:$0xff]
    %v377 = vld [vmem:[#allocation9 + $0x260] sm:$0xff]
    %v378 = vld [vmem:[#allocation9 + $0x268] sm:$0xff]
    %v379 = vld [vmem:[#allocation9 + $0x270] sm:$0xff]
    %v380 = vld [vmem:[#allocation9 + $0x278] sm:$0xff]
    %v381 = vld [vmem:[#allocation9 + $0x280] sm:$0xff]
    %v382 = vld [vmem:[#allocation9 + $0x288] sm:$0xff]
    %v383 = vld [vmem:[#allocation9 + $0x290] sm:$0xff]
    %v384 = vld [vmem:[#allocation9 + $0x298] sm:$0xff]
    %v385 = vld [vmem:[#allocation9 + $0x2a0] sm:$0xff]
    %v386 = vld [vmem:[#allocation9 + $0x2a8] sm:$0xff]
    %v387 = vld [vmem:[#allocation9 + $0x2b0] sm:$0xff]
    %v388 = vld [vmem:[#allocation9 + $0x2b8] sm:$0xff]
    %v389 = vld [vmem:[#allocation9 + $0x2c0] sm:$0xff]
    %v390 = vld [vmem:[#allocation9 + $0x2c8] sm:$0xff]
    %v391 = vld [vmem:[#allocation9 + $0x2d0] sm:$0xff]
    %v392 = vld [vmem:[#allocation9 + $0x2d8] sm:$0xff]
    %v393 = vld [vmem:[#allocation9 + $0x2e0] sm:$0xff]
    %v394 = vld [vmem:[#allocation9 + $0x2e8] sm:$0xff]
    %v395 = vld [vmem:[#allocation9 + $0x2f0] sm:$0xff]
    %v396 = vld [vmem:[#allocation9 + $0x2f8] sm:$0xff]
    %v397 = vld [vmem:[#allocation9 + $0x300] sm:$0xff]
    %v398 = vld [vmem:[#allocation9 + $0x308] sm:$0xff]
    %v399 = vld [vmem:[#allocation9 + $0x310] sm:$0xff]
    %v400 = vld [vmem:[#allocation9 + $0x318] sm:$0xff]
    %v401 = vld [vmem:[#allocation9 + $0x320] sm:$0xff]
    %v402 = vld [vmem:[#allocation9 + $0x328] sm:$0xff]
    %v403 = vld [vmem:[#allocation9 + $0x330] sm:$0xff]
    %v404 = vld [vmem:[#allocation9 + $0x338] sm:$0xff]
    %v405 = vld [vmem:[#allocation9 + $0x340] sm:$0xff]
    %v406 = vld [vmem:[#allocation9 + $0x348] sm:$0xff]
    %v407 = vld [vmem:[#allocation9 + $0x350] sm:$0xff]
    %v408 = vld [vmem:[#allocation9 + $0x358] sm:$0xff]
    %v409 = vld [vmem:[#allocation9 + $0x360] sm:$0xff]
    %v410 = vld [vmem:[#allocation9 + $0x368] sm:$0xff]
    %v411 = vld [vmem:[#allocation9 + $0x370] sm:$0xff]
    %v412 = vld [vmem:[#allocation9 + $0x378] sm:$0xff]
    %v413 = vld [vmem:[#allocation9 + $0x380] sm:$0xff]
    %v414 = vld [vmem:[#allocation9 + $0x388] sm:$0xff]
    %v415 = vld [vmem:[#allocation9 + $0x390] sm:$0xff]
    %v416 = vld [vmem:[#allocation9 + $0x398] sm:$0xff]
    %v417 = vld [vmem:[#allocation9 + $0x3a0] sm:$0xff]
    %v418 = vld [vmem:[#allocation9 + $0x3a8] sm:$0xff]
    %v419 = vld [vmem:[#allocation9 + $0x3b0] sm:$0xff]
    %v420 = vld [vmem:[#allocation9 + $0x3b8] sm:$0xff]
    %v421 = vld [vmem:[#allocation9 + $0x3c0] sm:$0xff]
    %v422 = vld [vmem:[#allocation9 + $0x3c8] sm:$0xff]
    %v423 = vld [vmem:[#allocation9 + $0x3d0] sm:$0xff]
    %v424 = vld [vmem:[#allocation9 + $0x3d8] sm:$0xff]
    %v425 = vld [vmem:[#allocation9 + $0x3e0] sm:$0xff]
    %v426 = vld [vmem:[#allocation9 + $0x3e8] sm:$0xff]
    %v427 = vld [vmem:[#allocation9 + $0x3f0] sm:$0xff]
    %v428 = vld [vmem:[#allocation9 + $0x3f8] sm:$0xff]
    %v429 = vld [vmem:[#allocation11] sm:$0xff]
    %v431 = vperm.slane %v429, 0
    %v432 = vperm.slane %v429, 1
    %v433 = vperm.slane %v429, 2
    %v434 = vperm.slane %v429, 3
    %v435 = vperm.slane %v429, 4
    %v436 = vperm.slane %v429, 5
    %v437 = vperm.slane %v429, 6
    %v438 = vperm.slane %v429, 7
    %v575 = vunpack.c.l.b16 %v301
    %v576 = vunpack.c.h.b16 %v301
    %v577 = vunpack.c.l.b16 %v302
    %v578 = vunpack.c.h.b16 %v302
    %v579 = vunpack.c.l.b16 %v303
    %v580 = vunpack.c.h.b16 %v303
    %v581 = vunpack.c.l.b16 %v304
    %v582 = vunpack.c.h.b16 %v304
    %v583 = vunpack.c.l.b16 %v305
    %v584 = vunpack.c.h.b16 %v305
    %v585 = vunpack.c.l.b16 %v306
    %v586 = vunpack.c.h.b16 %v306
    %v587 = vunpack.c.l.b16 %v307
    %v588 = vunpack.c.h.b16 %v307
    %v589 = vunpack.c.l.b16 %v308
    %v590 = vunpack.c.h.b16 %v308
    %v591 = vunpack.c.l.b16 %v309
    %v592 = vunpack.c.h.b16 %v309
    %v593 = vunpack.c.l.b16 %v310
    %v594 = vunpack.c.h.b16 %v310
    %v595 = vunpack.c.l.b16 %v311
    %v596 = vunpack.c.h.b16 %v311
    %v597 = vunpack.c.l.b16 %v312
    %v598 = vunpack.c.h.b16 %v312
    %v599 = vunpack.c.l.b16 %v313
    %v600 = vunpack.c.h.b16 %v313
    %v601 = vunpack.c.l.b16 %v314
    %v602 = vunpack.c.h.b16 %v314
    %v603 = vunpack.c.l.b16 %v315
    %v604 = vunpack.c.h.b16 %v315
    %v605 = vunpack.c.l.b16 %v316
    %v606 = vunpack.c.h.b16 %v316
    %v607 = vunpack.c.l.b16 %v317
    %v608 = vunpack.c.h.b16 %v317
    %v609 = vunpack.c.l.b16 %v318
    %v610 = vunpack.c.h.b16 %v318
    %v611 = vunpack.c.l.b16 %v319
    %v612 = vunpack.c.h.b16 %v319
    %v613 = vunpack.c.l.b16 %v320
    %v614 = vunpack.c.h.b16 %v320
    %v615 = vunpack.c.l.b16 %v321
    %v616 = vunpack.c.h.b16 %v321
    %v617 = vunpack.c.l.b16 %v322
    %v618 = vunpack.c.h.b16 %v322
    %v619 = vunpack.c.l.b16 %v323
    %v620 = vunpack.c.h.b16 %v323
    %v621 = vunpack.c.l.b16 %v324
    %v622 = vunpack.c.h.b16 %v324
    %v623 = vunpack.c.l.b16 %v325
    %v624 = vunpack.c.h.b16 %v325
    %v625 = vunpack.c.l.b16 %v326
    %v626 = vunpack.c.h.b16 %v326
    %v627 = vunpack.c.l.b16 %v327
    %v628 = vunpack.c.h.b16 %v327
    %v629 = vunpack.c.l.b16 %v328
    %v630 = vunpack.c.h.b16 %v328
    %v631 = vunpack.c.l.b16 %v329
    %v632 = vunpack.c.h.b16 %v329
    %v633 = vunpack.c.l.b16 %v330
    %v634 = vunpack.c.h.b16 %v330
    %v635 = vunpack.c.l.b16 %v331
    %v636 = vunpack.c.h.b16 %v331
    %v637 = vunpack.c.l.b16 %v332
    %v638 = vunpack.c.h.b16 %v332
    %v639 = vunpack.c.l.b16 %v333
    %v640 = vunpack.c.h.b16 %v333
    %v641 = vunpack.c.l.b16 %v334
    %v642 = vunpack.c.h.b16 %v334
    %v643 = vunpack.c.l.b16 %v335
    %v644 = vunpack.c.h.b16 %v335
    %v645 = vunpack.c.l.b16 %v336
    %v646 = vunpack.c.h.b16 %v336
    %v647 = vunpack.c.l.b16 %v337
    %v648 = vunpack.c.h.b16 %v337
    %v649 = vunpack.c.l.b16 %v338
    %v650 = vunpack.c.h.b16 %v338
    %v651 = vunpack.c.l.b16 %v339
    %v652 = vunpack.c.h.b16 %v339
    %v653 = vunpack.c.l.b16 %v340
    %v654 = vunpack.c.h.b16 %v340
    %v655 = vunpack.c.l.b16 %v341
    %v656 = vunpack.c.h.b16 %v341
    %v657 = vunpack.c.l.b16 %v342
    %v658 = vunpack.c.h.b16 %v342
    %v659 = vunpack.c.l.b16 %v343
    %v660 = vunpack.c.h.b16 %v343
    %v661 = vunpack.c.l.b16 %v344
    %v662 = vunpack.c.h.b16 %v344
    %v663 = vunpack.c.l.b16 %v345
    %v664 = vunpack.c.h.b16 %v345
    %v665 = vunpack.c.l.b16 %v346
    %v666 = vunpack.c.h.b16 %v346
    %v667 = vunpack.c.l.b16 %v347
    %v668 = vunpack.c.h.b16 %v347
    %v669 = vunpack.c.l.b16 %v348
    %v670 = vunpack.c.h.b16 %v348
    %v671 = vunpack.c.l.b16 %v349
    %v672 = vunpack.c.h.b16 %v349
    %v673 = vunpack.c.l.b16 %v350
    %v674 = vunpack.c.h.b16 %v350
    %v675 = vunpack.c.l.b16 %v351
    %v676 = vunpack.c.h.b16 %v351
    %v677 = vunpack.c.l.b16 %v352
    %v678 = vunpack.c.h.b16 %v352
    %v679 = vunpack.c.l.b16 %v353
    %v680 = vunpack.c.h.b16 %v353
    %v681 = vunpack.c.l.b16 %v354
    %v682 = vunpack.c.h.b16 %v354
    %v683 = vunpack.c.l.b16 %v355
    %v684 = vunpack.c.h.b16 %v355
    %v685 = vunpack.c.l.b16 %v356
    %v686 = vunpack.c.h.b16 %v356
    %v687 = vunpack.c.l.b16 %v357
    %v688 = vunpack.c.h.b16 %v357
    %v689 = vunpack.c.l.b16 %v358
    %v690 = vunpack.c.h.b16 %v358
    %v691 = vunpack.c.l.b16 %v359
    %v692 = vunpack.c.h.b16 %v359
    %v693 = vunpack.c.l.b16 %v360
    %v694 = vunpack.c.h.b16 %v360
    %v695 = vunpack.c.l.b16 %v361
    %v696 = vunpack.c.h.b16 %v361
    %v697 = vunpack.c.l.b16 %v362
    %v698 = vunpack.c.h.b16 %v362
    %v699 = vunpack.c.l.b16 %v363
    %v700 = vunpack.c.h.b16 %v363
    %v701 = vunpack.c.l.b16 %v364
    %v702 = vunpack.c.h.b16 %v364
    %v703 = vunpack.c.l.b16 %v365
    %v704 = vunpack.c.h.b16 %v365
    %v705 = vunpack.c.l.b16 %v366
    %v706 = vunpack.c.h.b16 %v366
    %v707 = vunpack.c.l.b16 %v367
    %v708 = vunpack.c.h.b16 %v367
    %v709 = vunpack.c.l.b16 %v368
    %v710 = vunpack.c.h.b16 %v368
    %v711 = vunpack.c.l.b16 %v369
    %v712 = vunpack.c.h.b16 %v369
    %v713 = vunpack.c.l.b16 %v370
    %v714 = vunpack.c.h.b16 %v370
    %v715 = vunpack.c.l.b16 %v371
    %v716 = vunpack.c.h.b16 %v371
    %v717 = vunpack.c.l.b16 %v372
    %v718 = vunpack.c.h.b16 %v372
    %v719 = vunpack.c.l.b16 %v373
    %v720 = vunpack.c.h.b16 %v373
    %v721 = vunpack.c.l.b16 %v374
    %v722 = vunpack.c.h.b16 %v374
    %v723 = vunpack.c.l.b16 %v375
    %v724 = vunpack.c.h.b16 %v375
    %v725 = vunpack.c.l.b16 %v376
    %v726 = vunpack.c.h.b16 %v376
    %v727 = vunpack.c.l.b16 %v377
    %v728 = vunpack.c.h.b16 %v377
    %v729 = vunpack.c.l.b16 %v378
    %v730 = vunpack.c.h.b16 %v378
    %v731 = vunpack.c.l.b16 %v379
    %v732 = vunpack.c.h.b16 %v379
    %v733 = vunpack.c.l.b16 %v380
    %v734 = vunpack.c.h.b16 %v380
    %v735 = vunpack.c.l.b16 %v381
    %v736 = vunpack.c.h.b16 %v381
    %v737 = vunpack.c.l.b16 %v382
    %v738 = vunpack.c.h.b16 %v382
    %v739 = vunpack.c.l.b16 %v383
    %v740 = vunpack.c.h.b16 %v383
    %v741 = vunpack.c.l.b16 %v384
    %v742 = vunpack.c.h.b16 %v384
    %v743 = vunpack.c.l.b16 %v385
    %v744 = vunpack.c.h.b16 %v385
    %v745 = vunpack.c.l.b16 %v386
    %v746 = vunpack.c.h.b16 %v386
    %v747 = vunpack.c.l.b16 %v387
    %v748 = vunpack.c.h.b16 %v387
    %v749 = vunpack.c.l.b16 %v388
    %v750 = vunpack.c.h.b16 %v388
    %v751 = vunpack.c.l.b16 %v389
    %v752 = vunpack.c.h.b16 %v389
    %v753 = vunpack.c.l.b16 %v390
    %v754 = vunpack.c.h.b16 %v390
    %v755 = vunpack.c.l.b16 %v391
    %v756 = vunpack.c.h.b16 %v391
    %v757 = vunpack.c.l.b16 %v392
    %v758 = vunpack.c.h.b16 %v392
    %v759 = vunpack.c.l.b16 %v393
    %v760 = vunpack.c.h.b16 %v393
    %v761 = vunpack.c.l.b16 %v394
    %v762 = vunpack.c.h.b16 %v394
    %v763 = vunpack.c.l.b16 %v395
    %v764 = vunpack.c.h.b16 %v395
    %v765 = vunpack.c.l.b16 %v396
    %v766 = vunpack.c.h.b16 %v396
    %v767 = vunpack.c.l.b16 %v397
    %v768 = vunpack.c.h.b16 %v397
    %v769 = vunpack.c.l.b16 %v398
    %v770 = vunpack.c.h.b16 %v398
    %v771 = vunpack.c.l.b16 %v399
    %v772 = vunpack.c.h.b16 %v399
    %v773 = vunpack.c.l.b16 %v400
    %v774 = vunpack.c.h.b16 %v400
    %v775 = vunpack.c.l.b16 %v401
    %v776 = vunpack.c.h.b16 %v401
    %v777 = vunpack.c.l.b16 %v402
    %v778 = vunpack.c.h.b16 %v402
    %v779 = vunpack.c.l.b16 %v403
    %v780 = vunpack.c.h.b16 %v403
    %v781 = vunpack.c.l.b16 %v404
    %v782 = vunpack.c.h.b16 %v404
    %v783 = vunpack.c.l.b16 %v405
    %v784 = vunpack.c.h.b16 %v405
    %v785 = vunpack.c.l.b16 %v406
    %v786 = vunpack.c.h.b16 %v406
    %v787 = vunpack.c.l.b16 %v407
    %v788 = vunpack.c.h.b16 %v407
    %v789 = vunpack.c.l.b16 %v408
    %v790 = vunpack.c.h.b16 %v408
    %v791 = vunpack.c.l.b16 %v409
    %v792 = vunpack.c.h.b16 %v409
    %v793 = vunpack.c.l.b16 %v410
    %v794 = vunpack.c.h.b16 %v410
    %v795 = vunpack.c.l.b16 %v411
    %v796 = vunpack.c.h.b16 %v411
    %v797 = vunpack.c.l.b16 %v412
    %v798 = vunpack.c.h.b16 %v412
    %v799 = vunpack.c.l.b16 %v413
    %v800 = vunpack.c.h.b16 %v413
    %v801 = vunpack.c.l.b16 %v414
    %v802 = vunpack.c.h.b16 %v414
    %v803 = vunpack.c.l.b16 %v415
    %v804 = vunpack.c.h.b16 %v415
    %v805 = vunpack.c.l.b16 %v416
    %v806 = vunpack.c.h.b16 %v416
    %v807 = vunpack.c.l.b16 %v417
    %v808 = vunpack.c.h.b16 %v417
    %v809 = vunpack.c.l.b16 %v418
    %v810 = vunpack.c.h.b16 %v418
    %v811 = vunpack.c.l.b16 %v419
    %v812 = vunpack.c.h.b16 %v419
    %v813 = vunpack.c.l.b16 %v420
    %v814 = vunpack.c.h.b16 %v420
    %v815 = vunpack.c.l.b16 %v421
    %v816 = vunpack.c.h.b16 %v421
    %v817 = vunpack.c.l.b16 %v422
    %v818 = vunpack.c.h.b16 %v422
    %v819 = vunpack.c.l.b16 %v423
    %v820 = vunpack.c.h.b16 %v423
    %v821 = vunpack.c.l.b16 %v424
    %v822 = vunpack.c.h.b16 %v424
    %v823 = vunpack.c.l.b16 %v425
    %v824 = vunpack.c.h.b16 %v425
    %v825 = vunpack.c.l.b16 %v426
    %v826 = vunpack.c.h.b16 %v426
    %v827 = vunpack.c.l.b16 %v427
    %v828 = vunpack.c.h.b16 %v427
    %v829 = vunpack.c.l.b16 %v428
    %v830 = vunpack.c.h.b16 %v428
    %v831 = vpack.c.b16 %v583, %v575
    %v832 = vpack.c.b16 %v584, %v576
    %v833 = vpack.c.b16 %v585, %v577
    %v834 = vpack.c.b16 %v586, %v578
    %v835 = vpack.c.b16 %v587, %v579
    %v836 = vpack.c.b16 %v588, %v580
    %v837 = vpack.c.b16 %v589, %v581
    %v838 = vpack.c.b16 %v590, %v582
    %v839 = vpack.c.b16 %v599, %v591
    %v840 = vpack.c.b16 %v600, %v592
    %v841 = vpack.c.b16 %v601, %v593
    %v842 = vpack.c.b16 %v602, %v594
    %v843 = vpack.c.b16 %v603, %v595
    %v844 = vpack.c.b16 %v604, %v596
    %v845 = vpack.c.b16 %v605, %v597
    %v846 = vpack.c.b16 %v606, %v598
    %v847 = vpack.c.b16 %v615, %v607
    %v848 = vpack.c.b16 %v616, %v608
    %v849 = vpack.c.b16 %v617, %v609
    %v850 = vpack.c.b16 %v618, %v610
    %v851 = vpack.c.b16 %v619, %v611
    %v852 = vpack.c.b16 %v620, %v612
    %v853 = vpack.c.b16 %v621, %v613
    %v854 = vpack.c.b16 %v622, %v614
    %v855 = vpack.c.b16 %v631, %v623
    %v856 = vpack.c.b16 %v632, %v624
    %v857 = vpack.c.b16 %v633, %v625
    %v858 = vpack.c.b16 %v634, %v626
    %v859 = vpack.c.b16 %v635, %v627
    %v860 = vpack.c.b16 %v636, %v628
    %v861 = vpack.c.b16 %v637, %v629
    %v862 = vpack.c.b16 %v638, %v630
    %v863 = vpack.c.b16 %v647, %v639
    %v864 = vpack.c.b16 %v648, %v640
    %v865 = vpack.c.b16 %v649, %v641
    %v866 = vpack.c.b16 %v650, %v642
    %v867 = vpack.c.b16 %v651, %v643
    %v868 = vpack.c.b16 %v652, %v644
    %v869 = vpack.c.b16 %v653, %v645
    %v870 = vpack.c.b16 %v654, %v646
    %v871 = vpack.c.b16 %v663, %v655
    %v872 = vpack.c.b16 %v664, %v656
    %v873 = vpack.c.b16 %v665, %v657
    %v874 = vpack.c.b16 %v666, %v658
    %v875 = vpack.c.b16 %v667, %v659
    %v876 = vpack.c.b16 %v668, %v660
    %v877 = vpack.c.b16 %v669, %v661
    %v878 = vpack.c.b16 %v670, %v662
    %v879 = vpack.c.b16 %v679, %v671
    %v880 = vpack.c.b16 %v680, %v672
    %v881 = vpack.c.b16 %v681, %v673
    %v882 = vpack.c.b16 %v682, %v674
    %v883 = vpack.c.b16 %v683, %v675
    %v884 = vpack.c.b16 %v684, %v676
    %v885 = vpack.c.b16 %v685, %v677
    %v886 = vpack.c.b16 %v686, %v678
    %v887 = vpack.c.b16 %v695, %v687
    %v888 = vpack.c.b16 %v696, %v688
    %v889 = vpack.c.b16 %v697, %v689
    %v890 = vpack.c.b16 %v698, %v690
    %v891 = vpack.c.b16 %v699, %v691
    %v892 = vpack.c.b16 %v700, %v692
    %v893 = vpack.c.b16 %v701, %v693
    %v894 = vpack.c.b16 %v702, %v694
    %v895 = vpack.c.b16 %v711, %v703
    %v896 = vpack.c.b16 %v712, %v704
    %v897 = vpack.c.b16 %v713, %v705
    %v898 = vpack.c.b16 %v714, %v706
    %v899 = vpack.c.b16 %v715, %v707
    %v900 = vpack.c.b16 %v716, %v708
    %v901 = vpack.c.b16 %v717, %v709
    %v902 = vpack.c.b16 %v718, %v710
    %v903 = vpack.c.b16 %v727, %v719
    %v904 = vpack.c.b16 %v728, %v720
    %v905 = vpack.c.b16 %v729, %v721
    %v906 = vpack.c.b16 %v730, %v722
    %v907 = vpack.c.b16 %v731, %v723
    %v908 = vpack.c.b16 %v732, %v724
    %v909 = vpack.c.b16 %v733, %v725
    %v910 = vpack.c.b16 %v734, %v726
    %v911 = vpack.c.b16 %v743, %v735
    %v912 = vpack.c.b16 %v744, %v736
    %v913 = vpack.c.b16 %v745, %v737
    %v914 = vpack.c.b16 %v746, %v738
    %v915 = vpack.c.b16 %v747, %v739
    %v916 = vpack.c.b16 %v748, %v740
    %v917 = vpack.c.b16 %v749, %v741
    %v918 = vpack.c.b16 %v750, %v742
    %v919 = vpack.c.b16 %v759, %v751
    %v920 = vpack.c.b16 %v760, %v752
    %v921 = vpack.c.b16 %v761, %v753
    %v922 = vpack.c.b16 %v762, %v754
    %v923 = vpack.c.b16 %v763, %v755
    %v924 = vpack.c.b16 %v764, %v756
    %v925 = vpack.c.b16 %v765, %v757
    %v926 = vpack.c.b16 %v766, %v758
    %v927 = vpack.c.b16 %v775, %v767
    %v928 = vpack.c.b16 %v776, %v768
    %v929 = vpack.c.b16 %v777, %v769
    %v930 = vpack.c.b16 %v778, %v770
    %v931 = vpack.c.b16 %v779, %v771
    %v932 = vpack.c.b16 %v780, %v772
    %v933 = vpack.c.b16 %v781, %v773
    %v934 = vpack.c.b16 %v782, %v774
    %v935 = vpack.c.b16 %v791, %v783
    %v936 = vpack.c.b16 %v792, %v784
    %v937 = vpack.c.b16 %v793, %v785
    %v938 = vpack.c.b16 %v794, %v786
    %v939 = vpack.c.b16 %v795, %v787
    %v940 = vpack.c.b16 %v796, %v788
    %v941 = vpack.c.b16 %v797, %v789
    %v942 = vpack.c.b16 %v798, %v790
    %v943 = vpack.c.b16 %v807, %v799
    %v944 = vpack.c.b16 %v808, %v800
    %v945 = vpack.c.b16 %v809, %v801
    %v946 = vpack.c.b16 %v810, %v802
    %v947 = vpack.c.b16 %v811, %v803
    %v948 = vpack.c.b16 %v812, %v804
    %v949 = vpack.c.b16 %v813, %v805
    %v950 = vpack.c.b16 %v814, %v806
    %v951 = vpack.c.b16 %v823, %v815
    %v952 = vpack.c.b16 %v824, %v816
    %v953 = vpack.c.b16 %v825, %v817
    %v954 = vpack.c.b16 %v826, %v818
    %v955 = vpack.c.b16 %v827, %v819
    %v956 = vpack.c.b16 %v828, %v820
    %v957 = vpack.c.b16 %v829, %v821
    %v958 = vpack.c.b16 %v830, %v822
    %1087 = vmatpush.bf16.msra.mxu0 %v887
    %1088 = vmatpush.bf16.msra.mxu0 %v879
    %1089 = vmatpush.bf16.msra.mxu0 %v871
    %1090 = vmatpush.bf16.msra.mxu0 %v863
    %1091 = vmatpush.bf16.msra.mxu0 %v855
    %1092 = vmatpush.bf16.msra.mxu0 %v847
    %1093 = vmatpush.bf16.msra.mxu0 %v839
    %1094 = vmatpush.bf16.msra.mxu0 %v831
    %1095 = vmatmul.bf16.gmra.mxu0 %v299
    %v1096 = vpop.f32.mrf.mxu0
    %v1097 = vadd.f32 %v431, %v1096
    %v1098 = vpop.f32.mrf.mxu0
    %v1099 = vadd.f32 %v431, %v1098
    %1100 = vdwg.mxu0
    %1101 = vmatpush.bf16.msra.mxu0 %v951
    %1102 = vmatpush.bf16.msra.mxu0 %v943
    %1103 = vmatpush.bf16.msra.mxu0 %v935
    %1104 = vmatpush.bf16.msra.mxu0 %v927
    %1105 = vmatpush.bf16.msra.mxu0 %v919
    %1106 = vmatpush.bf16.msra.mxu0 %v911
    %1107 = vmatpush.bf16.msra.mxu0 %v903
    %1108 = vmatpush.bf16.msra.mxu0 %v895
    %1109 = vmatmul.bf16.gmra.mxu0 %v300
    %v1110 = vpop.f32.mrf.mxu0
    %v1111 = vadd.f32 %v1097, %v1110
    %v1112 = vpop.f32.mrf.mxu0
    %v1113 = vadd.f32 %v1099, %v1112
    %1114 = vdwg.mxu0
    %1115 = vmatpush.bf16.msra.mxu0 %v888
    %1116 = vmatpush.bf16.msra.mxu0 %v880
    %1117 = vmatpush.bf16.msra.mxu0 %v872
    %1118 = vmatpush.bf16.msra.mxu0 %v864
    %1119 = vmatpush.bf16.msra.mxu0 %v856
    %1120 = vmatpush.bf16.msra.mxu0 %v848
    %1121 = vmatpush.bf16.msra.mxu0 %v840
    %1122 = vmatpush.bf16.msra.mxu0 %v832
    %1123 = vmatmul.bf16.gmra.mxu0 %v299
    %v1124 = vpop.f32.mrf.mxu0
    %v1125 = vadd.f32 %v432, %v1124
    %v1126 = vpop.f32.mrf.mxu0
    %v1127 = vadd.f32 %v432, %v1126
    %1128 = vdwg.mxu0
    %1129 = vmatpush.bf16.msra.mxu0 %v952
    %1130 = vmatpush.bf16.msra.mxu0 %v944
    %1131 = vmatpush.bf16.msra.mxu0 %v936
    %1132 = vmatpush.bf16.msra.mxu0 %v928
    %1133 = vmatpush.bf16.msra.mxu0 %v920
    %1134 = vmatpush.bf16.msra.mxu0 %v912
    %1135 = vmatpush.bf16.msra.mxu0 %v904
    %1136 = vmatpush.bf16.msra.mxu0 %v896
    %1137 = vmatmul.bf16.gmra.mxu0 %v300
    %v1138 = vpop.f32.mrf.mxu0
    %v1139 = vadd.f32 %v1125, %v1138
    %v1140 = vpop.f32.mrf.mxu0
    %v1141 = vadd.f32 %v1127, %v1140
    %1142 = vdwg.mxu0
    %1143 = vmatpush.bf16.msra.mxu0 %v889
    %1144 = vmatpush.bf16.msra.mxu0 %v881
    %1145 = vmatpush.bf16.msra.mxu0 %v873
    %1146 = vmatpush.bf16.msra.mxu0 %v865
    %1147 = vmatpush.bf16.msra.mxu0 %v857
    %1148 = vmatpush.bf16.msra.mxu0 %v849
    %1149 = vmatpush.bf16.msra.mxu0 %v841
    %1150 = vmatpush.bf16.msra.mxu0 %v833
    %1151 = vmatmul.bf16.gmra.mxu0 %v299
    %v1152 = vpop.f32.mrf.mxu0
    %v1153 = vadd.f32 %v433, %v1152
    %v1154 = vpop.f32.mrf.mxu0
    %v1155 = vadd.f32 %v433, %v1154
    %1156 = vdwg.mxu0
    %1157 = vmatpush.bf16.msra.mxu0 %v953
    %1158 = vmatpush.bf16.msra.mxu0 %v945
    %1159 = vmatpush.bf16.msra.mxu0 %v937
    %1160 = vmatpush.bf16.msra.mxu0 %v929
    %1161 = vmatpush.bf16.msra.mxu0 %v921
    %1162 = vmatpush.bf16.msra.mxu0 %v913
    %1163 = vmatpush.bf16.msra.mxu0 %v905
    %1164 = vmatpush.bf16.msra.mxu0 %v897
    %1165 = vmatmul.bf16.gmra.mxu0 %v300
    %v1166 = vpop.f32.mrf.mxu0
    %v1167 = vadd.f32 %v1153, %v1166
    %v1168 = vpop.f32.mrf.mxu0
    %v1169 = vadd.f32 %v1155, %v1168
    %1170 = vdwg.mxu0
    %1171 = vmatpush.bf16.msra.mxu0 %v890
    %1172 = vmatpush.bf16.msra.mxu0 %v882
    %1173 = vmatpush.bf16.msra.mxu0 %v874
    %1174 = vmatpush.bf16.msra.mxu0 %v866
    %1175 = vmatpush.bf16.msra.mxu0 %v858
    %1176 = vmatpush.bf16.msra.mxu0 %v850
    %1177 = vmatpush.bf16.msra.mxu0 %v842
    %1178 = vmatpush.bf16.msra.mxu0 %v834
    %1179 = vmatmul.bf16.gmra.mxu0 %v299
    %v1180 = vpop.f32.mrf.mxu0
    %v1181 = vadd.f32 %v434, %v1180
    %v1182 = vpop.f32.mrf.mxu0
    %v1183 = vadd.f32 %v434, %v1182
    %1184 = vdwg.mxu0
    %1185 = vmatpush.bf16.msra.mxu0 %v954
    %1186 = vmatpush.bf16.msra.mxu0 %v946
    %1187 = vmatpush.bf16.msra.mxu0 %v938
    %1188 = vmatpush.bf16.msra.mxu0 %v930
    %1189 = vmatpush.bf16.msra.mxu0 %v922
    %1190 = vmatpush.bf16.msra.mxu0 %v914
    %1191 = vmatpush.bf16.msra.mxu0 %v906
    %1192 = vmatpush.bf16.msra.mxu0 %v898
    %1193 = vmatmul.bf16.gmra.mxu0 %v300
    %v1194 = vpop.f32.mrf.mxu0
    %v1195 = vadd.f32 %v1181, %v1194
    %v1196 = vpop.f32.mrf.mxu0
    %v1197 = vadd.f32 %v1183, %v1196
    %1198 = vdwg.mxu0
    %1199 = vmatpush.bf16.msra.mxu0 %v891
    %1200 = vmatpush.bf16.msra.mxu0 %v883
    %1201 = vmatpush.bf16.msra.mxu0 %v875
    %1202 = vmatpush.bf16.msra.mxu0 %v867
    %1203 = vmatpush.bf16.msra.mxu0 %v859
    %1204 = vmatpush.bf16.msra.mxu0 %v851
    %1205 = vmatpush.bf16.msra.mxu0 %v843
    %1206 = vmatpush.bf16.msra.mxu0 %v835
    %1207 = vmatmul.bf16.gmra.mxu0 %v299
    %v1208 = vpop.f32.mrf.mxu0
    %v1209 = vadd.f32 %v435, %v1208
    %v1210 = vpop.f32.mrf.mxu0
    %v1211 = vadd.f32 %v435, %v1210
    %1212 = vdwg.mxu0
    %1213 = vmatpush.bf16.msra.mxu0 %v955
    %1214 = vmatpush.bf16.msra.mxu0 %v947
    %1215 = vmatpush.bf16.msra.mxu0 %v939
    %1216 = vmatpush.bf16.msra.mxu0 %v931
    %1217 = vmatpush.bf16.msra.mxu0 %v923
    %1218 = vmatpush.bf16.msra.mxu0 %v915
    %1219 = vmatpush.bf16.msra.mxu0 %v907
    %1220 = vmatpush.bf16.msra.mxu0 %v899
    %1221 = vmatmul.bf16.gmra.mxu0 %v300
    %v1222 = vpop.f32.mrf.mxu0
    %v1223 = vadd.f32 %v1209, %v1222
    %v1224 = vpop.f32.mrf.mxu0
    %v1225 = vadd.f32 %v1211, %v1224
    %1226 = vdwg.mxu0
    %1227 = vmatpush.bf16.msra.mxu0 %v892
    %1228 = vmatpush.bf16.msra.mxu0 %v884
    %1229 = vmatpush.bf16.msra.mxu0 %v876
    %1230 = vmatpush.bf16.msra.mxu0 %v868
    %1231 = vmatpush.bf16.msra.mxu0 %v860
    %1232 = vmatpush.bf16.msra.mxu0 %v852
    %1233 = vmatpush.bf16.msra.mxu0 %v844
    %1234 = vmatpush.bf16.msra.mxu0 %v836
    %1235 = vmatmul.bf16.gmra.mxu0 %v299
    %v1236 = vpop.f32.mrf.mxu0
    %v1237 = vadd.f32 %v436, %v1236
    %v1238 = vpop.f32.mrf.mxu0
    %v1239 = vadd.f32 %v436, %v1238
    %1240 = vdwg.mxu0
    %1241 = vmatpush.bf16.msra.mxu0 %v956
    %1242 = vmatpush.bf16.msra.mxu0 %v948
    %1243 = vmatpush.bf16.msra.mxu0 %v940
    %1244 = vmatpush.bf16.msra.mxu0 %v932
    %1245 = vmatpush.bf16.msra.mxu0 %v924
    %1246 = vmatpush.bf16.msra.mxu0 %v916
    %1247 = vmatpush.bf16.msra.mxu0 %v908
    %1248 = vmatpush.bf16.msra.mxu0 %v900
    %1249 = vmatmul.bf16.gmra.mxu0 %v300
    %v1250 = vpop.f32.mrf.mxu0
    %v1251 = vadd.f32 %v1237, %v1250
    %v1252 = vpop.f32.mrf.mxu0
    %v1253 = vadd.f32 %v1239, %v1252
    %1254 = vdwg.mxu0
    %1255 = vmatpush.bf16.msra.mxu0 %v893
    %1256 = vmatpush.bf16.msra.mxu0 %v885
    %1257 = vmatpush.bf16.msra.mxu0 %v877
    %1258 = vmatpush.bf16.msra.mxu0 %v869
    %1259 = vmatpush.bf16.msra.mxu0 %v861
    %1260 = vmatpush.bf16.msra.mxu0 %v853
    %1261 = vmatpush.bf16.msra.mxu0 %v845
    %1262 = vmatpush.bf16.msra.mxu0 %v837
    %1263 = vmatmul.bf16.gmra.mxu0 %v299
    %v1264 = vpop.f32.mrf.mxu0
    %v1265 = vadd.f32 %v437, %v1264
    %v1266 = vpop.f32.mrf.mxu0
    %v1267 = vadd.f32 %v437, %v1266
    %1268 = vdwg.mxu0
    %1269 = vmatpush.bf16.msra.mxu0 %v957
    %1270 = vmatpush.bf16.msra.mxu0 %v949
    %1271 = vmatpush.bf16.msra.mxu0 %v941
    %1272 = vmatpush.bf16.msra.mxu0 %v933
    %1273 = vmatpush.bf16.msra.mxu0 %v925
    %1274 = vmatpush.bf16.msra.mxu0 %v917
    %1275 = vmatpush.bf16.msra.mxu0 %v909
    %1276 = vmatpush.bf16.msra.mxu0 %v901
    %1277 = vmatmul.bf16.gmra.mxu0 %v300
    %v1278 = vpop.f32.mrf.mxu0
    %v1279 = vadd.f32 %v1265, %v1278
    %v1280 = vpop.f32.mrf.mxu0
    %v1281 = vadd.f32 %v1267, %v1280
    %1282 = vdwg.mxu0
    %1283 = vmatpush.bf16.msra.mxu0 %v894
    %1284 = vmatpush.bf16.msra.mxu0 %v886
    %1285 = vmatpush.bf16.msra.mxu0 %v878
    %1286 = vmatpush.bf16.msra.mxu0 %v870
    %1287 = vmatpush.bf16.msra.mxu0 %v862
    %1288 = vmatpush.bf16.msra.mxu0 %v854
    %1289 = vmatpush.bf16.msra.mxu0 %v846
    %1290 = vmatpush.bf16.msra.mxu0 %v838
    %1291 = vmatmul.bf16.gmra.mxu0 %v299
    %v1292 = vpop.f32.mrf.mxu0
    %v1293 = vadd.f32 %v438, %v1292
    %v1294 = vpop.f32.mrf.mxu0
    %v1295 = vadd.f32 %v438, %v1294
    %1296 = vdwg.mxu0
    %1297 = vmatpush.bf16.msra.mxu0 %v958
    %1298 = vmatpush.bf16.msra.mxu0 %v950
    %1299 = vmatpush.bf16.msra.mxu0 %v942
    %1300 = vmatpush.bf16.msra.mxu0 %v934
    %1301 = vmatpush.bf16.msra.mxu0 %v926
    %1302 = vmatpush.bf16.msra.mxu0 %v918
    %1303 = vmatpush.bf16.msra.mxu0 %v910
    %1304 = vmatpush.bf16.msra.mxu0 %v902
    %1305 = vmatmul.bf16.gmra.mxu0 %v300
    %v1306 = vpop.f32.mrf.mxu0
    %v1307 = vadd.f32 %v1293, %v1306
    %v1308 = vpop.f32.mrf.mxu0
    %v1309 = vadd.f32 %v1295, %v1308
    %1310 = vdwg.mxu0
    %v1311 = vmax.f32 %v1111, 0.0
    %v1312 = vmax.f32 %v1139, 0.0
    %v1313 = vmax.f32 %v1167, 0.0
    %v1314 = vmax.f32 %v1195, 0.0
    %v1315 = vmax.f32 %v1223, 0.0
    %v1316 = vmax.f32 %v1251, 0.0
    %v1317 = vmax.f32 %v1279, 0.0
    %v1318 = vmax.f32 %v1307, 0.0
    %v1319 = vmax.f32 %v1113, 0.0
    %v1320 = vmax.f32 %v1141, 0.0
    %v1321 = vmax.f32 %v1169, 0.0
    %v1322 = vmax.f32 %v1197, 0.0
    %v1323 = vmax.f32 %v1225, 0.0
    %v1324 = vmax.f32 %v1253, 0.0
    %v1325 = vmax.f32 %v1281, 0.0
    %v1326 = vmax.f32 %v1309, 0.0
    %v1327 = vpack.c.bf16 %v1319, %v1311
    %v1328 = vpack.c.bf16 %v1320, %v1312
    %v1329 = vpack.c.bf16 %v1321, %v1313
    %v1330 = vpack.c.bf16 %v1322, %v1314
    %v1331 = vpack.c.bf16 %v1323, %v1315
    %v1332 = vpack.c.bf16 %v1324, %v1316
    %v1333 = vpack.c.bf16 %v1325, %v1317
    %v1334 = vpack.c.bf16 %v1326, %v1318
    %v1335 = vld [vmem:[#allocation12] sm:$0xff]
    %v1336 = vld [vmem:[#allocation12 + $0x8] sm:$0xff]
    %v1337 = vld [vmem:[#allocation12 + $0x10] sm:$0xff]
    %v1338 = vld [vmem:[#allocation12 + $0x18] sm:$0xff]
    %v1339 = vld [vmem:[#allocation12 + $0x20] sm:$0xff]
    %v1340 = vld [vmem:[#allocation12 + $0x28] sm:$0xff]
    %v1341 = vld [vmem:[#allocation12 + $0x30] sm:$0xff]
    %v1342 = vld [vmem:[#allocation12 + $0x38] sm:$0xff]
    %v1343 = vld [vmem:[#allocation12 + $0x40] sm:$0xff]
    %v1344 = vld [vmem:[#allocation12 + $0x48] sm:$0xff]
    %v1345 = vld [vmem:[#allocation12 + $0x50] sm:$0xff]
    %v1346 = vld [vmem:[#allocation12 + $0x58] sm:$0xff]
    %v1347 = vld [vmem:[#allocation12 + $0x60] sm:$0xff]
    %v1348 = vld [vmem:[#allocation12 + $0x68] sm:$0xff]
    %v1349 = vld [vmem:[#allocation12 + $0x70] sm:$0xff]
    %v1350 = vld [vmem:[#allocation12 + $0x78] sm:$0xff]
    %v1351 = vld [vmem:[#allocation12 + $0x80] sm:$0xff]
    %v1352 = vld [vmem:[#allocation12 + $0x88] sm:$0xff]
    %v1353 = vld [vmem:[#allocation12 + $0x90] sm:$0xff]
    %v1354 = vld [vmem:[#allocation12 + $0x98] sm:$0xff]
    %v1355 = vld [vmem:[#allocation12 + $0xa0] sm:$0xff]
    %v1356 = vld [vmem:[#allocation12 + $0xa8] sm:$0xff]
    %v1357 = vld [vmem:[#allocation12 + $0xb0] sm:$0xff]
    %v1358 = vld [vmem:[#allocation12 + $0xb8] sm:$0xff]
    %v1359 = vld [vmem:[#allocation12 + $0xc0] sm:$0xff]
    %v1360 = vld [vmem:[#allocation12 + $0xc8] sm:$0xff]
    %v1361 = vld [vmem:[#allocation12 + $0xd0] sm:$0xff]
    %v1362 = vld [vmem:[#allocation12 + $0xd8] sm:$0xff]
    %v1363 = vld [vmem:[#allocation12 + $0xe0] sm:$0xff]
    %v1364 = vld [vmem:[#allocation12 + $0xe8] sm:$0xff]
    %v1365 = vld [vmem:[#allocation12 + $0xf0] sm:$0xff]
    %v1366 = vld [vmem:[#allocation12 + $0xf8] sm:$0xff]
    %v1367 = vld [vmem:[#allocation12 + $0x100] sm:$0xff]
    %v1368 = vld [vmem:[#allocation12 + $0x108] sm:$0xff]
    %v1369 = vld [vmem:[#allocation12 + $0x110] sm:$0xff]
    %v1370 = vld [vmem:[#allocation12 + $0x118] sm:$0xff]
    %v1371 = vld [vmem:[#allocation12 + $0x120] sm:$0xff]
    %v1372 = vld [vmem:[#allocation12 + $0x128] sm:$0xff]
    %v1373 = vld [vmem:[#allocation12 + $0x130] sm:$0xff]
    %v1374 = vld [vmem:[#allocation12 + $0x138] sm:$0xff]
    %v1375 = vld [vmem:[#allocation12 + $0x140] sm:$0xff]
    %v1376 = vld [vmem:[#allocation12 + $0x148] sm:$0xff]
    %v1377 = vld [vmem:[#allocation12 + $0x150] sm:$0xff]
    %v1378 = vld [vmem:[#allocation12 + $0x158] sm:$0xff]
    %v1379 = vld [vmem:[#allocation12 + $0x160] sm:$0xff]
    %v1380 = vld [vmem:[#allocation12 + $0x168] sm:$0xff]
    %v1381 = vld [vmem:[#allocation12 + $0x170] sm:$0xff]
    %v1382 = vld [vmem:[#allocation12 + $0x178] sm:$0xff]
    %v1383 = vld [vmem:[#allocation12 + $0x180] sm:$0xff]
    %v1384 = vld [vmem:[#allocation12 + $0x188] sm:$0xff]
    %v1385 = vld [vmem:[#allocation12 + $0x190] sm:$0xff]
    %v1386 = vld [vmem:[#allocation12 + $0x198] sm:$0xff]
    %v1387 = vld [vmem:[#allocation12 + $0x1a0] sm:$0xff]
    %v1388 = vld [vmem:[#allocation12 + $0x1a8] sm:$0xff]
    %v1389 = vld [vmem:[#allocation12 + $0x1b0] sm:$0xff]
    %v1390 = vld [vmem:[#allocation12 + $0x1b8] sm:$0xff]
    %v1391 = vld [vmem:[#allocation12 + $0x1c0] sm:$0xff]
    %v1392 = vld [vmem:[#allocation12 + $0x1c8] sm:$0xff]
    %v1393 = vld [vmem:[#allocation12 + $0x1d0] sm:$0xff]
    %v1394 = vld [vmem:[#allocation12 + $0x1d8] sm:$0xff]
    %v1395 = vld [vmem:[#allocation12 + $0x1e0] sm:$0xff]
    %v1396 = vld [vmem:[#allocation12 + $0x1e8] sm:$0xff]
    %v1397 = vld [vmem:[#allocation12 + $0x1f0] sm:$0xff]
    %v1398 = vld [vmem:[#allocation12 + $0x1f8] sm:$0xff]
    %v1399 = vld [vmem:[#allocation12 + $0x200] sm:$0xff]
    %v1400 = vld [vmem:[#allocation12 + $0x208] sm:$0xff]
    %v1401 = vld [vmem:[#allocation12 + $0x210] sm:$0xff]
    %v1402 = vld [vmem:[#allocation12 + $0x218] sm:$0xff]
    %v1403 = vld [vmem:[#allocation12 + $0x220] sm:$0xff]
    %v1404 = vld [vmem:[#allocation12 + $0x228] sm:$0xff]
    %v1405 = vld [vmem:[#allocation12 + $0x230] sm:$0xff]
    %v1406 = vld [vmem:[#allocation12 + $0x238] sm:$0xff]
    %v1407 = vld [vmem:[#allocation12 + $0x240] sm:$0xff]
    %v1408 = vld [vmem:[#allocation12 + $0x248] sm:$0xff]
    %v1409 = vld [vmem:[#allocation12 + $0x250] sm:$0xff]
    %v1410 = vld [vmem:[#allocation12 + $0x258] sm:$0xff]
    %v1411 = vld [vmem:[#allocation12 + $0x260] sm:$0xff]
    %v1412 = vld [vmem:[#allocation12 + $0x268] sm:$0xff]
    %v1413 = vld [vmem:[#allocation12 + $0x270] sm:$0xff]
    %v1414 = vld [vmem:[#allocation12 + $0x278] sm:$0xff]
    %v1415 = vld [vmem:[#allocation12 + $0x280] sm:$0xff]
    %v1416 = vld [vmem:[#allocation12 + $0x288] sm:$0xff]
    %v1417 = vld [vmem:[#allocation12 + $0x290] sm:$0xff]
    %v1418 = vld [vmem:[#allocation12 + $0x298] sm:$0xff]
    %v1419 = vld [vmem:[#allocation12 + $0x2a0] sm:$0xff]
    %v1420 = vld [vmem:[#allocation12 + $0x2a8] sm:$0xff]
    %v1421 = vld [vmem:[#allocation12 + $0x2b0] sm:$0xff]
    %v1422 = vld [vmem:[#allocation12 + $0x2b8] sm:$0xff]
    %v1423 = vld [vmem:[#allocation12 + $0x2c0] sm:$0xff]
    %v1424 = vld [vmem:[#allocation12 + $0x2c8] sm:$0xff]
    %v1425 = vld [vmem:[#allocation12 + $0x2d0] sm:$0xff]
    %v1426 = vld [vmem:[#allocation12 + $0x2d8] sm:$0xff]
    %v1427 = vld [vmem:[#allocation12 + $0x2e0] sm:$0xff]
    %v1428 = vld [vmem:[#allocation12 + $0x2e8] sm:$0xff]
    %v1429 = vld [vmem:[#allocation12 + $0x2f0] sm:$0xff]
    %v1430 = vld [vmem:[#allocation12 + $0x2f8] sm:$0xff]
    %v1431 = vld [vmem:[#allocation12 + $0x300] sm:$0xff]
    %v1432 = vld [vmem:[#allocation12 + $0x308] sm:$0xff]
    %v1433 = vld [vmem:[#allocation12 + $0x310] sm:$0xff]
    %v1434 = vld [vmem:[#allocation12 + $0x318] sm:$0xff]
    %v1435 = vld [vmem:[#allocation12 + $0x320] sm:$0xff]
    %v1436 = vld [vmem:[#allocation12 + $0x328] sm:$0xff]
    %v1437 = vld [vmem:[#allocation12 + $0x330] sm:$0xff]
    %v1438 = vld [vmem:[#allocation12 + $0x338] sm:$0xff]
    %v1439 = vld [vmem:[#allocation12 + $0x340] sm:$0xff]
    %v1440 = vld [vmem:[#allocation12 + $0x348] sm:$0xff]
    %v1441 = vld [vmem:[#allocation12 + $0x350] sm:$0xff]
    %v1442 = vld [vmem:[#allocation12 + $0x358] sm:$0xff]
    %v1443 = vld [vmem:[#allocation12 + $0x360] sm:$0xff]
    %v1444 = vld [vmem:[#allocation12 + $0x368] sm:$0xff]
    %v1445 = vld [vmem:[#allocation12 + $0x370] sm:$0xff]
    %v1446 = vld [vmem:[#allocation12 + $0x378] sm:$0xff]
    %v1447 = vld [vmem:[#allocation12 + $0x380] sm:$0xff]
    %v1448 = vld [vmem:[#allocation12 + $0x388] sm:$0xff]
    %v1449 = vld [vmem:[#allocation12 + $0x390] sm:$0xff]
    %v1450 = vld [vmem:[#allocation12 + $0x398] sm:$0xff]
    %v1451 = vld [vmem:[#allocation12 + $0x3a0] sm:$0xff]
    %v1452 = vld [vmem:[#allocation12 + $0x3a8] sm:$0xff]
    %v1453 = vld [vmem:[#allocation12 + $0x3b0] sm:$0xff]
    %v1454 = vld [vmem:[#allocation12 + $0x3b8] sm:$0xff]
    %v1455 = vld [vmem:[#allocation12 + $0x3c0] sm:$0xff]
    %v1456 = vld [vmem:[#allocation12 + $0x3c8] sm:$0xff]
    %v1457 = vld [vmem:[#allocation12 + $0x3d0] sm:$0xff]
    %v1458 = vld [vmem:[#allocation12 + $0x3d8] sm:$0xff]
    %v1459 = vld [vmem:[#allocation12 + $0x3e0] sm:$0xff]
    %v1460 = vld [vmem:[#allocation12 + $0x3e8] sm:$0xff]
    %v1461 = vld [vmem:[#allocation12 + $0x3f0] sm:$0xff]
    %v1462 = vld [vmem:[#allocation12 + $0x3f8] sm:$0xff]
    %v1463 = vld [vmem:[#allocation12 + $0x400] sm:$0xff]
    %v1464 = vld [vmem:[#allocation12 + $0x408] sm:$0xff]
    %v1465 = vld [vmem:[#allocation12 + $0x410] sm:$0xff]
    %v1466 = vld [vmem:[#allocation12 + $0x418] sm:$0xff]
    %v1467 = vld [vmem:[#allocation12 + $0x420] sm:$0xff]
    %v1468 = vld [vmem:[#allocation12 + $0x428] sm:$0xff]
    %v1469 = vld [vmem:[#allocation12 + $0x430] sm:$0xff]
    %v1470 = vld [vmem:[#allocation12 + $0x438] sm:$0xff]
    %v1471 = vld [vmem:[#allocation12 + $0x440] sm:$0xff]
    %v1472 = vld [vmem:[#allocation12 + $0x448] sm:$0xff]
    %v1473 = vld [vmem:[#allocation12 + $0x450] sm:$0xff]
    %v1474 = vld [vmem:[#allocation12 + $0x458] sm:$0xff]
    %v1475 = vld [vmem:[#allocation12 + $0x460] sm:$0xff]
    %v1476 = vld [vmem:[#allocation12 + $0x468] sm:$0xff]
    %v1477 = vld [vmem:[#allocation12 + $0x470] sm:$0xff]
    %v1478 = vld [vmem:[#allocation12 + $0x478] sm:$0xff]
    %v1479 = vld [vmem:[#allocation12 + $0x480] sm:$0xff]
    %v1480 = vld [vmem:[#allocation12 + $0x488] sm:$0xff]
    %v1481 = vld [vmem:[#allocation12 + $0x490] sm:$0xff]
    %v1482 = vld [vmem:[#allocation12 + $0x498] sm:$0xff]
    %v1483 = vld [vmem:[#allocation12 + $0x4a0] sm:$0xff]
    %v1484 = vld [vmem:[#allocation12 + $0x4a8] sm:$0xff]
    %v1485 = vld [vmem:[#allocation12 + $0x4b0] sm:$0xff]
    %v1486 = vld [vmem:[#allocation12 + $0x4b8] sm:$0xff]
    %v1487 = vld [vmem:[#allocation12 + $0x4c0] sm:$0xff]
    %v1488 = vld [vmem:[#allocation12 + $0x4c8] sm:$0xff]
    %v1489 = vld [vmem:[#allocation12 + $0x4d0] sm:$0xff]
    %v1490 = vld [vmem:[#allocation12 + $0x4d8] sm:$0xff]
    %v1491 = vld [vmem:[#allocation12 + $0x4e0] sm:$0xff]
    %v1492 = vld [vmem:[#allocation12 + $0x4e8] sm:$0xff]
    %v1493 = vld [vmem:[#allocation12 + $0x4f0] sm:$0xff]
    %v1494 = vld [vmem:[#allocation12 + $0x4f8] sm:$0xff]
    %v1495 = vld [vmem:[#allocation12 + $0x500] sm:$0xff]
    %v1496 = vld [vmem:[#allocation12 + $0x508] sm:$0xff]
    %v1497 = vld [vmem:[#allocation12 + $0x510] sm:$0xff]
    %v1498 = vld [vmem:[#allocation12 + $0x518] sm:$0xff]
    %v1499 = vld [vmem:[#allocation12 + $0x520] sm:$0xff]
    %v1500 = vld [vmem:[#allocation12 + $0x528] sm:$0xff]
    %v1501 = vld [vmem:[#allocation12 + $0x530] sm:$0xff]
    %v1502 = vld [vmem:[#allocation12 + $0x538] sm:$0xff]
    %v1503 = vld [vmem:[#allocation12 + $0x540] sm:$0xff]
    %v1504 = vld [vmem:[#allocation12 + $0x548] sm:$0xff]
    %v1505 = vld [vmem:[#allocation12 + $0x550] sm:$0xff]
    %v1506 = vld [vmem:[#allocation12 + $0x558] sm:$0xff]
    %v1507 = vld [vmem:[#allocation12 + $0x560] sm:$0xff]
    %v1508 = vld [vmem:[#allocation12 + $0x568] sm:$0xff]
    %v1509 = vld [vmem:[#allocation12 + $0x570] sm:$0xff]
    %v1510 = vld [vmem:[#allocation12 + $0x578] sm:$0xff]
    %v1511 = vld [vmem:[#allocation12 + $0x580] sm:$0xff]
    %v1512 = vld [vmem:[#allocation12 + $0x588] sm:$0xff]
    %v1513 = vld [vmem:[#allocation12 + $0x590] sm:$0xff]
    %v1514 = vld [vmem:[#allocation12 + $0x598] sm:$0xff]
    %v1515 = vld [vmem:[#allocation12 + $0x5a0] sm:$0xff]
    %v1516 = vld [vmem:[#allocation12 + $0x5a8] sm:$0xff]
    %v1517 = vld [vmem:[#allocation12 + $0x5b0] sm:$0xff]
    %v1518 = vld [vmem:[#allocation12 + $0x5b8] sm:$0xff]
    %v1519 = vld [vmem:[#allocation12 + $0x5c0] sm:$0xff]
    %v1520 = vld [vmem:[#allocation12 + $0x5c8] sm:$0xff]
    %v1521 = vld [vmem:[#allocation12 + $0x5d0] sm:$0xff]
    %v1522 = vld [vmem:[#allocation12 + $0x5d8] sm:$0xff]
    %v1523 = vld [vmem:[#allocation12 + $0x5e0] sm:$0xff]
    %v1524 = vld [vmem:[#allocation12 + $0x5e8] sm:$0xff]
    %v1525 = vld [vmem:[#allocation12 + $0x5f0] sm:$0xff]
    %v1526 = vld [vmem:[#allocation12 + $0x5f8] sm:$0xff]
    %v1527 = vld [vmem:[#allocation12 + $0x600] sm:$0xff]
    %v1528 = vld [vmem:[#allocation12 + $0x608] sm:$0xff]
    %v1529 = vld [vmem:[#allocation12 + $0x610] sm:$0xff]
    %v1530 = vld [vmem:[#allocation12 + $0x618] sm:$0xff]
    %v1531 = vld [vmem:[#allocation12 + $0x620] sm:$0xff]
    %v1532 = vld [vmem:[#allocation12 + $0x628] sm:$0xff]
    %v1533 = vld [vmem:[#allocation12 + $0x630] sm:$0xff]
    %v1534 = vld [vmem:[#allocation12 + $0x638] sm:$0xff]
    %v1535 = vld [vmem:[#allocation12 + $0x640] sm:$0xff]
    %v1536 = vld [vmem:[#allocation12 + $0x648] sm:$0xff]
    %v1537 = vld [vmem:[#allocation12 + $0x650] sm:$0xff]
    %v1538 = vld [vmem:[#allocation12 + $0x658] sm:$0xff]
    %v1539 = vld [vmem:[#allocation12 + $0x660] sm:$0xff]
    %v1540 = vld [vmem:[#allocation12 + $0x668] sm:$0xff]
    %v1541 = vld [vmem:[#allocation12 + $0x670] sm:$0xff]
    %v1542 = vld [vmem:[#allocation12 + $0x678] sm:$0xff]
    %v1543 = vld [vmem:[#allocation12 + $0x680] sm:$0xff]
    %v1544 = vld [vmem:[#allocation12 + $0x688] sm:$0xff]
    %v1545 = vld [vmem:[#allocation12 + $0x690] sm:$0xff]
    %v1546 = vld [vmem:[#allocation12 + $0x698] sm:$0xff]
    %v1547 = vld [vmem:[#allocation12 + $0x6a0] sm:$0xff]
    %v1548 = vld [vmem:[#allocation12 + $0x6a8] sm:$0xff]
    %v1549 = vld [vmem:[#allocation12 + $0x6b0] sm:$0xff]
    %v1550 = vld [vmem:[#allocation12 + $0x6b8] sm:$0xff]
    %v1551 = vld [vmem:[#allocation12 + $0x6c0] sm:$0xff]
    %v1552 = vld [vmem:[#allocation12 + $0x6c8] sm:$0xff]
    %v1553 = vld [vmem:[#allocation12 + $0x6d0] sm:$0xff]
    %v1554 = vld [vmem:[#allocation12 + $0x6d8] sm:$0xff]
    %v1555 = vld [vmem:[#allocation12 + $0x6e0] sm:$0xff]
    %v1556 = vld [vmem:[#allocation12 + $0x6e8] sm:$0xff]
    %v1557 = vld [vmem:[#allocation12 + $0x6f0] sm:$0xff]
    %v1558 = vld [vmem:[#allocation12 + $0x6f8] sm:$0xff]
    %v1559 = vld [vmem:[#allocation12 + $0x700] sm:$0xff]
    %v1560 = vld [vmem:[#allocation12 + $0x708] sm:$0xff]
    %v1561 = vld [vmem:[#allocation12 + $0x710] sm:$0xff]
    %v1562 = vld [vmem:[#allocation12 + $0x718] sm:$0xff]
    %v1563 = vld [vmem:[#allocation12 + $0x720] sm:$0xff]
    %v1564 = vld [vmem:[#allocation12 + $0x728] sm:$0xff]
    %v1565 = vld [vmem:[#allocation12 + $0x730] sm:$0xff]
    %v1566 = vld [vmem:[#allocation12 + $0x738] sm:$0xff]
    %v1567 = vld [vmem:[#allocation12 + $0x740] sm:$0xff]
    %v1568 = vld [vmem:[#allocation12 + $0x748] sm:$0xff]
    %v1569 = vld [vmem:[#allocation12 + $0x750] sm:$0xff]
    %v1570 = vld [vmem:[#allocation12 + $0x758] sm:$0xff]
    %v1571 = vld [vmem:[#allocation12 + $0x760] sm:$0xff]
    %v1572 = vld [vmem:[#allocation12 + $0x768] sm:$0xff]
    %v1573 = vld [vmem:[#allocation12 + $0x770] sm:$0xff]
    %v1574 = vld [vmem:[#allocation12 + $0x778] sm:$0xff]
    %v1575 = vld [vmem:[#allocation12 + $0x780] sm:$0xff]
    %v1576 = vld [vmem:[#allocation12 + $0x788] sm:$0xff]
    %v1577 = vld [vmem:[#allocation12 + $0x790] sm:$0xff]
    %v1578 = vld [vmem:[#allocation12 + $0x798] sm:$0xff]
    %v1579 = vld [vmem:[#allocation12 + $0x7a0] sm:$0xff]
    %v1580 = vld [vmem:[#allocation12 + $0x7a8] sm:$0xff]
    %v1581 = vld [vmem:[#allocation12 + $0x7b0] sm:$0xff]
    %v1582 = vld [vmem:[#allocation12 + $0x7b8] sm:$0xff]
    %v1583 = vld [vmem:[#allocation12 + $0x7c0] sm:$0xff]
    %v1584 = vld [vmem:[#allocation12 + $0x7c8] sm:$0xff]
    %v1585 = vld [vmem:[#allocation12 + $0x7d0] sm:$0xff]
    %v1586 = vld [vmem:[#allocation12 + $0x7d8] sm:$0xff]
    %v1587 = vld [vmem:[#allocation12 + $0x7e0] sm:$0xff]
    %v1588 = vld [vmem:[#allocation12 + $0x7e8] sm:$0xff]
    %v1589 = vld [vmem:[#allocation12 + $0x7f0] sm:$0xff]
    %v1590 = vld [vmem:[#allocation12 + $0x7f8] sm:$0xff]
    %v1591 = vld [vmem:[#allocation12 + $0x800] sm:$0xff]
    %v1592 = vld [vmem:[#allocation12 + $0x808] sm:$0xff]
    %v1593 = vld [vmem:[#allocation12 + $0x810] sm:$0xff]
    %v1594 = vld [vmem:[#allocation12 + $0x818] sm:$0xff]
    %v1595 = vld [vmem:[#allocation12 + $0x820] sm:$0xff]
    %v1596 = vld [vmem:[#allocation12 + $0x828] sm:$0xff]
    %v1597 = vld [vmem:[#allocation12 + $0x830] sm:$0xff]
    %v1598 = vld [vmem:[#allocation12 + $0x838] sm:$0xff]
    %v1599 = vld [vmem:[#allocation12 + $0x840] sm:$0xff]
    %v1600 = vld [vmem:[#allocation12 + $0x848] sm:$0xff]
    %v1601 = vld [vmem:[#allocation12 + $0x850] sm:$0xff]
    %v1602 = vld [vmem:[#allocation12 + $0x858] sm:$0xff]
    %v1603 = vld [vmem:[#allocation12 + $0x860] sm:$0xff]
    %v1604 = vld [vmem:[#allocation12 + $0x868] sm:$0xff]
    %v1605 = vld [vmem:[#allocation12 + $0x870] sm:$0xff]
    %v1606 = vld [vmem:[#allocation12 + $0x878] sm:$0xff]
    %v1607 = vld [vmem:[#allocation12 + $0x880] sm:$0xff]
    %v1608 = vld [vmem:[#allocation12 + $0x888] sm:$0xff]
    %v1609 = vld [vmem:[#allocation12 + $0x890] sm:$0xff]
    %v1610 = vld [vmem:[#allocation12 + $0x898] sm:$0xff]
    %v1611 = vld [vmem:[#allocation12 + $0x8a0] sm:$0xff]
    %v1612 = vld [vmem:[#allocation12 + $0x8a8] sm:$0xff]
    %v1613 = vld [vmem:[#allocation12 + $0x8b0] sm:$0xff]
    %v1614 = vld [vmem:[#allocation12 + $0x8b8] sm:$0xff]
    %v1615 = vld [vmem:[#allocation12 + $0x8c0] sm:$0xff]
    %v1616 = vld [vmem:[#allocation12 + $0x8c8] sm:$0xff]
    %v1617 = vld [vmem:[#allocation12 + $0x8d0] sm:$0xff]
    %v1618 = vld [vmem:[#allocation12 + $0x8d8] sm:$0xff]
    %v1619 = vld [vmem:[#allocation12 + $0x8e0] sm:$0xff]
    %v1620 = vld [vmem:[#allocation12 + $0x8e8] sm:$0xff]
    %v1621 = vld [vmem:[#allocation12 + $0x8f0] sm:$0xff]
    %v1622 = vld [vmem:[#allocation12 + $0x8f8] sm:$0xff]
    %v1623 = vld [vmem:[#allocation12 + $0x900] sm:$0xff]
    %v1624 = vld [vmem:[#allocation12 + $0x908] sm:$0xff]
    %v1625 = vld [vmem:[#allocation12 + $0x910] sm:$0xff]
    %v1626 = vld [vmem:[#allocation12 + $0x918] sm:$0xff]
    %v1627 = vld [vmem:[#allocation12 + $0x920] sm:$0xff]
    %v1628 = vld [vmem:[#allocation12 + $0x928] sm:$0xff]
    %v1629 = vld [vmem:[#allocation12 + $0x930] sm:$0xff]
    %v1630 = vld [vmem:[#allocation12 + $0x938] sm:$0xff]
    %v1631 = vld [vmem:[#allocation12 + $0x940] sm:$0xff]
    %v1632 = vld [vmem:[#allocation12 + $0x948] sm:$0xff]
    %v1633 = vld [vmem:[#allocation12 + $0x950] sm:$0xff]
    %v1634 = vld [vmem:[#allocation12 + $0x958] sm:$0xff]
    %v1635 = vld [vmem:[#allocation12 + $0x960] sm:$0xff]
    %v1636 = vld [vmem:[#allocation12 + $0x968] sm:$0xff]
    %v1637 = vld [vmem:[#allocation12 + $0x970] sm:$0xff]
    %v1638 = vld [vmem:[#allocation12 + $0x978] sm:$0xff]
    %v1639 = vld [vmem:[#allocation12 + $0x980] sm:$0xff]
    %v1640 = vld [vmem:[#allocation12 + $0x988] sm:$0xff]
    %v1641 = vld [vmem:[#allocation12 + $0x990] sm:$0xff]
    %v1642 = vld [vmem:[#allocation12 + $0x998] sm:$0xff]
    %v1643 = vld [vmem:[#allocation12 + $0x9a0] sm:$0xff]
    %v1644 = vld [vmem:[#allocation12 + $0x9a8] sm:$0xff]
    %v1645 = vld [vmem:[#allocation12 + $0x9b0] sm:$0xff]
    %v1646 = vld [vmem:[#allocation12 + $0x9b8] sm:$0xff]
    %v1647 = vld [vmem:[#allocation12 + $0x9c0] sm:$0xff]
    %v1648 = vld [vmem:[#allocation12 + $0x9c8] sm:$0xff]
    %v1649 = vld [vmem:[#allocation12 + $0x9d0] sm:$0xff]
    %v1650 = vld [vmem:[#allocation12 + $0x9d8] sm:$0xff]
    %v1651 = vld [vmem:[#allocation12 + $0x9e0] sm:$0xff]
    %v1652 = vld [vmem:[#allocation12 + $0x9e8] sm:$0xff]
    %v1653 = vld [vmem:[#allocation12 + $0x9f0] sm:$0xff]
    %v1654 = vld [vmem:[#allocation12 + $0x9f8] sm:$0xff]
    %v1655 = vld [vmem:[#allocation12 + $0xa00] sm:$0xff]
    %v1656 = vld [vmem:[#allocation12 + $0xa08] sm:$0xff]
    %v1657 = vld [vmem:[#allocation12 + $0xa10] sm:$0xff]
    %v1658 = vld [vmem:[#allocation12 + $0xa18] sm:$0xff]
    %v1659 = vld [vmem:[#allocation12 + $0xa20] sm:$0xff]
    %v1660 = vld [vmem:[#allocation12 + $0xa28] sm:$0xff]
    %v1661 = vld [vmem:[#allocation12 + $0xa30] sm:$0xff]
    %v1662 = vld [vmem:[#allocation12 + $0xa38] sm:$0xff]
    %v1663 = vld [vmem:[#allocation12 + $0xa40] sm:$0xff]
    %v1664 = vld [vmem:[#allocation12 + $0xa48] sm:$0xff]
    %v1665 = vld [vmem:[#allocation12 + $0xa50] sm:$0xff]
    %v1666 = vld [vmem:[#allocation12 + $0xa58] sm:$0xff]
    %v1667 = vld [vmem:[#allocation12 + $0xa60] sm:$0xff]
    %v1668 = vld [vmem:[#allocation12 + $0xa68] sm:$0xff]
    %v1669 = vld [vmem:[#allocation12 + $0xa70] sm:$0xff]
    %v1670 = vld [vmem:[#allocation12 + $0xa78] sm:$0xff]
    %v1671 = vld [vmem:[#allocation12 + $0xa80] sm:$0xff]
    %v1672 = vld [vmem:[#allocation12 + $0xa88] sm:$0xff]
    %v1673 = vld [vmem:[#allocation12 + $0xa90] sm:$0xff]
    %v1674 = vld [vmem:[#allocation12 + $0xa98] sm:$0xff]
    %v1675 = vld [vmem:[#allocation12 + $0xaa0] sm:$0xff]
    %v1676 = vld [vmem:[#allocation12 + $0xaa8] sm:$0xff]
    %v1677 = vld [vmem:[#allocation12 + $0xab0] sm:$0xff]
    %v1678 = vld [vmem:[#allocation12 + $0xab8] sm:$0xff]
    %v1679 = vld [vmem:[#allocation12 + $0xac0] sm:$0xff]
    %v1680 = vld [vmem:[#allocation12 + $0xac8] sm:$0xff]
    %v1681 = vld [vmem:[#allocation12 + $0xad0] sm:$0xff]
    %v1682 = vld [vmem:[#allocation12 + $0xad8] sm:$0xff]
    %v1683 = vld [vmem:[#allocation12 + $0xae0] sm:$0xff]
    %v1684 = vld [vmem:[#allocation12 + $0xae8] sm:$0xff]
    %v1685 = vld [vmem:[#allocation12 + $0xaf0] sm:$0xff]
    %v1686 = vld [vmem:[#allocation12 + $0xaf8] sm:$0xff]
    %v1687 = vld [vmem:[#allocation12 + $0xb00] sm:$0xff]
    %v1688 = vld [vmem:[#allocation12 + $0xb08] sm:$0xff]
    %v1689 = vld [vmem:[#allocation12 + $0xb10] sm:$0xff]
    %v1690 = vld [vmem:[#allocation12 + $0xb18] sm:$0xff]
    %v1691 = vld [vmem:[#allocation12 + $0xb20] sm:$0xff]
    %v1692 = vld [vmem:[#allocation12 + $0xb28] sm:$0xff]
    %v1693 = vld [vmem:[#allocation12 + $0xb30] sm:$0xff]
    %v1694 = vld [vmem:[#allocation12 + $0xb38] sm:$0xff]
    %v1695 = vld [vmem:[#allocation12 + $0xb40] sm:$0xff]
    %v1696 = vld [vmem:[#allocation12 + $0xb48] sm:$0xff]
    %v1697 = vld [vmem:[#allocation12 + $0xb50] sm:$0xff]
    %v1698 = vld [vmem:[#allocation12 + $0xb58] sm:$0xff]
    %v1699 = vld [vmem:[#allocation12 + $0xb60] sm:$0xff]
    %v1700 = vld [vmem:[#allocation12 + $0xb68] sm:$0xff]
    %v1701 = vld [vmem:[#allocation12 + $0xb70] sm:$0xff]
    %v1702 = vld [vmem:[#allocation12 + $0xb78] sm:$0xff]
    %v1703 = vld [vmem:[#allocation12 + $0xb80] sm:$0xff]
    %v1704 = vld [vmem:[#allocation12 + $0xb88] sm:$0xff]
    %v1705 = vld [vmem:[#allocation12 + $0xb90] sm:$0xff]
    %v1706 = vld [vmem:[#allocation12 + $0xb98] sm:$0xff]
    %v1707 = vld [vmem:[#allocation12 + $0xba0] sm:$0xff]
    %v1708 = vld [vmem:[#allocation12 + $0xba8] sm:$0xff]
    %v1709 = vld [vmem:[#allocation12 + $0xbb0] sm:$0xff]
    %v1710 = vld [vmem:[#allocation12 + $0xbb8] sm:$0xff]
    %v1711 = vld [vmem:[#allocation12 + $0xbc0] sm:$0xff]
    %v1712 = vld [vmem:[#allocation12 + $0xbc8] sm:$0xff]
    %v1713 = vld [vmem:[#allocation12 + $0xbd0] sm:$0xff]
    %v1714 = vld [vmem:[#allocation12 + $0xbd8] sm:$0xff]
    %v1715 = vld [vmem:[#allocation12 + $0xbe0] sm:$0xff]
    %v1716 = vld [vmem:[#allocation12 + $0xbe8] sm:$0xff]
    %v1717 = vld [vmem:[#allocation12 + $0xbf0] sm:$0xff]
    %v1718 = vld [vmem:[#allocation12 + $0xbf8] sm:$0xff]
    %v1719 = vld [vmem:[#allocation12 + $0xc00] sm:$0xff]
    %v1720 = vld [vmem:[#allocation12 + $0xc08] sm:$0xff]
    %v1721 = vld [vmem:[#allocation12 + $0xc10] sm:$0xff]
    %v1722 = vld [vmem:[#allocation12 + $0xc18] sm:$0xff]
    %v1723 = vld [vmem:[#allocation12 + $0xc20] sm:$0xff]
    %v1724 = vld [vmem:[#allocation12 + $0xc28] sm:$0xff]
    %v1725 = vld [vmem:[#allocation12 + $0xc30] sm:$0xff]
    %v1726 = vld [vmem:[#allocation12 + $0xc38] sm:$0xff]
    %v1727 = vld [vmem:[#allocation12 + $0xc40] sm:$0xff]
    %v1728 = vld [vmem:[#allocation12 + $0xc48] sm:$0xff]
    %v1729 = vld [vmem:[#allocation12 + $0xc50] sm:$0xff]
    %v1730 = vld [vmem:[#allocation12 + $0xc58] sm:$0xff]
    %v1731 = vld [vmem:[#allocation12 + $0xc60] sm:$0xff]
    %v1732 = vld [vmem:[#allocation12 + $0xc68] sm:$0xff]
    %v1733 = vld [vmem:[#allocation12 + $0xc70] sm:$0xff]
    %v1734 = vld [vmem:[#allocation12 + $0xc78] sm:$0xff]
    %v1735 = vld [vmem:[#allocation12 + $0xc80] sm:$0xff]
    %v1736 = vld [vmem:[#allocation12 + $0xc88] sm:$0xff]
    %v1737 = vld [vmem:[#allocation12 + $0xc90] sm:$0xff]
    %v1738 = vld [vmem:[#allocation12 + $0xc98] sm:$0xff]
    %v1739 = vld [vmem:[#allocation12 + $0xca0] sm:$0xff]
    %v1740 = vld [vmem:[#allocation12 + $0xca8] sm:$0xff]
    %v1741 = vld [vmem:[#allocation12 + $0xcb0] sm:$0xff]
    %v1742 = vld [vmem:[#allocation12 + $0xcb8] sm:$0xff]
    %v1743 = vld [vmem:[#allocation12 + $0xcc0] sm:$0xff]
    %v1744 = vld [vmem:[#allocation12 + $0xcc8] sm:$0xff]
    %v1745 = vld [vmem:[#allocation12 + $0xcd0] sm:$0xff]
    %v1746 = vld [vmem:[#allocation12 + $0xcd8] sm:$0xff]
    %v1747 = vld [vmem:[#allocation12 + $0xce0] sm:$0xff]
    %v1748 = vld [vmem:[#allocation12 + $0xce8] sm:$0xff]
    %v1749 = vld [vmem:[#allocation12 + $0xcf0] sm:$0xff]
    %v1750 = vld [vmem:[#allocation12 + $0xcf8] sm:$0xff]
    %v1751 = vld [vmem:[#allocation12 + $0xd00] sm:$0xff]
    %v1752 = vld [vmem:[#allocation12 + $0xd08] sm:$0xff]
    %v1753 = vld [vmem:[#allocation12 + $0xd10] sm:$0xff]
    %v1754 = vld [vmem:[#allocation12 + $0xd18] sm:$0xff]
    %v1755 = vld [vmem:[#allocation12 + $0xd20] sm:$0xff]
    %v1756 = vld [vmem:[#allocation12 + $0xd28] sm:$0xff]
    %v1757 = vld [vmem:[#allocation12 + $0xd30] sm:$0xff]
    %v1758 = vld [vmem:[#allocation12 + $0xd38] sm:$0xff]
    %v1759 = vld [vmem:[#allocation12 + $0xd40] sm:$0xff]
    %v1760 = vld [vmem:[#allocation12 + $0xd48] sm:$0xff]
    %v1761 = vld [vmem:[#allocation12 + $0xd50] sm:$0xff]
    %v1762 = vld [vmem:[#allocation12 + $0xd58] sm:$0xff]
    %v1763 = vld [vmem:[#allocation12 + $0xd60] sm:$0xff]
    %v1764 = vld [vmem:[#allocation12 + $0xd68] sm:$0xff]
    %v1765 = vld [vmem:[#allocation12 + $0xd70] sm:$0xff]
    %v1766 = vld [vmem:[#allocation12 + $0xd78] sm:$0xff]
    %v1767 = vld [vmem:[#allocation12 + $0xd80] sm:$0xff]
    %v1768 = vld [vmem:[#allocation12 + $0xd88] sm:$0xff]
    %v1769 = vld [vmem:[#allocation12 + $0xd90] sm:$0xff]
    %v1770 = vld [vmem:[#allocation12 + $0xd98] sm:$0xff]
    %v1771 = vld [vmem:[#allocation12 + $0xda0] sm:$0xff]
    %v1772 = vld [vmem:[#allocation12 + $0xda8] sm:$0xff]
    %v1773 = vld [vmem:[#allocation12 + $0xdb0] sm:$0xff]
    %v1774 = vld [vmem:[#allocation12 + $0xdb8] sm:$0xff]
    %v1775 = vld [vmem:[#allocation12 + $0xdc0] sm:$0xff]
    %v1776 = vld [vmem:[#allocation12 + $0xdc8] sm:$0xff]
    %v1777 = vld [vmem:[#allocation12 + $0xdd0] sm:$0xff]
    %v1778 = vld [vmem:[#allocation12 + $0xdd8] sm:$0xff]
    %v1779 = vld [vmem:[#allocation12 + $0xde0] sm:$0xff]
    %v1780 = vld [vmem:[#allocation12 + $0xde8] sm:$0xff]
    %v1781 = vld [vmem:[#allocation12 + $0xdf0] sm:$0xff]
    %v1782 = vld [vmem:[#allocation12 + $0xdf8] sm:$0xff]
    %v1783 = vld [vmem:[#allocation12 + $0xe00] sm:$0xff]
    %v1784 = vld [vmem:[#allocation12 + $0xe08] sm:$0xff]
    %v1785 = vld [vmem:[#allocation12 + $0xe10] sm:$0xff]
    %v1786 = vld [vmem:[#allocation12 + $0xe18] sm:$0xff]
    %v1787 = vld [vmem:[#allocation12 + $0xe20] sm:$0xff]
    %v1788 = vld [vmem:[#allocation12 + $0xe28] sm:$0xff]
    %v1789 = vld [vmem:[#allocation12 + $0xe30] sm:$0xff]
    %v1790 = vld [vmem:[#allocation12 + $0xe38] sm:$0xff]
    %v1791 = vld [vmem:[#allocation12 + $0xe40] sm:$0xff]
    %v1792 = vld [vmem:[#allocation12 + $0xe48] sm:$0xff]
    %v1793 = vld [vmem:[#allocation12 + $0xe50] sm:$0xff]
    %v1794 = vld [vmem:[#allocation12 + $0xe58] sm:$0xff]
    %v1795 = vld [vmem:[#allocation12 + $0xe60] sm:$0xff]
    %v1796 = vld [vmem:[#allocation12 + $0xe68] sm:$0xff]
    %v1797 = vld [vmem:[#allocation12 + $0xe70] sm:$0xff]
    %v1798 = vld [vmem:[#allocation12 + $0xe78] sm:$0xff]
    %v1799 = vld [vmem:[#allocation12 + $0xe80] sm:$0xff]
    %v1800 = vld [vmem:[#allocation12 + $0xe88] sm:$0xff]
    %v1801 = vld [vmem:[#allocation12 + $0xe90] sm:$0xff]
    %v1802 = vld [vmem:[#allocation12 + $0xe98] sm:$0xff]
    %v1803 = vld [vmem:[#allocation12 + $0xea0] sm:$0xff]
    %v1804 = vld [vmem:[#allocation12 + $0xea8] sm:$0xff]
    %v1805 = vld [vmem:[#allocation12 + $0xeb0] sm:$0xff]
    %v1806 = vld [vmem:[#allocation12 + $0xeb8] sm:$0xff]
    %v1807 = vld [vmem:[#allocation12 + $0xec0] sm:$0xff]
    %v1808 = vld [vmem:[#allocation12 + $0xec8] sm:$0xff]
    %v1809 = vld [vmem:[#allocation12 + $0xed0] sm:$0xff]
    %v1810 = vld [vmem:[#allocation12 + $0xed8] sm:$0xff]
    %v1811 = vld [vmem:[#allocation12 + $0xee0] sm:$0xff]
    %v1812 = vld [vmem:[#allocation12 + $0xee8] sm:$0xff]
    %v1813 = vld [vmem:[#allocation12 + $0xef0] sm:$0xff]
    %v1814 = vld [vmem:[#allocation12 + $0xef8] sm:$0xff]
    %v1815 = vld [vmem:[#allocation12 + $0xf00] sm:$0xff]
    %v1816 = vld [vmem:[#allocation12 + $0xf08] sm:$0xff]
    %v1817 = vld [vmem:[#allocation12 + $0xf10] sm:$0xff]
    %v1818 = vld [vmem:[#allocation12 + $0xf18] sm:$0xff]
    %v1819 = vld [vmem:[#allocation12 + $0xf20] sm:$0xff]
    %v1820 = vld [vmem:[#allocation12 + $0xf28] sm:$0xff]
    %v1821 = vld [vmem:[#allocation12 + $0xf30] sm:$0xff]
    %v1822 = vld [vmem:[#allocation12 + $0xf38] sm:$0xff]
    %v1823 = vld [vmem:[#allocation12 + $0xf40] sm:$0xff]
    %v1824 = vld [vmem:[#allocation12 + $0xf48] sm:$0xff]
    %v1825 = vld [vmem:[#allocation12 + $0xf50] sm:$0xff]
    %v1826 = vld [vmem:[#allocation12 + $0xf58] sm:$0xff]
    %v1827 = vld [vmem:[#allocation12 + $0xf60] sm:$0xff]
    %v1828 = vld [vmem:[#allocation12 + $0xf68] sm:$0xff]
    %v1829 = vld [vmem:[#allocation12 + $0xf70] sm:$0xff]
    %v1830 = vld [vmem:[#allocation12 + $0xf78] sm:$0xff]
    %v1831 = vld [vmem:[#allocation12 + $0xf80] sm:$0xff]
    %v1832 = vld [vmem:[#allocation12 + $0xf88] sm:$0xff]
    %v1833 = vld [vmem:[#allocation12 + $0xf90] sm:$0xff]
    %v1834 = vld [vmem:[#allocation12 + $0xf98] sm:$0xff]
    %v1835 = vld [vmem:[#allocation12 + $0xfa0] sm:$0xff]
    %v1836 = vld [vmem:[#allocation12 + $0xfa8] sm:$0xff]
    %v1837 = vld [vmem:[#allocation12 + $0xfb0] sm:$0xff]
    %v1838 = vld [vmem:[#allocation12 + $0xfb8] sm:$0xff]
    %v1839 = vld [vmem:[#allocation12 + $0xfc0] sm:$0xff]
    %v1840 = vld [vmem:[#allocation12 + $0xfc8] sm:$0xff]
    %v1841 = vld [vmem:[#allocation12 + $0xfd0] sm:$0xff]
    %v1842 = vld [vmem:[#allocation12 + $0xfd8] sm:$0xff]
    %v1843 = vld [vmem:[#allocation12 + $0xfe0] sm:$0xff]
    %v1844 = vld [vmem:[#allocation12 + $0xfe8] sm:$0xff]
    %v1845 = vld [vmem:[#allocation12 + $0xff0] sm:$0xff]
    %v1846 = vld [vmem:[#allocation12 + $0xff8] sm:$0xff]
    %v1847 = vld [vmem:[#allocation14] sm:$0xff]
    %v1849 = vperm.slane %v1847, 0
    %v1850 = vperm.slane %v1847, 1
    %v1851 = vperm.slane %v1847, 2
    %v1852 = vperm.slane %v1847, 3
    %v1853 = vperm.slane %v1847, 4
    %v1854 = vperm.slane %v1847, 5
    %v1855 = vperm.slane %v1847, 6
    %v1856 = vperm.slane %v1847, 7
    %v2377 = vunpack.c.l.b16 %v1335
    %v2378 = vunpack.c.h.b16 %v1335
    %v2379 = vunpack.c.l.b16 %v1336
    %v2380 = vunpack.c.h.b16 %v1336
    %v2381 = vunpack.c.l.b16 %v1337
    %v2382 = vunpack.c.h.b16 %v1337
    %v2383 = vunpack.c.l.b16 %v1338
    %v2384 = vunpack.c.h.b16 %v1338
    %v2385 = vunpack.c.l.b16 %v1339
    %v2386 = vunpack.c.h.b16 %v1339
    %v2387 = vunpack.c.l.b16 %v1340
    %v2388 = vunpack.c.h.b16 %v1340
    %v2389 = vunpack.c.l.b16 %v1341
    %v2390 = vunpack.c.h.b16 %v1341
    %v2391 = vunpack.c.l.b16 %v1342
    %v2392 = vunpack.c.h.b16 %v1342
    %v2393 = vunpack.c.l.b16 %v1343
    %v2394 = vunpack.c.h.b16 %v1343
    %v2395 = vunpack.c.l.b16 %v1344
    %v2396 = vunpack.c.h.b16 %v1344
    %v2397 = vunpack.c.l.b16 %v1345
    %v2398 = vunpack.c.h.b16 %v1345
    %v2399 = vunpack.c.l.b16 %v1346
    %v2400 = vunpack.c.h.b16 %v1346
    %v2401 = vunpack.c.l.b16 %v1347
    %v2402 = vunpack.c.h.b16 %v1347
    %v2403 = vunpack.c.l.b16 %v1348
    %v2404 = vunpack.c.h.b16 %v1348
    %v2405 = vunpack.c.l.b16 %v1349
    %v2406 = vunpack.c.h.b16 %v1349
    %v2407 = vunpack.c.l.b16 %v1350
    %v2408 = vunpack.c.h.b16 %v1350
    %v2409 = vunpack.c.l.b16 %v1351
    %v2410 = vunpack.c.h.b16 %v1351
    %v2411 = vunpack.c.l.b16 %v1352
    %v2412 = vunpack.c.h.b16 %v1352
    %v2413 = vunpack.c.l.b16 %v1353
    %v2414 = vunpack.c.h.b16 %v1353
    %v2415 = vunpack.c.l.b16 %v1354
    %v2416 = vunpack.c.h.b16 %v1354
    %v2417 = vunpack.c.l.b16 %v1355
    %v2418 = vunpack.c.h.b16 %v1355
    %v2419 = vunpack.c.l.b16 %v1356
    %v2420 = vunpack.c.h.b16 %v1356
    %v2421 = vunpack.c.l.b16 %v1357
    %v2422 = vunpack.c.h.b16 %v1357
    %v2423 = vunpack.c.l.b16 %v1358
    %v2424 = vunpack.c.h.b16 %v1358
    %v2425 = vunpack.c.l.b16 %v1359
    %v2426 = vunpack.c.h.b16 %v1359
    %v2427 = vunpack.c.l.b16 %v1360
    %v2428 = vunpack.c.h.b16 %v1360
    %v2429 = vunpack.c.l.b16 %v1361
    %v2430 = vunpack.c.h.b16 %v1361
    %v2431 = vunpack.c.l.b16 %v1362
    %v2432 = vunpack.c.h.b16 %v1362
    %v2433 = vunpack.c.l.b16 %v1363
    %v2434 = vunpack.c.h.b16 %v1363
    %v2435 = vunpack.c.l.b16 %v1364
    %v2436 = vunpack.c.h.b16 %v1364
    %v2437 = vunpack.c.l.b16 %v1365
    %v2438 = vunpack.c.h.b16 %v1365
    %v2439 = vunpack.c.l.b16 %v1366
    %v2440 = vunpack.c.h.b16 %v1366
    %v2441 = vunpack.c.l.b16 %v1367
    %v2442 = vunpack.c.h.b16 %v1367
    %v2443 = vunpack.c.l.b16 %v1368
    %v2444 = vunpack.c.h.b16 %v1368
    %v2445 = vunpack.c.l.b16 %v1369
    %v2446 = vunpack.c.h.b16 %v1369
    %v2447 = vunpack.c.l.b16 %v1370
    %v2448 = vunpack.c.h.b16 %v1370
    %v2449 = vunpack.c.l.b16 %v1371
    %v2450 = vunpack.c.h.b16 %v1371
    %v2451 = vunpack.c.l.b16 %v1372
    %v2452 = vunpack.c.h.b16 %v1372
    %v2453 = vunpack.c.l.b16 %v1373
    %v2454 = vunpack.c.h.b16 %v1373
    %v2455 = vunpack.c.l.b16 %v1374
    %v2456 = vunpack.c.h.b16 %v1374
    %v2457 = vunpack.c.l.b16 %v1375
    %v2458 = vunpack.c.h.b16 %v1375
    %v2459 = vunpack.c.l.b16 %v1376
    %v2460 = vunpack.c.h.b16 %v1376
    %v2461 = vunpack.c.l.b16 %v1377
    %v2462 = vunpack.c.h.b16 %v1377
    %v2463 = vunpack.c.l.b16 %v1378
    %v2464 = vunpack.c.h.b16 %v1378
    %v2465 = vunpack.c.l.b16 %v1379
    %v2466 = vunpack.c.h.b16 %v1379
    %v2467 = vunpack.c.l.b16 %v1380
    %v2468 = vunpack.c.h.b16 %v1380
    %v2469 = vunpack.c.l.b16 %v1381
    %v2470 = vunpack.c.h.b16 %v1381
    %v2471 = vunpack.c.l.b16 %v1382
    %v2472 = vunpack.c.h.b16 %v1382
    %v2473 = vunpack.c.l.b16 %v1383
    %v2474 = vunpack.c.h.b16 %v1383
    %v2475 = vunpack.c.l.b16 %v1384
    %v2476 = vunpack.c.h.b16 %v1384
    %v2477 = vunpack.c.l.b16 %v1385
    %v2478 = vunpack.c.h.b16 %v1385
    %v2479 = vunpack.c.l.b16 %v1386
    %v2480 = vunpack.c.h.b16 %v1386
    %v2481 = vunpack.c.l.b16 %v1387
    %v2482 = vunpack.c.h.b16 %v1387
    %v2483 = vunpack.c.l.b16 %v1388
    %v2484 = vunpack.c.h.b16 %v1388
    %v2485 = vunpack.c.l.b16 %v1389
    %v2486 = vunpack.c.h.b16 %v1389
    %v2487 = vunpack.c.l.b16 %v1390
    %v2488 = vunpack.c.h.b16 %v1390
    %v2489 = vunpack.c.l.b16 %v1391
    %v2490 = vunpack.c.h.b16 %v1391
    %v2491 = vunpack.c.l.b16 %v1392
    %v2492 = vunpack.c.h.b16 %v1392
    %v2493 = vunpack.c.l.b16 %v1393
    %v2494 = vunpack.c.h.b16 %v1393
    %v2495 = vunpack.c.l.b16 %v1394
    %v2496 = vunpack.c.h.b16 %v1394
    %v2497 = vunpack.c.l.b16 %v1395
    %v2498 = vunpack.c.h.b16 %v1395
    %v2499 = vunpack.c.l.b16 %v1396
    %v2500 = vunpack.c.h.b16 %v1396
    %v2501 = vunpack.c.l.b16 %v1397
    %v2502 = vunpack.c.h.b16 %v1397
    %v2503 = vunpack.c.l.b16 %v1398
    %v2504 = vunpack.c.h.b16 %v1398
    %v2505 = vunpack.c.l.b16 %v1399
    %v2506 = vunpack.c.h.b16 %v1399
    %v2507 = vunpack.c.l.b16 %v1400
    %v2508 = vunpack.c.h.b16 %v1400
    %v2509 = vunpack.c.l.b16 %v1401
    %v2510 = vunpack.c.h.b16 %v1401
    %v2511 = vunpack.c.l.b16 %v1402
    %v2512 = vunpack.c.h.b16 %v1402
    %v2513 = vunpack.c.l.b16 %v1403
    %v2514 = vunpack.c.h.b16 %v1403
    %v2515 = vunpack.c.l.b16 %v1404
    %v2516 = vunpack.c.h.b16 %v1404
    %v2517 = vunpack.c.l.b16 %v1405
    %v2518 = vunpack.c.h.b16 %v1405
    %v2519 = vunpack.c.l.b16 %v1406
    %v2520 = vunpack.c.h.b16 %v1406
    %v2521 = vunpack.c.l.b16 %v1407
    %v2522 = vunpack.c.h.b16 %v1407
    %v2523 = vunpack.c.l.b16 %v1408
    %v2524 = vunpack.c.h.b16 %v1408
    %v2525 = vunpack.c.l.b16 %v1409
    %v2526 = vunpack.c.h.b16 %v1409
    %v2527 = vunpack.c.l.b16 %v1410
    %v2528 = vunpack.c.h.b16 %v1410
    %v2529 = vunpack.c.l.b16 %v1411
    %v2530 = vunpack.c.h.b16 %v1411
    %v2531 = vunpack.c.l.b16 %v1412
    %v2532 = vunpack.c.h.b16 %v1412
    %v2533 = vunpack.c.l.b16 %v1413
    %v2534 = vunpack.c.h.b16 %v1413
    %v2535 = vunpack.c.l.b16 %v1414
    %v2536 = vunpack.c.h.b16 %v1414
    %v2537 = vunpack.c.l.b16 %v1415
    %v2538 = vunpack.c.h.b16 %v1415
    %v2539 = vunpack.c.l.b16 %v1416
    %v2540 = vunpack.c.h.b16 %v1416
    %v2541 = vunpack.c.l.b16 %v1417
    %v2542 = vunpack.c.h.b16 %v1417
    %v2543 = vunpack.c.l.b16 %v1418
    %v2544 = vunpack.c.h.b16 %v1418
    %v2545 = vunpack.c.l.b16 %v1419
    %v2546 = vunpack.c.h.b16 %v1419
    %v2547 = vunpack.c.l.b16 %v1420
    %v2548 = vunpack.c.h.b16 %v1420
    %v2549 = vunpack.c.l.b16 %v1421
    %v2550 = vunpack.c.h.b16 %v1421
    %v2551 = vunpack.c.l.b16 %v1422
    %v2552 = vunpack.c.h.b16 %v1422
    %v2553 = vunpack.c.l.b16 %v1423
    %v2554 = vunpack.c.h.b16 %v1423
    %v2555 = vunpack.c.l.b16 %v1424
    %v2556 = vunpack.c.h.b16 %v1424
    %v2557 = vunpack.c.l.b16 %v1425
    %v2558 = vunpack.c.h.b16 %v1425
    %v2559 = vunpack.c.l.b16 %v1426
    %v2560 = vunpack.c.h.b16 %v1426
    %v2561 = vunpack.c.l.b16 %v1427
    %v2562 = vunpack.c.h.b16 %v1427
    %v2563 = vunpack.c.l.b16 %v1428
    %v2564 = vunpack.c.h.b16 %v1428
    %v2565 = vunpack.c.l.b16 %v1429
    %v2566 = vunpack.c.h.b16 %v1429
    %v2567 = vunpack.c.l.b16 %v1430
    %v2568 = vunpack.c.h.b16 %v1430
    %v2569 = vunpack.c.l.b16 %v1431
    %v2570 = vunpack.c.h.b16 %v1431
    %v2571 = vunpack.c.l.b16 %v1432
    %v2572 = vunpack.c.h.b16 %v1432
    %v2573 = vunpack.c.l.b16 %v1433
    %v2574 = vunpack.c.h.b16 %v1433
    %v2575 = vunpack.c.l.b16 %v1434
    %v2576 = vunpack.c.h.b16 %v1434
    %v2577 = vunpack.c.l.b16 %v1435
    %v2578 = vunpack.c.h.b16 %v1435
    %v2579 = vunpack.c.l.b16 %v1436
    %v2580 = vunpack.c.h.b16 %v1436
    %v2581 = vunpack.c.l.b16 %v1437
    %v2582 = vunpack.c.h.b16 %v1437
    %v2583 = vunpack.c.l.b16 %v1438
    %v2584 = vunpack.c.h.b16 %v1438
    %v2585 = vunpack.c.l.b16 %v1439
    %v2586 = vunpack.c.h.b16 %v1439
    %v2587 = vunpack.c.l.b16 %v1440
    %v2588 = vunpack.c.h.b16 %v1440
    %v2589 = vunpack.c.l.b16 %v1441
    %v2590 = vunpack.c.h.b16 %v1441
    %v2591 = vunpack.c.l.b16 %v1442
    %v2592 = vunpack.c.h.b16 %v1442
    %v2593 = vunpack.c.l.b16 %v1443
    %v2594 = vunpack.c.h.b16 %v1443
    %v2595 = vunpack.c.l.b16 %v1444
    %v2596 = vunpack.c.h.b16 %v1444
    %v2597 = vunpack.c.l.b16 %v1445
    %v2598 = vunpack.c.h.b16 %v1445
    %v2599 = vunpack.c.l.b16 %v1446
    %v2600 = vunpack.c.h.b16 %v1446
    %v2601 = vunpack.c.l.b16 %v1447
    %v2602 = vunpack.c.h.b16 %v1447
    %v2603 = vunpack.c.l.b16 %v1448
    %v2604 = vunpack.c.h.b16 %v1448
    %v2605 = vunpack.c.l.b16 %v1449
    %v2606 = vunpack.c.h.b16 %v1449
    %v2607 = vunpack.c.l.b16 %v1450
    %v2608 = vunpack.c.h.b16 %v1450
    %v2609 = vunpack.c.l.b16 %v1451
    %v2610 = vunpack.c.h.b16 %v1451
    %v2611 = vunpack.c.l.b16 %v1452
    %v2612 = vunpack.c.h.b16 %v1452
    %v2613 = vunpack.c.l.b16 %v1453
    %v2614 = vunpack.c.h.b16 %v1453
    %v2615 = vunpack.c.l.b16 %v1454
    %v2616 = vunpack.c.h.b16 %v1454
    %v2617 = vunpack.c.l.b16 %v1455
    %v2618 = vunpack.c.h.b16 %v1455
    %v2619 = vunpack.c.l.b16 %v1456
    %v2620 = vunpack.c.h.b16 %v1456
    %v2621 = vunpack.c.l.b16 %v1457
    %v2622 = vunpack.c.h.b16 %v1457
    %v2623 = vunpack.c.l.b16 %v1458
    %v2624 = vunpack.c.h.b16 %v1458
    %v2625 = vunpack.c.l.b16 %v1459
    %v2626 = vunpack.c.h.b16 %v1459
    %v2627 = vunpack.c.l.b16 %v1460
    %v2628 = vunpack.c.h.b16 %v1460
    %v2629 = vunpack.c.l.b16 %v1461
    %v2630 = vunpack.c.h.b16 %v1461
    %v2631 = vunpack.c.l.b16 %v1462
    %v2632 = vunpack.c.h.b16 %v1462
    %v2633 = vunpack.c.l.b16 %v1463
    %v2634 = vunpack.c.h.b16 %v1463
    %v2635 = vunpack.c.l.b16 %v1464
    %v2636 = vunpack.c.h.b16 %v1464
    %v2637 = vunpack.c.l.b16 %v1465
    %v2638 = vunpack.c.h.b16 %v1465
    %v2639 = vunpack.c.l.b16 %v1466
    %v2640 = vunpack.c.h.b16 %v1466
    %v2641 = vunpack.c.l.b16 %v1467
    %v2642 = vunpack.c.h.b16 %v1467
    %v2643 = vunpack.c.l.b16 %v1468
    %v2644 = vunpack.c.h.b16 %v1468
    %v2645 = vunpack.c.l.b16 %v1469
    %v2646 = vunpack.c.h.b16 %v1469
    %v2647 = vunpack.c.l.b16 %v1470
    %v2648 = vunpack.c.h.b16 %v1470
    %v2649 = vunpack.c.l.b16 %v1471
    %v2650 = vunpack.c.h.b16 %v1471
    %v2651 = vunpack.c.l.b16 %v1472
    %v2652 = vunpack.c.h.b16 %v1472
    %v2653 = vunpack.c.l.b16 %v1473
    %v2654 = vunpack.c.h.b16 %v1473
    %v2655 = vunpack.c.l.b16 %v1474
    %v2656 = vunpack.c.h.b16 %v1474
    %v2657 = vunpack.c.l.b16 %v1475
    %v2658 = vunpack.c.h.b16 %v1475
    %v2659 = vunpack.c.l.b16 %v1476
    %v2660 = vunpack.c.h.b16 %v1476
    %v2661 = vunpack.c.l.b16 %v1477
    %v2662 = vunpack.c.h.b16 %v1477
    %v2663 = vunpack.c.l.b16 %v1478
    %v2664 = vunpack.c.h.b16 %v1478
    %v2665 = vunpack.c.l.b16 %v1479
    %v2666 = vunpack.c.h.b16 %v1479
    %v2667 = vunpack.c.l.b16 %v1480
    %v2668 = vunpack.c.h.b16 %v1480
    %v2669 = vunpack.c.l.b16 %v1481
    %v2670 = vunpack.c.h.b16 %v1481
    %v2671 = vunpack.c.l.b16 %v1482
    %v2672 = vunpack.c.h.b16 %v1482
    %v2673 = vunpack.c.l.b16 %v1483
    %v2674 = vunpack.c.h.b16 %v1483
    %v2675 = vunpack.c.l.b16 %v1484
    %v2676 = vunpack.c.h.b16 %v1484
    %v2677 = vunpack.c.l.b16 %v1485
    %v2678 = vunpack.c.h.b16 %v1485
    %v2679 = vunpack.c.l.b16 %v1486
    %v2680 = vunpack.c.h.b16 %v1486
    %v2681 = vunpack.c.l.b16 %v1487
    %v2682 = vunpack.c.h.b16 %v1487
    %v2683 = vunpack.c.l.b16 %v1488
    %v2684 = vunpack.c.h.b16 %v1488
    %v2685 = vunpack.c.l.b16 %v1489
    %v2686 = vunpack.c.h.b16 %v1489
    %v2687 = vunpack.c.l.b16 %v1490
    %v2688 = vunpack.c.h.b16 %v1490
    %v2689 = vunpack.c.l.b16 %v1491
    %v2690 = vunpack.c.h.b16 %v1491
    %v2691 = vunpack.c.l.b16 %v1492
    %v2692 = vunpack.c.h.b16 %v1492
    %v2693 = vunpack.c.l.b16 %v1493
    %v2694 = vunpack.c.h.b16 %v1493
    %v2695 = vunpack.c.l.b16 %v1494
    %v2696 = vunpack.c.h.b16 %v1494
    %v2697 = vunpack.c.l.b16 %v1495
    %v2698 = vunpack.c.h.b16 %v1495
    %v2699 = vunpack.c.l.b16 %v1496
    %v2700 = vunpack.c.h.b16 %v1496
    %v2701 = vunpack.c.l.b16 %v1497
    %v2702 = vunpack.c.h.b16 %v1497
    %v2703 = vunpack.c.l.b16 %v1498
    %v2704 = vunpack.c.h.b16 %v1498
    %v2705 = vunpack.c.l.b16 %v1499
    %v2706 = vunpack.c.h.b16 %v1499
    %v2707 = vunpack.c.l.b16 %v1500
    %v2708 = vunpack.c.h.b16 %v1500
    %v2709 = vunpack.c.l.b16 %v1501
    %v2710 = vunpack.c.h.b16 %v1501
    %v2711 = vunpack.c.l.b16 %v1502
    %v2712 = vunpack.c.h.b16 %v1502
    %v2713 = vunpack.c.l.b16 %v1503
    %v2714 = vunpack.c.h.b16 %v1503
    %v2715 = vunpack.c.l.b16 %v1504
    %v2716 = vunpack.c.h.b16 %v1504
    %v2717 = vunpack.c.l.b16 %v1505
    %v2718 = vunpack.c.h.b16 %v1505
    %v2719 = vunpack.c.l.b16 %v1506
    %v2720 = vunpack.c.h.b16 %v1506
    %v2721 = vunpack.c.l.b16 %v1507
    %v2722 = vunpack.c.h.b16 %v1507
    %v2723 = vunpack.c.l.b16 %v1508
    %v2724 = vunpack.c.h.b16 %v1508
    %v2725 = vunpack.c.l.b16 %v1509
    %v2726 = vunpack.c.h.b16 %v1509
    %v2727 = vunpack.c.l.b16 %v1510
    %v2728 = vunpack.c.h.b16 %v1510
    %v2729 = vunpack.c.l.b16 %v1511
    %v2730 = vunpack.c.h.b16 %v1511
    %v2731 = vunpack.c.l.b16 %v1512
    %v2732 = vunpack.c.h.b16 %v1512
    %v2733 = vunpack.c.l.b16 %v1513
    %v2734 = vunpack.c.h.b16 %v1513
    %v2735 = vunpack.c.l.b16 %v1514
    %v2736 = vunpack.c.h.b16 %v1514
    %v2737 = vunpack.c.l.b16 %v1515
    %v2738 = vunpack.c.h.b16 %v1515
    %v2739 = vunpack.c.l.b16 %v1516
    %v2740 = vunpack.c.h.b16 %v1516
    %v2741 = vunpack.c.l.b16 %v1517
    %v2742 = vunpack.c.h.b16 %v1517
    %v2743 = vunpack.c.l.b16 %v1518
    %v2744 = vunpack.c.h.b16 %v1518
    %v2745 = vunpack.c.l.b16 %v1519
    %v2746 = vunpack.c.h.b16 %v1519
    %v2747 = vunpack.c.l.b16 %v1520
    %v2748 = vunpack.c.h.b16 %v1520
    %v2749 = vunpack.c.l.b16 %v1521
    %v2750 = vunpack.c.h.b16 %v1521
    %v2751 = vunpack.c.l.b16 %v1522
    %v2752 = vunpack.c.h.b16 %v1522
    %v2753 = vunpack.c.l.b16 %v1523
    %v2754 = vunpack.c.h.b16 %v1523
    %v2755 = vunpack.c.l.b16 %v1524
    %v2756 = vunpack.c.h.b16 %v1524
    %v2757 = vunpack.c.l.b16 %v1525
    %v2758 = vunpack.c.h.b16 %v1525
    %v2759 = vunpack.c.l.b16 %v1526
    %v2760 = vunpack.c.h.b16 %v1526
    %v2761 = vunpack.c.l.b16 %v1527
    %v2762 = vunpack.c.h.b16 %v1527
    %v2763 = vunpack.c.l.b16 %v1528
    %v2764 = vunpack.c.h.b16 %v1528
    %v2765 = vunpack.c.l.b16 %v1529
    %v2766 = vunpack.c.h.b16 %v1529
    %v2767 = vunpack.c.l.b16 %v1530
    %v2768 = vunpack.c.h.b16 %v1530
    %v2769 = vunpack.c.l.b16 %v1531
    %v2770 = vunpack.c.h.b16 %v1531
    %v2771 = vunpack.c.l.b16 %v1532
    %v2772 = vunpack.c.h.b16 %v1532
    %v2773 = vunpack.c.l.b16 %v1533
    %v2774 = vunpack.c.h.b16 %v1533
    %v2775 = vunpack.c.l.b16 %v1534
    %v2776 = vunpack.c.h.b16 %v1534
    %v2777 = vunpack.c.l.b16 %v1535
    %v2778 = vunpack.c.h.b16 %v1535
    %v2779 = vunpack.c.l.b16 %v1536
    %v2780 = vunpack.c.h.b16 %v1536
    %v2781 = vunpack.c.l.b16 %v1537
    %v2782 = vunpack.c.h.b16 %v1537
    %v2783 = vunpack.c.l.b16 %v1538
    %v2784 = vunpack.c.h.b16 %v1538
    %v2785 = vunpack.c.l.b16 %v1539
    %v2786 = vunpack.c.h.b16 %v1539
    %v2787 = vunpack.c.l.b16 %v1540
    %v2788 = vunpack.c.h.b16 %v1540
    %v2789 = vunpack.c.l.b16 %v1541
    %v2790 = vunpack.c.h.b16 %v1541
    %v2791 = vunpack.c.l.b16 %v1542
    %v2792 = vunpack.c.h.b16 %v1542
    %v2793 = vunpack.c.l.b16 %v1543
    %v2794 = vunpack.c.h.b16 %v1543
    %v2795 = vunpack.c.l.b16 %v1544
    %v2796 = vunpack.c.h.b16 %v1544
    %v2797 = vunpack.c.l.b16 %v1545
    %v2798 = vunpack.c.h.b16 %v1545
    %v2799 = vunpack.c.l.b16 %v1546
    %v2800 = vunpack.c.h.b16 %v1546
    %v2801 = vunpack.c.l.b16 %v1547
    %v2802 = vunpack.c.h.b16 %v1547
    %v2803 = vunpack.c.l.b16 %v1548
    %v2804 = vunpack.c.h.b16 %v1548
    %v2805 = vunpack.c.l.b16 %v1549
    %v2806 = vunpack.c.h.b16 %v1549
    %v2807 = vunpack.c.l.b16 %v1550
    %v2808 = vunpack.c.h.b16 %v1550
    %v2809 = vunpack.c.l.b16 %v1551
    %v2810 = vunpack.c.h.b16 %v1551
    %v2811 = vunpack.c.l.b16 %v1552
    %v2812 = vunpack.c.h.b16 %v1552
    %v2813 = vunpack.c.l.b16 %v1553
    %v2814 = vunpack.c.h.b16 %v1553
    %v2815 = vunpack.c.l.b16 %v1554
    %v2816 = vunpack.c.h.b16 %v1554
    %v2817 = vunpack.c.l.b16 %v1555
    %v2818 = vunpack.c.h.b16 %v1555
    %v2819 = vunpack.c.l.b16 %v1556
    %v2820 = vunpack.c.h.b16 %v1556
    %v2821 = vunpack.c.l.b16 %v1557
    %v2822 = vunpack.c.h.b16 %v1557
    %v2823 = vunpack.c.l.b16 %v1558
    %v2824 = vunpack.c.h.b16 %v1558
    %v2825 = vunpack.c.l.b16 %v1559
    %v2826 = vunpack.c.h.b16 %v1559
    %v2827 = vunpack.c.l.b16 %v1560
    %v2828 = vunpack.c.h.b16 %v1560
    %v2829 = vunpack.c.l.b16 %v1561
    %v2830 = vunpack.c.h.b16 %v1561
    %v2831 = vunpack.c.l.b16 %v1562
    %v2832 = vunpack.c.h.b16 %v1562
    %v2833 = vunpack.c.l.b16 %v1563
    %v2834 = vunpack.c.h.b16 %v1563
    %v2835 = vunpack.c.l.b16 %v1564
    %v2836 = vunpack.c.h.b16 %v1564
    %v2837 = vunpack.c.l.b16 %v1565
    %v2838 = vunpack.c.h.b16 %v1565
    %v2839 = vunpack.c.l.b16 %v1566
    %v2840 = vunpack.c.h.b16 %v1566
    %v2841 = vunpack.c.l.b16 %v1567
    %v2842 = vunpack.c.h.b16 %v1567
    %v2843 = vunpack.c.l.b16 %v1568
    %v2844 = vunpack.c.h.b16 %v1568
    %v2845 = vunpack.c.l.b16 %v1569
    %v2846 = vunpack.c.h.b16 %v1569
    %v2847 = vunpack.c.l.b16 %v1570
    %v2848 = vunpack.c.h.b16 %v1570
    %v2849 = vunpack.c.l.b16 %v1571
    %v2850 = vunpack.c.h.b16 %v1571
    %v2851 = vunpack.c.l.b16 %v1572
    %v2852 = vunpack.c.h.b16 %v1572
    %v2853 = vunpack.c.l.b16 %v1573
    %v2854 = vunpack.c.h.b16 %v1573
    %v2855 = vunpack.c.l.b16 %v1574
    %v2856 = vunpack.c.h.b16 %v1574
    %v2857 = vunpack.c.l.b16 %v1575
    %v2858 = vunpack.c.h.b16 %v1575
    %v2859 = vunpack.c.l.b16 %v1576
    %v2860 = vunpack.c.h.b16 %v1576
    %v2861 = vunpack.c.l.b16 %v1577
    %v2862 = vunpack.c.h.b16 %v1577
    %v2863 = vunpack.c.l.b16 %v1578
    %v2864 = vunpack.c.h.b16 %v1578
    %v2865 = vunpack.c.l.b16 %v1579
    %v2866 = vunpack.c.h.b16 %v1579
    %v2867 = vunpack.c.l.b16 %v1580
    %v2868 = vunpack.c.h.b16 %v1580
    %v2869 = vunpack.c.l.b16 %v1581
    %v2870 = vunpack.c.h.b16 %v1581
    %v2871 = vunpack.c.l.b16 %v1582
    %v2872 = vunpack.c.h.b16 %v1582
    %v2873 = vunpack.c.l.b16 %v1583
    %v2874 = vunpack.c.h.b16 %v1583
    %v2875 = vunpack.c.l.b16 %v1584
    %v2876 = vunpack.c.h.b16 %v1584
    %v2877 = vunpack.c.l.b16 %v1585
    %v2878 = vunpack.c.h.b16 %v1585
    %v2879 = vunpack.c.l.b16 %v1586
    %v2880 = vunpack.c.h.b16 %v1586
    %v2881 = vunpack.c.l.b16 %v1587
    %v2882 = vunpack.c.h.b16 %v1587
    %v2883 = vunpack.c.l.b16 %v1588
    %v2884 = vunpack.c.h.b16 %v1588
    %v2885 = vunpack.c.l.b16 %v1589
    %v2886 = vunpack.c.h.b16 %v1589
    %v2887 = vunpack.c.l.b16 %v1590
    %v2888 = vunpack.c.h.b16 %v1590
    %v2889 = vunpack.c.l.b16 %v1591
    %v2890 = vunpack.c.h.b16 %v1591
    %v2891 = vunpack.c.l.b16 %v1592
    %v2892 = vunpack.c.h.b16 %v1592
    %v2893 = vunpack.c.l.b16 %v1593
    %v2894 = vunpack.c.h.b16 %v1593
    %v2895 = vunpack.c.l.b16 %v1594
    %v2896 = vunpack.c.h.b16 %v1594
    %v2897 = vunpack.c.l.b16 %v1595
    %v2898 = vunpack.c.h.b16 %v1595
    %v2899 = vunpack.c.l.b16 %v1596
    %v2900 = vunpack.c.h.b16 %v1596
    %v2901 = vunpack.c.l.b16 %v1597
    %v2902 = vunpack.c.h.b16 %v1597
    %v2903 = vunpack.c.l.b16 %v1598
    %v2904 = vunpack.c.h.b16 %v1598
    %v2905 = vunpack.c.l.b16 %v1599
    %v2906 = vunpack.c.h.b16 %v1599
    %v2907 = vunpack.c.l.b16 %v1600
    %v2908 = vunpack.c.h.b16 %v1600
    %v2909 = vunpack.c.l.b16 %v1601
    %v2910 = vunpack.c.h.b16 %v1601
    %v2911 = vunpack.c.l.b16 %v1602
    %v2912 = vunpack.c.h.b16 %v1602
    %v2913 = vunpack.c.l.b16 %v1603
    %v2914 = vunpack.c.h.b16 %v1603
    %v2915 = vunpack.c.l.b16 %v1604
    %v2916 = vunpack.c.h.b16 %v1604
    %v2917 = vunpack.c.l.b16 %v1605
    %v2918 = vunpack.c.h.b16 %v1605
    %v2919 = vunpack.c.l.b16 %v1606
    %v2920 = vunpack.c.h.b16 %v1606
    %v2921 = vunpack.c.l.b16 %v1607
    %v2922 = vunpack.c.h.b16 %v1607
    %v2923 = vunpack.c.l.b16 %v1608
    %v2924 = vunpack.c.h.b16 %v1608
    %v2925 = vunpack.c.l.b16 %v1609
    %v2926 = vunpack.c.h.b16 %v1609
    %v2927 = vunpack.c.l.b16 %v1610
    %v2928 = vunpack.c.h.b16 %v1610
    %v2929 = vunpack.c.l.b16 %v1611
    %v2930 = vunpack.c.h.b16 %v1611
    %v2931 = vunpack.c.l.b16 %v1612
    %v2932 = vunpack.c.h.b16 %v1612
    %v2933 = vunpack.c.l.b16 %v1613
    %v2934 = vunpack.c.h.b16 %v1613
    %v2935 = vunpack.c.l.b16 %v1614
    %v2936 = vunpack.c.h.b16 %v1614
    %v2937 = vunpack.c.l.b16 %v1615
    %v2938 = vunpack.c.h.b16 %v1615
    %v2939 = vunpack.c.l.b16 %v1616
    %v2940 = vunpack.c.h.b16 %v1616
    %v2941 = vunpack.c.l.b16 %v1617
    %v2942 = vunpack.c.h.b16 %v1617
    %v2943 = vunpack.c.l.b16 %v1618
    %v2944 = vunpack.c.h.b16 %v1618
    %v2945 = vunpack.c.l.b16 %v1619
    %v2946 = vunpack.c.h.b16 %v1619
    %v2947 = vunpack.c.l.b16 %v1620
    %v2948 = vunpack.c.h.b16 %v1620
    %v2949 = vunpack.c.l.b16 %v1621
    %v2950 = vunpack.c.h.b16 %v1621
    %v2951 = vunpack.c.l.b16 %v1622
    %v2952 = vunpack.c.h.b16 %v1622
    %v2953 = vunpack.c.l.b16 %v1623
    %v2954 = vunpack.c.h.b16 %v1623
    %v2955 = vunpack.c.l.b16 %v1624
    %v2956 = vunpack.c.h.b16 %v1624
    %v2957 = vunpack.c.l.b16 %v1625
    %v2958 = vunpack.c.h.b16 %v1625
    %v2959 = vunpack.c.l.b16 %v1626
    %v2960 = vunpack.c.h.b16 %v1626
    %v2961 = vunpack.c.l.b16 %v1627
    %v2962 = vunpack.c.h.b16 %v1627
    %v2963 = vunpack.c.l.b16 %v1628
    %v2964 = vunpack.c.h.b16 %v1628
    %v2965 = vunpack.c.l.b16 %v1629
    %v2966 = vunpack.c.h.b16 %v1629
    %v2967 = vunpack.c.l.b16 %v1630
    %v2968 = vunpack.c.h.b16 %v1630
    %v2969 = vunpack.c.l.b16 %v1631
    %v2970 = vunpack.c.h.b16 %v1631
    %v2971 = vunpack.c.l.b16 %v1632
    %v2972 = vunpack.c.h.b16 %v1632
    %v2973 = vunpack.c.l.b16 %v1633
    %v2974 = vunpack.c.h.b16 %v1633
    %v2975 = vunpack.c.l.b16 %v1634
    %v2976 = vunpack.c.h.b16 %v1634
    %v2977 = vunpack.c.l.b16 %v1635
    %v2978 = vunpack.c.h.b16 %v1635
    %v2979 = vunpack.c.l.b16 %v1636
    %v2980 = vunpack.c.h.b16 %v1636
    %v2981 = vunpack.c.l.b16 %v1637
    %v2982 = vunpack.c.h.b16 %v1637
    %v2983 = vunpack.c.l.b16 %v1638
    %v2984 = vunpack.c.h.b16 %v1638
    %v2985 = vunpack.c.l.b16 %v1639
    %v2986 = vunpack.c.h.b16 %v1639
    %v2987 = vunpack.c.l.b16 %v1640
    %v2988 = vunpack.c.h.b16 %v1640
    %v2989 = vunpack.c.l.b16 %v1641
    %v2990 = vunpack.c.h.b16 %v1641
    %v2991 = vunpack.c.l.b16 %v1642
    %v2992 = vunpack.c.h.b16 %v1642
    %v2993 = vunpack.c.l.b16 %v1643
    %v2994 = vunpack.c.h.b16 %v1643
    %v2995 = vunpack.c.l.b16 %v1644
    %v2996 = vunpack.c.h.b16 %v1644
    %v2997 = vunpack.c.l.b16 %v1645
    %v2998 = vunpack.c.h.b16 %v1645
    %v2999 = vunpack.c.l.b16 %v1646
    %v3000 = vunpack.c.h.b16 %v1646
    %v3001 = vunpack.c.l.b16 %v1647
    %v3002 = vunpack.c.h.b16 %v1647
    %v3003 = vunpack.c.l.b16 %v1648
    %v3004 = vunpack.c.h.b16 %v1648
    %v3005 = vunpack.c.l.b16 %v1649
    %v3006 = vunpack.c.h.b16 %v1649
    %v3007 = vunpack.c.l.b16 %v1650
    %v3008 = vunpack.c.h.b16 %v1650
    %v3009 = vunpack.c.l.b16 %v1651
    %v3010 = vunpack.c.h.b16 %v1651
    %v3011 = vunpack.c.l.b16 %v1652
    %v3012 = vunpack.c.h.b16 %v1652
    %v3013 = vunpack.c.l.b16 %v1653
    %v3014 = vunpack.c.h.b16 %v1653
    %v3015 = vunpack.c.l.b16 %v1654
    %v3016 = vunpack.c.h.b16 %v1654
    %v3017 = vunpack.c.l.b16 %v1655
    %v3018 = vunpack.c.h.b16 %v1655
    %v3019 = vunpack.c.l.b16 %v1656
    %v3020 = vunpack.c.h.b16 %v1656
    %v3021 = vunpack.c.l.b16 %v1657
    %v3022 = vunpack.c.h.b16 %v1657
    %v3023 = vunpack.c.l.b16 %v1658
    %v3024 = vunpack.c.h.b16 %v1658
    %v3025 = vunpack.c.l.b16 %v1659
    %v3026 = vunpack.c.h.b16 %v1659
    %v3027 = vunpack.c.l.b16 %v1660
    %v3028 = vunpack.c.h.b16 %v1660
    %v3029 = vunpack.c.l.b16 %v1661
    %v3030 = vunpack.c.h.b16 %v1661
    %v3031 = vunpack.c.l.b16 %v1662
    %v3032 = vunpack.c.h.b16 %v1662
    %v3033 = vunpack.c.l.b16 %v1663
    %v3034 = vunpack.c.h.b16 %v1663
    %v3035 = vunpack.c.l.b16 %v1664
    %v3036 = vunpack.c.h.b16 %v1664
    %v3037 = vunpack.c.l.b16 %v1665
    %v3038 = vunpack.c.h.b16 %v1665
    %v3039 = vunpack.c.l.b16 %v1666
    %v3040 = vunpack.c.h.b16 %v1666
    %v3041 = vunpack.c.l.b16 %v1667
    %v3042 = vunpack.c.h.b16 %v1667
    %v3043 = vunpack.c.l.b16 %v1668
    %v3044 = vunpack.c.h.b16 %v1668
    %v3045 = vunpack.c.l.b16 %v1669
    %v3046 = vunpack.c.h.b16 %v1669
    %v3047 = vunpack.c.l.b16 %v1670
    %v3048 = vunpack.c.h.b16 %v1670
    %v3049 = vunpack.c.l.b16 %v1671
    %v3050 = vunpack.c.h.b16 %v1671
    %v3051 = vunpack.c.l.b16 %v1672
    %v3052 = vunpack.c.h.b16 %v1672
    %v3053 = vunpack.c.l.b16 %v1673
    %v3054 = vunpack.c.h.b16 %v1673
    %v3055 = vunpack.c.l.b16 %v1674
    %v3056 = vunpack.c.h.b16 %v1674
    %v3057 = vunpack.c.l.b16 %v1675
    %v3058 = vunpack.c.h.b16 %v1675
    %v3059 = vunpack.c.l.b16 %v1676
    %v3060 = vunpack.c.h.b16 %v1676
    %v3061 = vunpack.c.l.b16 %v1677
    %v3062 = vunpack.c.h.b16 %v1677
    %v3063 = vunpack.c.l.b16 %v1678
    %v3064 = vunpack.c.h.b16 %v1678
    %v3065 = vunpack.c.l.b16 %v1679
    %v3066 = vunpack.c.h.b16 %v1679
    %v3067 = vunpack.c.l.b16 %v1680
    %v3068 = vunpack.c.h.b16 %v1680
    %v3069 = vunpack.c.l.b16 %v1681
    %v3070 = vunpack.c.h.b16 %v1681
    %v3071 = vunpack.c.l.b16 %v1682
    %v3072 = vunpack.c.h.b16 %v1682
    %v3073 = vunpack.c.l.b16 %v1683
    %v3074 = vunpack.c.h.b16 %v1683
    %v3075 = vunpack.c.l.b16 %v1684
    %v3076 = vunpack.c.h.b16 %v1684
    %v3077 = vunpack.c.l.b16 %v1685
    %v3078 = vunpack.c.h.b16 %v1685
    %v3079 = vunpack.c.l.b16 %v1686
    %v3080 = vunpack.c.h.b16 %v1686
    %v3081 = vunpack.c.l.b16 %v1687
    %v3082 = vunpack.c.h.b16 %v1687
    %v3083 = vunpack.c.l.b16 %v1688
    %v3084 = vunpack.c.h.b16 %v1688
    %v3085 = vunpack.c.l.b16 %v1689
    %v3086 = vunpack.c.h.b16 %v1689
    %v3087 = vunpack.c.l.b16 %v1690
    %v3088 = vunpack.c.h.b16 %v1690
    %v3089 = vunpack.c.l.b16 %v1691
    %v3090 = vunpack.c.h.b16 %v1691
    %v3091 = vunpack.c.l.b16 %v1692
    %v3092 = vunpack.c.h.b16 %v1692
    %v3093 = vunpack.c.l.b16 %v1693
    %v3094 = vunpack.c.h.b16 %v1693
    %v3095 = vunpack.c.l.b16 %v1694
    %v3096 = vunpack.c.h.b16 %v1694
    %v3097 = vunpack.c.l.b16 %v1695
    %v3098 = vunpack.c.h.b16 %v1695
    %v3099 = vunpack.c.l.b16 %v1696
    %v3100 = vunpack.c.h.b16 %v1696
    %v3101 = vunpack.c.l.b16 %v1697
    %v3102 = vunpack.c.h.b16 %v1697
    %v3103 = vunpack.c.l.b16 %v1698
    %v3104 = vunpack.c.h.b16 %v1698
    %v3105 = vunpack.c.l.b16 %v1699
    %v3106 = vunpack.c.h.b16 %v1699
    %v3107 = vunpack.c.l.b16 %v1700
    %v3108 = vunpack.c.h.b16 %v1700
    %v3109 = vunpack.c.l.b16 %v1701
    %v3110 = vunpack.c.h.b16 %v1701
    %v3111 = vunpack.c.l.b16 %v1702
    %v3112 = vunpack.c.h.b16 %v1702
    %v3113 = vunpack.c.l.b16 %v1703
    %v3114 = vunpack.c.h.b16 %v1703
    %v3115 = vunpack.c.l.b16 %v1704
    %v3116 = vunpack.c.h.b16 %v1704
    %v3117 = vunpack.c.l.b16 %v1705
    %v3118 = vunpack.c.h.b16 %v1705
    %v3119 = vunpack.c.l.b16 %v1706
    %v3120 = vunpack.c.h.b16 %v1706
    %v3121 = vunpack.c.l.b16 %v1707
    %v3122 = vunpack.c.h.b16 %v1707
    %v3123 = vunpack.c.l.b16 %v1708
    %v3124 = vunpack.c.h.b16 %v1708
    %v3125 = vunpack.c.l.b16 %v1709
    %v3126 = vunpack.c.h.b16 %v1709
    %v3127 = vunpack.c.l.b16 %v1710
    %v3128 = vunpack.c.h.b16 %v1710
    %v3129 = vunpack.c.l.b16 %v1711
    %v3130 = vunpack.c.h.b16 %v1711
    %v3131 = vunpack.c.l.b16 %v1712
    %v3132 = vunpack.c.h.b16 %v1712
    %v3133 = vunpack.c.l.b16 %v1713
    %v3134 = vunpack.c.h.b16 %v1713
    %v3135 = vunpack.c.l.b16 %v1714
    %v3136 = vunpack.c.h.b16 %v1714
    %v3137 = vunpack.c.l.b16 %v1715
    %v3138 = vunpack.c.h.b16 %v1715
    %v3139 = vunpack.c.l.b16 %v1716
    %v3140 = vunpack.c.h.b16 %v1716
    %v3141 = vunpack.c.l.b16 %v1717
    %v3142 = vunpack.c.h.b16 %v1717
    %v3143 = vunpack.c.l.b16 %v1718
    %v3144 = vunpack.c.h.b16 %v1718
    %v3145 = vunpack.c.l.b16 %v1719
    %v3146 = vunpack.c.h.b16 %v1719
    %v3147 = vunpack.c.l.b16 %v1720
    %v3148 = vunpack.c.h.b16 %v1720
    %v3149 = vunpack.c.l.b16 %v1721
    %v3150 = vunpack.c.h.b16 %v1721
    %v3151 = vunpack.c.l.b16 %v1722
    %v3152 = vunpack.c.h.b16 %v1722
    %v3153 = vunpack.c.l.b16 %v1723
    %v3154 = vunpack.c.h.b16 %v1723
    %v3155 = vunpack.c.l.b16 %v1724
    %v3156 = vunpack.c.h.b16 %v1724
    %v3157 = vunpack.c.l.b16 %v1725
    %v3158 = vunpack.c.h.b16 %v1725
    %v3159 = vunpack.c.l.b16 %v1726
    %v3160 = vunpack.c.h.b16 %v1726
    %v3161 = vunpack.c.l.b16 %v1727
    %v3162 = vunpack.c.h.b16 %v1727
    %v3163 = vunpack.c.l.b16 %v1728
    %v3164 = vunpack.c.h.b16 %v1728
    %v3165 = vunpack.c.l.b16 %v1729
    %v3166 = vunpack.c.h.b16 %v1729
    %v3167 = vunpack.c.l.b16 %v1730
    %v3168 = vunpack.c.h.b16 %v1730
    %v3169 = vunpack.c.l.b16 %v1731
    %v3170 = vunpack.c.h.b16 %v1731
    %v3171 = vunpack.c.l.b16 %v1732
    %v3172 = vunpack.c.h.b16 %v1732
    %v3173 = vunpack.c.l.b16 %v1733
    %v3174 = vunpack.c.h.b16 %v1733
    %v3175 = vunpack.c.l.b16 %v1734
    %v3176 = vunpack.c.h.b16 %v1734
    %v3177 = vunpack.c.l.b16 %v1735
    %v3178 = vunpack.c.h.b16 %v1735
    %v3179 = vunpack.c.l.b16 %v1736
    %v3180 = vunpack.c.h.b16 %v1736
    %v3181 = vunpack.c.l.b16 %v1737
    %v3182 = vunpack.c.h.b16 %v1737
    %v3183 = vunpack.c.l.b16 %v1738
    %v3184 = vunpack.c.h.b16 %v1738
    %v3185 = vunpack.c.l.b16 %v1739
    %v3186 = vunpack.c.h.b16 %v1739
    %v3187 = vunpack.c.l.b16 %v1740
    %v3188 = vunpack.c.h.b16 %v1740
    %v3189 = vunpack.c.l.b16 %v1741
    %v3190 = vunpack.c.h.b16 %v1741
    %v3191 = vunpack.c.l.b16 %v1742
    %v3192 = vunpack.c.h.b16 %v1742
    %v3193 = vunpack.c.l.b16 %v1743
    %v3194 = vunpack.c.h.b16 %v1743
    %v3195 = vunpack.c.l.b16 %v1744
    %v3196 = vunpack.c.h.b16 %v1744
    %v3197 = vunpack.c.l.b16 %v1745
    %v3198 = vunpack.c.h.b16 %v1745
    %v3199 = vunpack.c.l.b16 %v1746
    %v3200 = vunpack.c.h.b16 %v1746
    %v3201 = vunpack.c.l.b16 %v1747
    %v3202 = vunpack.c.h.b16 %v1747
    %v3203 = vunpack.c.l.b16 %v1748
    %v3204 = vunpack.c.h.b16 %v1748
    %v3205 = vunpack.c.l.b16 %v1749
    %v3206 = vunpack.c.h.b16 %v1749
    %v3207 = vunpack.c.l.b16 %v1750
    %v3208 = vunpack.c.h.b16 %v1750
    %v3209 = vunpack.c.l.b16 %v1751
    %v3210 = vunpack.c.h.b16 %v1751
    %v3211 = vunpack.c.l.b16 %v1752
    %v3212 = vunpack.c.h.b16 %v1752
    %v3213 = vunpack.c.l.b16 %v1753
    %v3214 = vunpack.c.h.b16 %v1753
    %v3215 = vunpack.c.l.b16 %v1754
    %v3216 = vunpack.c.h.b16 %v1754
    %v3217 = vunpack.c.l.b16 %v1755
    %v3218 = vunpack.c.h.b16 %v1755
    %v3219 = vunpack.c.l.b16 %v1756
    %v3220 = vunpack.c.h.b16 %v1756
    %v3221 = vunpack.c.l.b16 %v1757
    %v3222 = vunpack.c.h.b16 %v1757
    %v3223 = vunpack.c.l.b16 %v1758
    %v3224 = vunpack.c.h.b16 %v1758
    %v3225 = vunpack.c.l.b16 %v1759
    %v3226 = vunpack.c.h.b16 %v1759
    %v3227 = vunpack.c.l.b16 %v1760
    %v3228 = vunpack.c.h.b16 %v1760
    %v3229 = vunpack.c.l.b16 %v1761
    %v3230 = vunpack.c.h.b16 %v1761
    %v3231 = vunpack.c.l.b16 %v1762
    %v3232 = vunpack.c.h.b16 %v1762
    %v3233 = vunpack.c.l.b16 %v1763
    %v3234 = vunpack.c.h.b16 %v1763
    %v3235 = vunpack.c.l.b16 %v1764
    %v3236 = vunpack.c.h.b16 %v1764
    %v3237 = vunpack.c.l.b16 %v1765
    %v3238 = vunpack.c.h.b16 %v1765
    %v3239 = vunpack.c.l.b16 %v1766
    %v3240 = vunpack.c.h.b16 %v1766
    %v3241 = vunpack.c.l.b16 %v1767
    %v3242 = vunpack.c.h.b16 %v1767
    %v3243 = vunpack.c.l.b16 %v1768
    %v3244 = vunpack.c.h.b16 %v1768
    %v3245 = vunpack.c.l.b16 %v1769
    %v3246 = vunpack.c.h.b16 %v1769
    %v3247 = vunpack.c.l.b16 %v1770
    %v3248 = vunpack.c.h.b16 %v1770
    %v3249 = vunpack.c.l.b16 %v1771
    %v3250 = vunpack.c.h.b16 %v1771
    %v3251 = vunpack.c.l.b16 %v1772
    %v3252 = vunpack.c.h.b16 %v1772
    %v3253 = vunpack.c.l.b16 %v1773
    %v3254 = vunpack.c.h.b16 %v1773
    %v3255 = vunpack.c.l.b16 %v1774
    %v3256 = vunpack.c.h.b16 %v1774
    %v3257 = vunpack.c.l.b16 %v1775
    %v3258 = vunpack.c.h.b16 %v1775
    %v3259 = vunpack.c.l.b16 %v1776
    %v3260 = vunpack.c.h.b16 %v1776
    %v3261 = vunpack.c.l.b16 %v1777
    %v3262 = vunpack.c.h.b16 %v1777
    %v3263 = vunpack.c.l.b16 %v1778
    %v3264 = vunpack.c.h.b16 %v1778
    %v3265 = vunpack.c.l.b16 %v1779
    %v3266 = vunpack.c.h.b16 %v1779
    %v3267 = vunpack.c.l.b16 %v1780
    %v3268 = vunpack.c.h.b16 %v1780
    %v3269 = vunpack.c.l.b16 %v1781
    %v3270 = vunpack.c.h.b16 %v1781
    %v3271 = vunpack.c.l.b16 %v1782
    %v3272 = vunpack.c.h.b16 %v1782
    %v3273 = vunpack.c.l.b16 %v1783
    %v3274 = vunpack.c.h.b16 %v1783
    %v3275 = vunpack.c.l.b16 %v1784
    %v3276 = vunpack.c.h.b16 %v1784
    %v3277 = vunpack.c.l.b16 %v1785
    %v3278 = vunpack.c.h.b16 %v1785
    %v3279 = vunpack.c.l.b16 %v1786
    %v3280 = vunpack.c.h.b16 %v1786
    %v3281 = vunpack.c.l.b16 %v1787
    %v3282 = vunpack.c.h.b16 %v1787
    %v3283 = vunpack.c.l.b16 %v1788
    %v3284 = vunpack.c.h.b16 %v1788
    %v3285 = vunpack.c.l.b16 %v1789
    %v3286 = vunpack.c.h.b16 %v1789
    %v3287 = vunpack.c.l.b16 %v1790
    %v3288 = vunpack.c.h.b16 %v1790
    %v3289 = vunpack.c.l.b16 %v1791
    %v3290 = vunpack.c.h.b16 %v1791
    %v3291 = vunpack.c.l.b16 %v1792
    %v3292 = vunpack.c.h.b16 %v1792
    %v3293 = vunpack.c.l.b16 %v1793
    %v3294 = vunpack.c.h.b16 %v1793
    %v3295 = vunpack.c.l.b16 %v1794
    %v3296 = vunpack.c.h.b16 %v1794
    %v3297 = vunpack.c.l.b16 %v1795
    %v3298 = vunpack.c.h.b16 %v1795
    %v3299 = vunpack.c.l.b16 %v1796
    %v3300 = vunpack.c.h.b16 %v1796
    %v3301 = vunpack.c.l.b16 %v1797
    %v3302 = vunpack.c.h.b16 %v1797
    %v3303 = vunpack.c.l.b16 %v1798
    %v3304 = vunpack.c.h.b16 %v1798
    %v3305 = vunpack.c.l.b16 %v1799
    %v3306 = vunpack.c.h.b16 %v1799
    %v3307 = vunpack.c.l.b16 %v1800
    %v3308 = vunpack.c.h.b16 %v1800
    %v3309 = vunpack.c.l.b16 %v1801
    %v3310 = vunpack.c.h.b16 %v1801
    %v3311 = vunpack.c.l.b16 %v1802
    %v3312 = vunpack.c.h.b16 %v1802
    %v3313 = vunpack.c.l.b16 %v1803
    %v3314 = vunpack.c.h.b16 %v1803
    %v3315 = vunpack.c.l.b16 %v1804
    %v3316 = vunpack.c.h.b16 %v1804
    %v3317 = vunpack.c.l.b16 %v1805
    %v3318 = vunpack.c.h.b16 %v1805
    %v3319 = vunpack.c.l.b16 %v1806
    %v3320 = vunpack.c.h.b16 %v1806
    %v3321 = vunpack.c.l.b16 %v1807
    %v3322 = vunpack.c.h.b16 %v1807
    %v3323 = vunpack.c.l.b16 %v1808
    %v3324 = vunpack.c.h.b16 %v1808
    %v3325 = vunpack.c.l.b16 %v1809
    %v3326 = vunpack.c.h.b16 %v1809
    %v3327 = vunpack.c.l.b16 %v1810
    %v3328 = vunpack.c.h.b16 %v1810
    %v3329 = vunpack.c.l.b16 %v1811
    %v3330 = vunpack.c.h.b16 %v1811
    %v3331 = vunpack.c.l.b16 %v1812
    %v3332 = vunpack.c.h.b16 %v1812
    %v3333 = vunpack.c.l.b16 %v1813
    %v3334 = vunpack.c.h.b16 %v1813
    %v3335 = vunpack.c.l.b16 %v1814
    %v3336 = vunpack.c.h.b16 %v1814
    %v3337 = vunpack.c.l.b16 %v1815
    %v3338 = vunpack.c.h.b16 %v1815
    %v3339 = vunpack.c.l.b16 %v1816
    %v3340 = vunpack.c.h.b16 %v1816
    %v3341 = vunpack.c.l.b16 %v1817
    %v3342 = vunpack.c.h.b16 %v1817
    %v3343 = vunpack.c.l.b16 %v1818
    %v3344 = vunpack.c.h.b16 %v1818
    %v3345 = vunpack.c.l.b16 %v1819
    %v3346 = vunpack.c.h.b16 %v1819
    %v3347 = vunpack.c.l.b16 %v1820
    %v3348 = vunpack.c.h.b16 %v1820
    %v3349 = vunpack.c.l.b16 %v1821
    %v3350 = vunpack.c.h.b16 %v1821
    %v3351 = vunpack.c.l.b16 %v1822
    %v3352 = vunpack.c.h.b16 %v1822
    %v3353 = vunpack.c.l.b16 %v1823
    %v3354 = vunpack.c.h.b16 %v1823
    %v3355 = vunpack.c.l.b16 %v1824
    %v3356 = vunpack.c.h.b16 %v1824
    %v3357 = vunpack.c.l.b16 %v1825
    %v3358 = vunpack.c.h.b16 %v1825
    %v3359 = vunpack.c.l.b16 %v1826
    %v3360 = vunpack.c.h.b16 %v1826
    %v3361 = vunpack.c.l.b16 %v1827
    %v3362 = vunpack.c.h.b16 %v1827
    %v3363 = vunpack.c.l.b16 %v1828
    %v3364 = vunpack.c.h.b16 %v1828
    %v3365 = vunpack.c.l.b16 %v1829
    %v3366 = vunpack.c.h.b16 %v1829
    %v3367 = vunpack.c.l.b16 %v1830
    %v3368 = vunpack.c.h.b16 %v1830
    %v3369 = vunpack.c.l.b16 %v1831
    %v3370 = vunpack.c.h.b16 %v1831
    %v3371 = vunpack.c.l.b16 %v1832
    %v3372 = vunpack.c.h.b16 %v1832
    %v3373 = vunpack.c.l.b16 %v1833
    %v3374 = vunpack.c.h.b16 %v1833
    %v3375 = vunpack.c.l.b16 %v1834
    %v3376 = vunpack.c.h.b16 %v1834
    %v3377 = vunpack.c.l.b16 %v1835
    %v3378 = vunpack.c.h.b16 %v1835
    %v3379 = vunpack.c.l.b16 %v1836
    %v3380 = vunpack.c.h.b16 %v1836
    %v3381 = vunpack.c.l.b16 %v1837
    %v3382 = vunpack.c.h.b16 %v1837
    %v3383 = vunpack.c.l.b16 %v1838
    %v3384 = vunpack.c.h.b16 %v1838
    %v3385 = vunpack.c.l.b16 %v1839
    %v3386 = vunpack.c.h.b16 %v1839
    %v3387 = vunpack.c.l.b16 %v1840
    %v3388 = vunpack.c.h.b16 %v1840
    %v3389 = vunpack.c.l.b16 %v1841
    %v3390 = vunpack.c.h.b16 %v1841
    %v3391 = vunpack.c.l.b16 %v1842
    %v3392 = vunpack.c.h.b16 %v1842
    %v3393 = vunpack.c.l.b16 %v1843
    %v3394 = vunpack.c.h.b16 %v1843
    %v3395 = vunpack.c.l.b16 %v1844
    %v3396 = vunpack.c.h.b16 %v1844
    %v3397 = vunpack.c.l.b16 %v1845
    %v3398 = vunpack.c.h.b16 %v1845
    %v3399 = vunpack.c.l.b16 %v1846
    %v3400 = vunpack.c.h.b16 %v1846
    %v3401 = vpack.c.b16 %v2385, %v2377
    %v3402 = vpack.c.b16 %v2386, %v2378
    %v3403 = vpack.c.b16 %v2387, %v2379
    %v3404 = vpack.c.b16 %v2388, %v2380
    %v3405 = vpack.c.b16 %v2389, %v2381
    %v3406 = vpack.c.b16 %v2390, %v2382
    %v3407 = vpack.c.b16 %v2391, %v2383
    %v3408 = vpack.c.b16 %v2392, %v2384
    %v3409 = vpack.c.b16 %v2401, %v2393
    %v3410 = vpack.c.b16 %v2402, %v2394
    %v3411 = vpack.c.b16 %v2403, %v2395
    %v3412 = vpack.c.b16 %v2404, %v2396
    %v3413 = vpack.c.b16 %v2405, %v2397
    %v3414 = vpack.c.b16 %v2406, %v2398
    %v3415 = vpack.c.b16 %v2407, %v2399
    %v3416 = vpack.c.b16 %v2408, %v2400
    %v3417 = vpack.c.b16 %v2417, %v2409
    %v3418 = vpack.c.b16 %v2418, %v2410
    %v3419 = vpack.c.b16 %v2419, %v2411
    %v3420 = vpack.c.b16 %v2420, %v2412
    %v3421 = vpack.c.b16 %v2421, %v2413
    %v3422 = vpack.c.b16 %v2422, %v2414
    %v3423 = vpack.c.b16 %v2423, %v2415
    %v3424 = vpack.c.b16 %v2424, %v2416
    %v3425 = vpack.c.b16 %v2433, %v2425
    %v3426 = vpack.c.b16 %v2434, %v2426
    %v3427 = vpack.c.b16 %v2435, %v2427
    %v3428 = vpack.c.b16 %v2436, %v2428
    %v3429 = vpack.c.b16 %v2437, %v2429
    %v3430 = vpack.c.b16 %v2438, %v2430
    %v3431 = vpack.c.b16 %v2439, %v2431
    %v3432 = vpack.c.b16 %v2440, %v2432
    %v3433 = vpack.c.b16 %v2449, %v2441
    %v3434 = vpack.c.b16 %v2450, %v2442
    %v3435 = vpack.c.b16 %v2451, %v2443
    %v3436 = vpack.c.b16 %v2452, %v2444
    %v3437 = vpack.c.b16 %v2453, %v2445
    %v3438 = vpack.c.b16 %v2454, %v2446
    %v3439 = vpack.c.b16 %v2455, %v2447
    %v3440 = vpack.c.b16 %v2456, %v2448
    %v3441 = vpack.c.b16 %v2465, %v2457
    %v3442 = vpack.c.b16 %v2466, %v2458
    %v3443 = vpack.c.b16 %v2467, %v2459
    %v3444 = vpack.c.b16 %v2468, %v2460
    %v3445 = vpack.c.b16 %v2469, %v2461
    %v3446 = vpack.c.b16 %v2470, %v2462
    %v3447 = vpack.c.b16 %v2471, %v2463
    %v3448 = vpack.c.b16 %v2472, %v2464
    %v3449 = vpack.c.b16 %v2481, %v2473
    %v3450 = vpack.c.b16 %v2482, %v2474
    %v3451 = vpack.c.b16 %v2483, %v2475
    %v3452 = vpack.c.b16 %v2484, %v2476
    %v3453 = vpack.c.b16 %v2485, %v2477
    %v3454 = vpack.c.b16 %v2486, %v2478
    %v3455 = vpack.c.b16 %v2487, %v2479
    %v3456 = vpack.c.b16 %v2488, %v2480
    %v3457 = vpack.c.b16 %v2497, %v2489
    %v3458 = vpack.c.b16 %v2498, %v2490
    %v3459 = vpack.c.b16 %v2499, %v2491
    %v3460 = vpack.c.b16 %v2500, %v2492
    %v3461 = vpack.c.b16 %v2501, %v2493
    %v3462 = vpack.c.b16 %v2502, %v2494
    %v3463 = vpack.c.b16 %v2503, %v2495
    %v3464 = vpack.c.b16 %v2504, %v2496
    %v3465 = vpack.c.b16 %v2513, %v2505
    %v3466 = vpack.c.b16 %v2514, %v2506
    %v3467 = vpack.c.b16 %v2515, %v2507
    %v3468 = vpack.c.b16 %v2516, %v2508
    %v3469 = vpack.c.b16 %v2517, %v2509
    %v3470 = vpack.c.b16 %v2518, %v2510
    %v3471 = vpack.c.b16 %v2519, %v2511
    %v3472 = vpack.c.b16 %v2520, %v2512
    %v3473 = vpack.c.b16 %v2529, %v2521
    %v3474 = vpack.c.b16 %v2530, %v2522
    %v3475 = vpack.c.b16 %v2531, %v2523
    %v3476 = vpack.c.b16 %v2532, %v2524
    %v3477 = vpack.c.b16 %v2533, %v2525
    %v3478 = vpack.c.b16 %v2534, %v2526
    %v3479 = vpack.c.b16 %v2535, %v2527
    %v3480 = vpack.c.b16 %v2536, %v2528
    %v3481 = vpack.c.b16 %v2545, %v2537
    %v3482 = vpack.c.b16 %v2546, %v2538
    %v3483 = vpack.c.b16 %v2547, %v2539
    %v3484 = vpack.c.b16 %v2548, %v2540
    %v3485 = vpack.c.b16 %v2549, %v2541
    %v3486 = vpack.c.b16 %v2550, %v2542
    %v3487 = vpack.c.b16 %v2551, %v2543
    %v3488 = vpack.c.b16 %v2552, %v2544
    %v3489 = vpack.c.b16 %v2561, %v2553
    %v3490 = vpack.c.b16 %v2562, %v2554
    %v3491 = vpack.c.b16 %v2563, %v2555
    %v3492 = vpack.c.b16 %v2564, %v2556
    %v3493 = vpack.c.b16 %v2565, %v2557
    %v3494 = vpack.c.b16 %v2566, %v2558
    %v3495 = vpack.c.b16 %v2567, %v2559
    %v3496 = vpack.c.b16 %v2568, %v2560
    %v3497 = vpack.c.b16 %v2577, %v2569
    %v3498 = vpack.c.b16 %v2578, %v2570
    %v3499 = vpack.c.b16 %v2579, %v2571
    %v3500 = vpack.c.b16 %v2580, %v2572
    %v3501 = vpack.c.b16 %v2581, %v2573
    %v3502 = vpack.c.b16 %v2582, %v2574
    %v3503 = vpack.c.b16 %v2583, %v2575
    %v3504 = vpack.c.b16 %v2584, %v2576
    %v3505 = vpack.c.b16 %v2593, %v2585
    %v3506 = vpack.c.b16 %v2594, %v2586
    %v3507 = vpack.c.b16 %v2595, %v2587
    %v3508 = vpack.c.b16 %v2596, %v2588
    %v3509 = vpack.c.b16 %v2597, %v2589
    %v3510 = vpack.c.b16 %v2598, %v2590
    %v3511 = vpack.c.b16 %v2599, %v2591
    %v3512 = vpack.c.b16 %v2600, %v2592
    %v3513 = vpack.c.b16 %v2609, %v2601
    %v3514 = vpack.c.b16 %v2610, %v2602
    %v3515 = vpack.c.b16 %v2611, %v2603
    %v3516 = vpack.c.b16 %v2612, %v2604
    %v3517 = vpack.c.b16 %v2613, %v2605
    %v3518 = vpack.c.b16 %v2614, %v2606
    %v3519 = vpack.c.b16 %v2615, %v2607
    %v3520 = vpack.c.b16 %v2616, %v2608
    %v3521 = vpack.c.b16 %v2625, %v2617
    %v3522 = vpack.c.b16 %v2626, %v2618
    %v3523 = vpack.c.b16 %v2627, %v2619
    %v3524 = vpack.c.b16 %v2628, %v2620
    %v3525 = vpack.c.b16 %v2629, %v2621
    %v3526 = vpack.c.b16 %v2630, %v2622
    %v3527 = vpack.c.b16 %v2631, %v2623
    %v3528 = vpack.c.b16 %v2632, %v2624
    %v3529 = vpack.c.b16 %v2641, %v2633
    %v3530 = vpack.c.b16 %v2642, %v2634
    %v3531 = vpack.c.b16 %v2643, %v2635
    %v3532 = vpack.c.b16 %v2644, %v2636
    %v3533 = vpack.c.b16 %v2645, %v2637
    %v3534 = vpack.c.b16 %v2646, %v2638
    %v3535 = vpack.c.b16 %v2647, %v2639
    %v3536 = vpack.c.b16 %v2648, %v2640
    %v3537 = vpack.c.b16 %v2657, %v2649
    %v3538 = vpack.c.b16 %v2658, %v2650
    %v3539 = vpack.c.b16 %v2659, %v2651
    %v3540 = vpack.c.b16 %v2660, %v2652
    %v3541 = vpack.c.b16 %v2661, %v2653
    %v3542 = vpack.c.b16 %v2662, %v2654
    %v3543 = vpack.c.b16 %v2663, %v2655
    %v3544 = vpack.c.b16 %v2664, %v2656
    %v3545 = vpack.c.b16 %v2673, %v2665
    %v3546 = vpack.c.b16 %v2674, %v2666
    %v3547 = vpack.c.b16 %v2675, %v2667
    %v3548 = vpack.c.b16 %v2676, %v2668
    %v3549 = vpack.c.b16 %v2677, %v2669
    %v3550 = vpack.c.b16 %v2678, %v2670
    %v3551 = vpack.c.b16 %v2679, %v2671
    %v3552 = vpack.c.b16 %v2680, %v2672
    %v3553 = vpack.c.b16 %v2689, %v2681
    %v3554 = vpack.c.b16 %v2690, %v2682
    %v3555 = vpack.c.b16 %v2691, %v2683
    %v3556 = vpack.c.b16 %v2692, %v2684
    %v3557 = vpack.c.b16 %v2693, %v2685
    %v3558 = vpack.c.b16 %v2694, %v2686
    %v3559 = vpack.c.b16 %v2695, %v2687
    %v3560 = vpack.c.b16 %v2696, %v2688
    %v3561 = vpack.c.b16 %v2705, %v2697
    %v3562 = vpack.c.b16 %v2706, %v2698
    %v3563 = vpack.c.b16 %v2707, %v2699
    %v3564 = vpack.c.b16 %v2708, %v2700
    %v3565 = vpack.c.b16 %v2709, %v2701
    %v3566 = vpack.c.b16 %v2710, %v2702
    %v3567 = vpack.c.b16 %v2711, %v2703
    %v3568 = vpack.c.b16 %v2712, %v2704
    %v3569 = vpack.c.b16 %v2721, %v2713
    %v3570 = vpack.c.b16 %v2722, %v2714
    %v3571 = vpack.c.b16 %v2723, %v2715
    %v3572 = vpack.c.b16 %v2724, %v2716
    %v3573 = vpack.c.b16 %v2725, %v2717
    %v3574 = vpack.c.b16 %v2726, %v2718
    %v3575 = vpack.c.b16 %v2727, %v2719
    %v3576 = vpack.c.b16 %v2728, %v2720
    %v3577 = vpack.c.b16 %v2737, %v2729
    %v3578 = vpack.c.b16 %v2738, %v2730
    %v3579 = vpack.c.b16 %v2739, %v2731
    %v3580 = vpack.c.b16 %v2740, %v2732
    %v3581 = vpack.c.b16 %v2741, %v2733
    %v3582 = vpack.c.b16 %v2742, %v2734
    %v3583 = vpack.c.b16 %v2743, %v2735
    %v3584 = vpack.c.b16 %v2744, %v2736
    %v3585 = vpack.c.b16 %v2753, %v2745
    %v3586 = vpack.c.b16 %v2754, %v2746
    %v3587 = vpack.c.b16 %v2755, %v2747
    %v3588 = vpack.c.b16 %v2756, %v2748
    %v3589 = vpack.c.b16 %v2757, %v2749
    %v3590 = vpack.c.b16 %v2758, %v2750
    %v3591 = vpack.c.b16 %v2759, %v2751
    %v3592 = vpack.c.b16 %v2760, %v2752
    %v3593 = vpack.c.b16 %v2769, %v2761
    %v3594 = vpack.c.b16 %v2770, %v2762
    %v3595 = vpack.c.b16 %v2771, %v2763
    %v3596 = vpack.c.b16 %v2772, %v2764
    %v3597 = vpack.c.b16 %v2773, %v2765
    %v3598 = vpack.c.b16 %v2774, %v2766
    %v3599 = vpack.c.b16 %v2775, %v2767
    %v3600 = vpack.c.b16 %v2776, %v2768
    %v3601 = vpack.c.b16 %v2785, %v2777
    %v3602 = vpack.c.b16 %v2786, %v2778
    %v3603 = vpack.c.b16 %v2787, %v2779
    %v3604 = vpack.c.b16 %v2788, %v2780
    %v3605 = vpack.c.b16 %v2789, %v2781
    %v3606 = vpack.c.b16 %v2790, %v2782
    %v3607 = vpack.c.b16 %v2791, %v2783
    %v3608 = vpack.c.b16 %v2792, %v2784
    %v3609 = vpack.c.b16 %v2801, %v2793
    %v3610 = vpack.c.b16 %v2802, %v2794
    %v3611 = vpack.c.b16 %v2803, %v2795
    %v3612 = vpack.c.b16 %v2804, %v2796
    %v3613 = vpack.c.b16 %v2805, %v2797
    %v3614 = vpack.c.b16 %v2806, %v2798
    %v3615 = vpack.c.b16 %v2807, %v2799
    %v3616 = vpack.c.b16 %v2808, %v2800
    %v3617 = vpack.c.b16 %v2817, %v2809
    %v3618 = vpack.c.b16 %v2818, %v2810
    %v3619 = vpack.c.b16 %v2819, %v2811
    %v3620 = vpack.c.b16 %v2820, %v2812
    %v3621 = vpack.c.b16 %v2821, %v2813
    %v3622 = vpack.c.b16 %v2822, %v2814
    %v3623 = vpack.c.b16 %v2823, %v2815
    %v3624 = vpack.c.b16 %v2824, %v2816
    %v3625 = vpack.c.b16 %v2833, %v2825
    %v3626 = vpack.c.b16 %v2834, %v2826
    %v3627 = vpack.c.b16 %v2835, %v2827
    %v3628 = vpack.c.b16 %v2836, %v2828
    %v3629 = vpack.c.b16 %v2837, %v2829
    %v3630 = vpack.c.b16 %v2838, %v2830
    %v3631 = vpack.c.b16 %v2839, %v2831
    %v3632 = vpack.c.b16 %v2840, %v2832
    %v3633 = vpack.c.b16 %v2849, %v2841
    %v3634 = vpack.c.b16 %v2850, %v2842
    %v3635 = vpack.c.b16 %v2851, %v2843
    %v3636 = vpack.c.b16 %v2852, %v2844
    %v3637 = vpack.c.b16 %v2853, %v2845
    %v3638 = vpack.c.b16 %v2854, %v2846
    %v3639 = vpack.c.b16 %v2855, %v2847
    %v3640 = vpack.c.b16 %v2856, %v2848
    %v3641 = vpack.c.b16 %v2865, %v2857
    %v3642 = vpack.c.b16 %v2866, %v2858
    %v3643 = vpack.c.b16 %v2867, %v2859
    %v3644 = vpack.c.b16 %v2868, %v2860
    %v3645 = vpack.c.b16 %v2869, %v2861
    %v3646 = vpack.c.b16 %v2870, %v2862
    %v3647 = vpack.c.b16 %v2871, %v2863
    %v3648 = vpack.c.b16 %v2872, %v2864
    %v3649 = vpack.c.b16 %v2881, %v2873
    %v3650 = vpack.c.b16 %v2882, %v2874
    %v3651 = vpack.c.b16 %v2883, %v2875
    %v3652 = vpack.c.b16 %v2884, %v2876
    %v3653 = vpack.c.b16 %v2885, %v2877
    %v3654 = vpack.c.b16 %v2886, %v2878
    %v3655 = vpack.c.b16 %v2887, %v2879
    %v3656 = vpack.c.b16 %v2888, %v2880
    %v3657 = vpack.c.b16 %v2897, %v2889
    %v3658 = vpack.c.b16 %v2898, %v2890
    %v3659 = vpack.c.b16 %v2899, %v2891
    %v3660 = vpack.c.b16 %v2900, %v2892
    %v3661 = vpack.c.b16 %v2901, %v2893
    %v3662 = vpack.c.b16 %v2902, %v2894
    %v3663 = vpack.c.b16 %v2903, %v2895
    %v3664 = vpack.c.b16 %v2904, %v2896
    %v3665 = vpack.c.b16 %v2913, %v2905
    %v3666 = vpack.c.b16 %v2914, %v2906
    %v3667 = vpack.c.b16 %v2915, %v2907
    %v3668 = vpack.c.b16 %v2916, %v2908
    %v3669 = vpack.c.b16 %v2917, %v2909
    %v3670 = vpack.c.b16 %v2918, %v2910
    %v3671 = vpack.c.b16 %v2919, %v2911
    %v3672 = vpack.c.b16 %v2920, %v2912
    %v3673 = vpack.c.b16 %v2929, %v2921
    %v3674 = vpack.c.b16 %v2930, %v2922
    %v3675 = vpack.c.b16 %v2931, %v2923
    %v3676 = vpack.c.b16 %v2932, %v2924
    %v3677 = vpack.c.b16 %v2933, %v2925
    %v3678 = vpack.c.b16 %v2934, %v2926
    %v3679 = vpack.c.b16 %v2935, %v2927
    %v3680 = vpack.c.b16 %v2936, %v2928
    %v3681 = vpack.c.b16 %v2945, %v2937
    %v3682 = vpack.c.b16 %v2946, %v2938
    %v3683 = vpack.c.b16 %v2947, %v2939
    %v3684 = vpack.c.b16 %v2948, %v2940
    %v3685 = vpack.c.b16 %v2949, %v2941
    %v3686 = vpack.c.b16 %v2950, %v2942
    %v3687 = vpack.c.b16 %v2951, %v2943
    %v3688 = vpack.c.b16 %v2952, %v2944
    %v3689 = vpack.c.b16 %v2961, %v2953
    %v3690 = vpack.c.b16 %v2962, %v2954
    %v3691 = vpack.c.b16 %v2963, %v2955
    %v3692 = vpack.c.b16 %v2964, %v2956
    %v3693 = vpack.c.b16 %v2965, %v2957
    %v3694 = vpack.c.b16 %v2966, %v2958
    %v3695 = vpack.c.b16 %v2967, %v2959
    %v3696 = vpack.c.b16 %v2968, %v2960
    %v3697 = vpack.c.b16 %v2977, %v2969
    %v3698 = vpack.c.b16 %v2978, %v2970
    %v3699 = vpack.c.b16 %v2979, %v2971
    %v3700 = vpack.c.b16 %v2980, %v2972
    %v3701 = vpack.c.b16 %v2981, %v2973
    %v3702 = vpack.c.b16 %v2982, %v2974
    %v3703 = vpack.c.b16 %v2983, %v2975
    %v3704 = vpack.c.b16 %v2984, %v2976
    %v3705 = vpack.c.b16 %v2993, %v2985
    %v3706 = vpack.c.b16 %v2994, %v2986
    %v3707 = vpack.c.b16 %v2995, %v2987
    %v3708 = vpack.c.b16 %v2996, %v2988
    %v3709 = vpack.c.b16 %v2997, %v2989
    %v3710 = vpack.c.b16 %v2998, %v2990
    %v3711 = vpack.c.b16 %v2999, %v2991
    %v3712 = vpack.c.b16 %v3000, %v2992
    %v3713 = vpack.c.b16 %v3009, %v3001
    %v3714 = vpack.c.b16 %v3010, %v3002
    %v3715 = vpack.c.b16 %v3011, %v3003
    %v3716 = vpack.c.b16 %v3012, %v3004
    %v3717 = vpack.c.b16 %v3013, %v3005
    %v3718 = vpack.c.b16 %v3014, %v3006
    %v3719 = vpack.c.b16 %v3015, %v3007
    %v3720 = vpack.c.b16 %v3016, %v3008
    %v3721 = vpack.c.b16 %v3025, %v3017
    %v3722 = vpack.c.b16 %v3026, %v3018
    %v3723 = vpack.c.b16 %v3027, %v3019
    %v3724 = vpack.c.b16 %v3028, %v3020
    %v3725 = vpack.c.b16 %v3029, %v3021
    %v3726 = vpack.c.b16 %v3030, %v3022
    %v3727 = vpack.c.b16 %v3031, %v3023
    %v3728 = vpack.c.b16 %v3032, %v3024
    %v3729 = vpack.c.b16 %v3041, %v3033
    %v3730 = vpack.c.b16 %v3042, %v3034
    %v3731 = vpack.c.b16 %v3043, %v3035
    %v3732 = vpack.c.b16 %v3044, %v3036
    %v3733 = vpack.c.b16 %v3045, %v3037
    %v3734 = vpack.c.b16 %v3046, %v3038
    %v3735 = vpack.c.b16 %v3047, %v3039
    %v3736 = vpack.c.b16 %v3048, %v3040
    %v3737 = vpack.c.b16 %v3057, %v3049
    %v3738 = vpack.c.b16 %v3058, %v3050
    %v3739 = vpack.c.b16 %v3059, %v3051
    %v3740 = vpack.c.b16 %v3060, %v3052
    %v3741 = vpack.c.b16 %v3061, %v3053
    %v3742 = vpack.c.b16 %v3062, %v3054
    %v3743 = vpack.c.b16 %v3063, %v3055
    %v3744 = vpack.c.b16 %v3064, %v3056
    %v3745 = vpack.c.b16 %v3073, %v3065
    %v3746 = vpack.c.b16 %v3074, %v3066
    %v3747 = vpack.c.b16 %v3075, %v3067
    %v3748 = vpack.c.b16 %v3076, %v3068
    %v3749 = vpack.c.b16 %v3077, %v3069
    %v3750 = vpack.c.b16 %v3078, %v3070
    %v3751 = vpack.c.b16 %v3079, %v3071
    %v3752 = vpack.c.b16 %v3080, %v3072
    %v3753 = vpack.c.b16 %v3089, %v3081
    %v3754 = vpack.c.b16 %v3090, %v3082
    %v3755 = vpack.c.b16 %v3091, %v3083
    %v3756 = vpack.c.b16 %v3092, %v3084
    %v3757 = vpack.c.b16 %v3093, %v3085
    %v3758 = vpack.c.b16 %v3094, %v3086
    %v3759 = vpack.c.b16 %v3095, %v3087
    %v3760 = vpack.c.b16 %v3096, %v3088
    %v3761 = vpack.c.b16 %v3105, %v3097
    %v3762 = vpack.c.b16 %v3106, %v3098
    %v3763 = vpack.c.b16 %v3107, %v3099
    %v3764 = vpack.c.b16 %v3108, %v3100
    %v3765 = vpack.c.b16 %v3109, %v3101
    %v3766 = vpack.c.b16 %v3110, %v3102
    %v3767 = vpack.c.b16 %v3111, %v3103
    %v3768 = vpack.c.b16 %v3112, %v3104
    %v3769 = vpack.c.b16 %v3121, %v3113
    %v3770 = vpack.c.b16 %v3122, %v3114
    %v3771 = vpack.c.b16 %v3123, %v3115
    %v3772 = vpack.c.b16 %v3124, %v3116
    %v3773 = vpack.c.b16 %v3125, %v3117
    %v3774 = vpack.c.b16 %v3126, %v3118
    %v3775 = vpack.c.b16 %v3127, %v3119
    %v3776 = vpack.c.b16 %v3128, %v3120
    %v3777 = vpack.c.b16 %v3137, %v3129
    %v3778 = vpack.c.b16 %v3138, %v3130
    %v3779 = vpack.c.b16 %v3139, %v3131
    %v3780 = vpack.c.b16 %v3140, %v3132
    %v3781 = vpack.c.b16 %v3141, %v3133
    %v3782 = vpack.c.b16 %v3142, %v3134
    %v3783 = vpack.c.b16 %v3143, %v3135
    %v3784 = vpack.c.b16 %v3144, %v3136
    %v3785 = vpack.c.b16 %v3153, %v3145
    %v3786 = vpack.c.b16 %v3154, %v3146
    %v3787 = vpack.c.b16 %v3155, %v3147
    %v3788 = vpack.c.b16 %v3156, %v3148
    %v3789 = vpack.c.b16 %v3157, %v3149
    %v3790 = vpack.c.b16 %v3158, %v3150
    %v3791 = vpack.c.b16 %v3159, %v3151
    %v3792 = vpack.c.b16 %v3160, %v3152
    %v3793 = vpack.c.b16 %v3169, %v3161
    %v3794 = vpack.c.b16 %v3170, %v3162
    %v3795 = vpack.c.b16 %v3171, %v3163
    %v3796 = vpack.c.b16 %v3172, %v3164
    %v3797 = vpack.c.b16 %v3173, %v3165
    %v3798 = vpack.c.b16 %v3174, %v3166
    %v3799 = vpack.c.b16 %v3175, %v3167
    %v3800 = vpack.c.b16 %v3176, %v3168
    %v3801 = vpack.c.b16 %v3185, %v3177
    %v3802 = vpack.c.b16 %v3186, %v3178
    %v3803 = vpack.c.b16 %v3187, %v3179
    %v3804 = vpack.c.b16 %v3188, %v3180
    %v3805 = vpack.c.b16 %v3189, %v3181
    %v3806 = vpack.c.b16 %v3190, %v3182
    %v3807 = vpack.c.b16 %v3191, %v3183
    %v3808 = vpack.c.b16 %v3192, %v3184
    %v3809 = vpack.c.b16 %v3201, %v3193
    %v3810 = vpack.c.b16 %v3202, %v3194
    %v3811 = vpack.c.b16 %v3203, %v3195
    %v3812 = vpack.c.b16 %v3204, %v3196
    %v3813 = vpack.c.b16 %v3205, %v3197
    %v3814 = vpack.c.b16 %v3206, %v3198
    %v3815 = vpack.c.b16 %v3207, %v3199
    %v3816 = vpack.c.b16 %v3208, %v3200
    %v3817 = vpack.c.b16 %v3217, %v3209
    %v3818 = vpack.c.b16 %v3218, %v3210
    %v3819 = vpack.c.b16 %v3219, %v3211
    %v3820 = vpack.c.b16 %v3220, %v3212
    %v3821 = vpack.c.b16 %v3221, %v3213
    %v3822 = vpack.c.b16 %v3222, %v3214
    %v3823 = vpack.c.b16 %v3223, %v3215
    %v3824 = vpack.c.b16 %v3224, %v3216
    %v3825 = vpack.c.b16 %v3233, %v3225
    %v3826 = vpack.c.b16 %v3234, %v3226
    %v3827 = vpack.c.b16 %v3235, %v3227
    %v3828 = vpack.c.b16 %v3236, %v3228
    %v3829 = vpack.c.b16 %v3237, %v3229
    %v3830 = vpack.c.b16 %v3238, %v3230
    %v3831 = vpack.c.b16 %v3239, %v3231
    %v3832 = vpack.c.b16 %v3240, %v3232
    %v3833 = vpack.c.b16 %v3249, %v3241
    %v3834 = vpack.c.b16 %v3250, %v3242
    %v3835 = vpack.c.b16 %v3251, %v3243
    %v3836 = vpack.c.b16 %v3252, %v3244
    %v3837 = vpack.c.b16 %v3253, %v3245
    %v3838 = vpack.c.b16 %v3254, %v3246
    %v3839 = vpack.c.b16 %v3255, %v3247
    %v3840 = vpack.c.b16 %v3256, %v3248
    %v3841 = vpack.c.b16 %v3265, %v3257
    %v3842 = vpack.c.b16 %v3266, %v3258
    %v3843 = vpack.c.b16 %v3267, %v3259
    %v3844 = vpack.c.b16 %v3268, %v3260
    %v3845 = vpack.c.b16 %v3269, %v3261
    %v3846 = vpack.c.b16 %v3270, %v3262
    %v3847 = vpack.c.b16 %v3271, %v3263
    %v3848 = vpack.c.b16 %v3272, %v3264
    %v3849 = vpack.c.b16 %v3281, %v3273
    %v3850 = vpack.c.b16 %v3282, %v3274
    %v3851 = vpack.c.b16 %v3283, %v3275
    %v3852 = vpack.c.b16 %v3284, %v3276
    %v3853 = vpack.c.b16 %v3285, %v3277
    %v3854 = vpack.c.b16 %v3286, %v3278
    %v3855 = vpack.c.b16 %v3287, %v3279
    %v3856 = vpack.c.b16 %v3288, %v3280
    %v3857 = vpack.c.b16 %v3297, %v3289
    %v3858 = vpack.c.b16 %v3298, %v3290
    %v3859 = vpack.c.b16 %v3299, %v3291
    %v3860 = vpack.c.b16 %v3300, %v3292
    %v3861 = vpack.c.b16 %v3301, %v3293
    %v3862 = vpack.c.b16 %v3302, %v3294
    %v3863 = vpack.c.b16 %v3303, %v3295
    %v3864 = vpack.c.b16 %v3304, %v3296
    %v3865 = vpack.c.b16 %v3313, %v3305
    %v3866 = vpack.c.b16 %v3314, %v3306
    %v3867 = vpack.c.b16 %v3315, %v3307
    %v3868 = vpack.c.b16 %v3316, %v3308
    %v3869 = vpack.c.b16 %v3317, %v3309
    %v3870 = vpack.c.b16 %v3318, %v3310
    %v3871 = vpack.c.b16 %v3319, %v3311
    %v3872 = vpack.c.b16 %v3320, %v3312
    %v3873 = vpack.c.b16 %v3329, %v3321
    %v3874 = vpack.c.b16 %v3330, %v3322
    %v3875 = vpack.c.b16 %v3331, %v3323
    %v3876 = vpack.c.b16 %v3332, %v3324
    %v3877 = vpack.c.b16 %v3333, %v3325
    %v3878 = vpack.c.b16 %v3334, %v3326
    %v3879 = vpack.c.b16 %v3335, %v3327
    %v3880 = vpack.c.b16 %v3336, %v3328
    %v3881 = vpack.c.b16 %v3345, %v3337
    %v3882 = vpack.c.b16 %v3346, %v3338
    %v3883 = vpack.c.b16 %v3347, %v3339
    %v3884 = vpack.c.b16 %v3348, %v3340
    %v3885 = vpack.c.b16 %v3349, %v3341
    %v3886 = vpack.c.b16 %v3350, %v3342
    %v3887 = vpack.c.b16 %v3351, %v3343
    %v3888 = vpack.c.b16 %v3352, %v3344
    %v3889 = vpack.c.b16 %v3361, %v3353
    %v3890 = vpack.c.b16 %v3362, %v3354
    %v3891 = vpack.c.b16 %v3363, %v3355
    %v3892 = vpack.c.b16 %v3364, %v3356
    %v3893 = vpack.c.b16 %v3365, %v3357
    %v3894 = vpack.c.b16 %v3366, %v3358
    %v3895 = vpack.c.b16 %v3367, %v3359
    %v3896 = vpack.c.b16 %v3368, %v3360
    %v3897 = vpack.c.b16 %v3377, %v3369
    %v3898 = vpack.c.b16 %v3378, %v3370
    %v3899 = vpack.c.b16 %v3379, %v3371
    %v3900 = vpack.c.b16 %v3380, %v3372
    %v3901 = vpack.c.b16 %v3381, %v3373
    %v3902 = vpack.c.b16 %v3382, %v3374
    %v3903 = vpack.c.b16 %v3383, %v3375
    %v3904 = vpack.c.b16 %v3384, %v3376
    %v3905 = vpack.c.b16 %v3393, %v3385
    %v3906 = vpack.c.b16 %v3394, %v3386
    %v3907 = vpack.c.b16 %v3395, %v3387
    %v3908 = vpack.c.b16 %v3396, %v3388
    %v3909 = vpack.c.b16 %v3397, %v3389
    %v3910 = vpack.c.b16 %v3398, %v3390
    %v3911 = vpack.c.b16 %v3399, %v3391
    %v3912 = vpack.c.b16 %v3400, %v3392
    %4425 = vmatpush.bf16.msra.mxu0 %v3457
    %4426 = vmatpush.bf16.msra.mxu0 %v3449
    %4427 = vmatpush.bf16.msra.mxu0 %v3441
    %4428 = vmatpush.bf16.msra.mxu0 %v3433
    %4429 = vmatpush.bf16.msra.mxu0 %v3425
    %4430 = vmatpush.bf16.msra.mxu0 %v3417
    %4431 = vmatpush.bf16.msra.mxu0 %v3409
    %4432 = vmatpush.bf16.msra.mxu0 %v3401
    %4433 = vmatmul.bf16.gmra.mxu0 %v1327
    %v4434 = vpop.f32.mrf.mxu0
    %v4435 = vadd.f32 %v1849, %v4434
    %v4436 = vpop.f32.mrf.mxu0
    %v4437 = vadd.f32 %v1849, %v4436
    %4438 = vdwg.mxu0
    %4439 = vmatpush.bf16.msra.mxu0 %v3521
    %4440 = vmatpush.bf16.msra.mxu0 %v3513
    %4441 = vmatpush.bf16.msra.mxu0 %v3505
    %4442 = vmatpush.bf16.msra.mxu0 %v3497
    %4443 = vmatpush.bf16.msra.mxu0 %v3489
    %4444 = vmatpush.bf16.msra.mxu0 %v3481
    %4445 = vmatpush.bf16.msra.mxu0 %v3473
    %4446 = vmatpush.bf16.msra.mxu0 %v3465
    %4447 = vmatmul.bf16.gmra.mxu0 %v1328
    %v4448 = vpop.f32.mrf.mxu0
    %v4449 = vadd.f32 %v4435, %v4448
    %v4450 = vpop.f32.mrf.mxu0
    %v4451 = vadd.f32 %v4437, %v4450
    %4452 = vdwg.mxu0
    %4453 = vmatpush.bf16.msra.mxu0 %v3585
    %4454 = vmatpush.bf16.msra.mxu0 %v3577
    %4455 = vmatpush.bf16.msra.mxu0 %v3569
    %4456 = vmatpush.bf16.msra.mxu0 %v3561
    %4457 = vmatpush.bf16.msra.mxu0 %v3553
    %4458 = vmatpush.bf16.msra.mxu0 %v3545
    %4459 = vmatpush.bf16.msra.mxu0 %v3537
    %4460 = vmatpush.bf16.msra.mxu0 %v3529
    %4461 = vmatmul.bf16.gmra.mxu0 %v1329
    %v4462 = vpop.f32.mrf.mxu0
    %v4463 = vadd.f32 %v4449, %v4462
    %v4464 = vpop.f32.mrf.mxu0
    %v4465 = vadd.f32 %v4451, %v4464
    %4466 = vdwg.mxu0
    %4467 = vmatpush.bf16.msra.mxu0 %v3649
    %4468 = vmatpush.bf16.msra.mxu0 %v3641
    %4469 = vmatpush.bf16.msra.mxu0 %v3633
    %4470 = vmatpush.bf16.msra.mxu0 %v3625
    %4471 = vmatpush.bf16.msra.mxu0 %v3617
    %4472 = vmatpush.bf16.msra.mxu0 %v3609
    %4473 = vmatpush.bf16.msra.mxu0 %v3601
    %4474 = vmatpush.bf16.msra.mxu0 %v3593
    %4475 = vmatmul.bf16.gmra.mxu0 %v1330
    %v4476 = vpop.f32.mrf.mxu0
    %v4477 = vadd.f32 %v4463, %v4476
    %v4478 = vpop.f32.mrf.mxu0
    %v4479 = vadd.f32 %v4465, %v4478
    %4480 = vdwg.mxu0
    %4481 = vmatpush.bf16.msra.mxu0 %v3713
    %4482 = vmatpush.bf16.msra.mxu0 %v3705
    %4483 = vmatpush.bf16.msra.mxu0 %v3697
    %4484 = vmatpush.bf16.msra.mxu0 %v3689
    %4485 = vmatpush.bf16.msra.mxu0 %v3681
    %4486 = vmatpush.bf16.msra.mxu0 %v3673
    %4487 = vmatpush.bf16.msra.mxu0 %v3665
    %4488 = vmatpush.bf16.msra.mxu0 %v3657
    %4489 = vmatmul.bf16.gmra.mxu0 %v1331
    %v4490 = vpop.f32.mrf.mxu0
    %v4491 = vadd.f32 %v4477, %v4490
    %v4492 = vpop.f32.mrf.mxu0
    %v4493 = vadd.f32 %v4479, %v4492
    %4494 = vdwg.mxu0
    %4495 = vmatpush.bf16.msra.mxu0 %v3777
    %4496 = vmatpush.bf16.msra.mxu0 %v3769
    %4497 = vmatpush.bf16.msra.mxu0 %v3761
    %4498 = vmatpush.bf16.msra.mxu0 %v3753
    %4499 = vmatpush.bf16.msra.mxu0 %v3745
    %4500 = vmatpush.bf16.msra.mxu0 %v3737
    %4501 = vmatpush.bf16.msra.mxu0 %v3729
    %4502 = vmatpush.bf16.msra.mxu0 %v3721
    %4503 = vmatmul.bf16.gmra.mxu0 %v1332
    %v4504 = vpop.f32.mrf.mxu0
    %v4505 = vadd.f32 %v4491, %v4504
    %v4506 = vpop.f32.mrf.mxu0
    %v4507 = vadd.f32 %v4493, %v4506
    %4508 = vdwg.mxu0
    %4509 = vmatpush.bf16.msra.mxu0 %v3841
    %4510 = vmatpush.bf16.msra.mxu0 %v3833
    %4511 = vmatpush.bf16.msra.mxu0 %v3825
    %4512 = vmatpush.bf16.msra.mxu0 %v3817
    %4513 = vmatpush.bf16.msra.mxu0 %v3809
    %4514 = vmatpush.bf16.msra.mxu0 %v3801
    %4515 = vmatpush.bf16.msra.mxu0 %v3793
    %4516 = vmatpush.bf16.msra.mxu0 %v3785
    %4517 = vmatmul.bf16.gmra.mxu0 %v1333
    %v4518 = vpop.f32.mrf.mxu0
    %v4519 = vadd.f32 %v4505, %v4518
    %v4520 = vpop.f32.mrf.mxu0
    %v4521 = vadd.f32 %v4507, %v4520
    %4522 = vdwg.mxu0
    %4523 = vmatpush.bf16.msra.mxu0 %v3905
    %4524 = vmatpush.bf16.msra.mxu0 %v3897
    %4525 = vmatpush.bf16.msra.mxu0 %v3889
    %4526 = vmatpush.bf16.msra.mxu0 %v3881
    %4527 = vmatpush.bf16.msra.mxu0 %v3873
    %4528 = vmatpush.bf16.msra.mxu0 %v3865
    %4529 = vmatpush.bf16.msra.mxu0 %v3857
    %4530 = vmatpush.bf16.msra.mxu0 %v3849
    %4531 = vmatmul.bf16.gmra.mxu0 %v1334
    %v4532 = vpop.f32.mrf.mxu0
    %v4533 = vadd.f32 %v4519, %v4532
    %v4534 = vpop.f32.mrf.mxu0
    %v4535 = vadd.f32 %v4521, %v4534
    %4536 = vdwg.mxu0
    %4537 = vmatpush.bf16.msra.mxu0 %v3458
    %4538 = vmatpush.bf16.msra.mxu0 %v3450
    %4539 = vmatpush.bf16.msra.mxu0 %v3442
    %4540 = vmatpush.bf16.msra.mxu0 %v3434
    %4541 = vmatpush.bf16.msra.mxu0 %v3426
    %4542 = vmatpush.bf16.msra.mxu0 %v3418
    %4543 = vmatpush.bf16.msra.mxu0 %v3410
    %4544 = vmatpush.bf16.msra.mxu0 %v3402
    %4545 = vmatmul.bf16.gmra.mxu0 %v1327
    %v4546 = vpop.f32.mrf.mxu0
    %v4547 = vadd.f32 %v1850, %v4546
    %v4548 = vpop.f32.mrf.mxu0
    %v4549 = vadd.f32 %v1850, %v4548
    %4550 = vdwg.mxu0
    %4551 = vmatpush.bf16.msra.mxu0 %v3522
    %4552 = vmatpush.bf16.msra.mxu0 %v3514
    %4553 = vmatpush.bf16.msra.mxu0 %v3506
    %4554 = vmatpush.bf16.msra.mxu0 %v3498
    %4555 = vmatpush.bf16.msra.mxu0 %v3490
    %4556 = vmatpush.bf16.msra.mxu0 %v3482
    %4557 = vmatpush.bf16.msra.mxu0 %v3474
    %4558 = vmatpush.bf16.msra.mxu0 %v3466
    %4559 = vmatmul.bf16.gmra.mxu0 %v1328
    %v4560 = vpop.f32.mrf.mxu0
    %v4561 = vadd.f32 %v4547, %v4560
    %v4562 = vpop.f32.mrf.mxu0
    %v4563 = vadd.f32 %v4549, %v4562
    %4564 = vdwg.mxu0
    %4565 = vmatpush.bf16.msra.mxu0 %v3586
    %4566 = vmatpush.bf16.msra.mxu0 %v3578
    %4567 = vmatpush.bf16.msra.mxu0 %v3570
    %4568 = vmatpush.bf16.msra.mxu0 %v3562
    %4569 = vmatpush.bf16.msra.mxu0 %v3554
    %4570 = vmatpush.bf16.msra.mxu0 %v3546
    %4571 = vmatpush.bf16.msra.mxu0 %v3538
    %4572 = vmatpush.bf16.msra.mxu0 %v3530
    %4573 = vmatmul.bf16.gmra.mxu0 %v1329
    %v4574 = vpop.f32.mrf.mxu0
    %v4575 = vadd.f32 %v4561, %v4574
    %v4576 = vpop.f32.mrf.mxu0
    %v4577 = vadd.f32 %v4563, %v4576
    %4578 = vdwg.mxu0
    %4579 = vmatpush.bf16.msra.mxu0 %v3650
    %4580 = vmatpush.bf16.msra.mxu0 %v3642
    %4581 = vmatpush.bf16.msra.mxu0 %v3634
    %4582 = vmatpush.bf16.msra.mxu0 %v3626
    %4583 = vmatpush.bf16.msra.mxu0 %v3618
    %4584 = vmatpush.bf16.msra.mxu0 %v3610
    %4585 = vmatpush.bf16.msra.mxu0 %v3602
    %4586 = vmatpush.bf16.msra.mxu0 %v3594
    %4587 = vmatmul.bf16.gmra.mxu0 %v1330
    %v4588 = vpop.f32.mrf.mxu0
    %v4589 = vadd.f32 %v4575, %v4588
    %v4590 = vpop.f32.mrf.mxu0
    %v4591 = vadd.f32 %v4577, %v4590
    %4592 = vdwg.mxu0
    %4593 = vmatpush.bf16.msra.mxu0 %v3714
    %4594 = vmatpush.bf16.msra.mxu0 %v3706
    %4595 = vmatpush.bf16.msra.mxu0 %v3698
    %4596 = vmatpush.bf16.msra.mxu0 %v3690
    %4597 = vmatpush.bf16.msra.mxu0 %v3682
    %4598 = vmatpush.bf16.msra.mxu0 %v3674
    %4599 = vmatpush.bf16.msra.mxu0 %v3666
    %4600 = vmatpush.bf16.msra.mxu0 %v3658
    %4601 = vmatmul.bf16.gmra.mxu0 %v1331
    %v4602 = vpop.f32.mrf.mxu0
    %v4603 = vadd.f32 %v4589, %v4602
    %v4604 = vpop.f32.mrf.mxu0
    %v4605 = vadd.f32 %v4591, %v4604
    %4606 = vdwg.mxu0
    %4607 = vmatpush.bf16.msra.mxu0 %v3778
    %4608 = vmatpush.bf16.msra.mxu0 %v3770
    %4609 = vmatpush.bf16.msra.mxu0 %v3762
    %4610 = vmatpush.bf16.msra.mxu0 %v3754
    %4611 = vmatpush.bf16.msra.mxu0 %v3746
    %4612 = vmatpush.bf16.msra.mxu0 %v3738
    %4613 = vmatpush.bf16.msra.mxu0 %v3730
    %4614 = vmatpush.bf16.msra.mxu0 %v3722
    %4615 = vmatmul.bf16.gmra.mxu0 %v1332
    %v4616 = vpop.f32.mrf.mxu0
    %v4617 = vadd.f32 %v4603, %v4616
    %v4618 = vpop.f32.mrf.mxu0
    %v4619 = vadd.f32 %v4605, %v4618
    %4620 = vdwg.mxu0
    %4621 = vmatpush.bf16.msra.mxu0 %v3842
    %4622 = vmatpush.bf16.msra.mxu0 %v3834
    %4623 = vmatpush.bf16.msra.mxu0 %v3826
    %4624 = vmatpush.bf16.msra.mxu0 %v3818
    %4625 = vmatpush.bf16.msra.mxu0 %v3810
    %4626 = vmatpush.bf16.msra.mxu0 %v3802
    %4627 = vmatpush.bf16.msra.mxu0 %v3794
    %4628 = vmatpush.bf16.msra.mxu0 %v3786
    %4629 = vmatmul.bf16.gmra.mxu0 %v1333
    %v4630 = vpop.f32.mrf.mxu0
    %v4631 = vadd.f32 %v4617, %v4630
    %v4632 = vpop.f32.mrf.mxu0
    %v4633 = vadd.f32 %v4619, %v4632
    %4634 = vdwg.mxu0
    %4635 = vmatpush.bf16.msra.mxu0 %v3906
    %4636 = vmatpush.bf16.msra.mxu0 %v3898
    %4637 = vmatpush.bf16.msra.mxu0 %v3890
    %4638 = vmatpush.bf16.msra.mxu0 %v3882
    %4639 = vmatpush.bf16.msra.mxu0 %v3874
    %4640 = vmatpush.bf16.msra.mxu0 %v3866
    %4641 = vmatpush.bf16.msra.mxu0 %v3858
    %4642 = vmatpush.bf16.msra.mxu0 %v3850
    %4643 = vmatmul.bf16.gmra.mxu0 %v1334
    %v4644 = vpop.f32.mrf.mxu0
    %v4645 = vadd.f32 %v4631, %v4644
    %v4646 = vpop.f32.mrf.mxu0
    %v4647 = vadd.f32 %v4633, %v4646
    %4648 = vdwg.mxu0
    %4649 = vmatpush.bf16.msra.mxu0 %v3459
    %4650 = vmatpush.bf16.msra.mxu0 %v3451
    %4651 = vmatpush.bf16.msra.mxu0 %v3443
    %4652 = vmatpush.bf16.msra.mxu0 %v3435
    %4653 = vmatpush.bf16.msra.mxu0 %v3427
    %4654 = vmatpush.bf16.msra.mxu0 %v3419
    %4655 = vmatpush.bf16.msra.mxu0 %v3411
    %4656 = vmatpush.bf16.msra.mxu0 %v3403
    %4657 = vmatmul.bf16.gmra.mxu0 %v1327
    %v4658 = vpop.f32.mrf.mxu0
    %v4659 = vadd.f32 %v1851, %v4658
    %v4660 = vpop.f32.mrf.mxu0
    %v4661 = vadd.f32 %v1851, %v4660
    %4662 = vdwg.mxu0
    %4663 = vmatpush.bf16.msra.mxu0 %v3523
    %4664 = vmatpush.bf16.msra.mxu0 %v3515
    %4665 = vmatpush.bf16.msra.mxu0 %v3507
    %4666 = vmatpush.bf16.msra.mxu0 %v3499
    %4667 = vmatpush.bf16.msra.mxu0 %v3491
    %4668 = vmatpush.bf16.msra.mxu0 %v3483
    %4669 = vmatpush.bf16.msra.mxu0 %v3475
    %4670 = vmatpush.bf16.msra.mxu0 %v3467
    %4671 = vmatmul.bf16.gmra.mxu0 %v1328
    %v4672 = vpop.f32.mrf.mxu0
    %v4673 = vadd.f32 %v4659, %v4672
    %v4674 = vpop.f32.mrf.mxu0
    %v4675 = vadd.f32 %v4661, %v4674
    %4676 = vdwg.mxu0
    %4677 = vmatpush.bf16.msra.mxu0 %v3587
    %4678 = vmatpush.bf16.msra.mxu0 %v3579
    %4679 = vmatpush.bf16.msra.mxu0 %v3571
    %4680 = vmatpush.bf16.msra.mxu0 %v3563
    %4681 = vmatpush.bf16.msra.mxu0 %v3555
    %4682 = vmatpush.bf16.msra.mxu0 %v3547
    %4683 = vmatpush.bf16.msra.mxu0 %v3539
    %4684 = vmatpush.bf16.msra.mxu0 %v3531
    %4685 = vmatmul.bf16.gmra.mxu0 %v1329
    %v4686 = vpop.f32.mrf.mxu0
    %v4687 = vadd.f32 %v4673, %v4686
    %v4688 = vpop.f32.mrf.mxu0
    %v4689 = vadd.f32 %v4675, %v4688
    %4690 = vdwg.mxu0
    %4691 = vmatpush.bf16.msra.mxu0 %v3651
    %4692 = vmatpush.bf16.msra.mxu0 %v3643
    %4693 = vmatpush.bf16.msra.mxu0 %v3635
    %4694 = vmatpush.bf16.msra.mxu0 %v3627
    %4695 = vmatpush.bf16.msra.mxu0 %v3619
    %4696 = vmatpush.bf16.msra.mxu0 %v3611
    %4697 = vmatpush.bf16.msra.mxu0 %v3603
    %4698 = vmatpush.bf16.msra.mxu0 %v3595
    %4699 = vmatmul.bf16.gmra.mxu0 %v1330
    %v4700 = vpop.f32.mrf.mxu0
    %v4701 = vadd.f32 %v4687, %v4700
    %v4702 = vpop.f32.mrf.mxu0
    %v4703 = vadd.f32 %v4689, %v4702
    %4704 = vdwg.mxu0
    %4705 = vmatpush.bf16.msra.mxu0 %v3715
    %4706 = vmatpush.bf16.msra.mxu0 %v3707
    %4707 = vmatpush.bf16.msra.mxu0 %v3699
    %4708 = vmatpush.bf16.msra.mxu0 %v3691
    %4709 = vmatpush.bf16.msra.mxu0 %v3683
    %4710 = vmatpush.bf16.msra.mxu0 %v3675
    %4711 = vmatpush.bf16.msra.mxu0 %v3667
    %4712 = vmatpush.bf16.msra.mxu0 %v3659
    %4713 = vmatmul.bf16.gmra.mxu0 %v1331
    %v4714 = vpop.f32.mrf.mxu0
    %v4715 = vadd.f32 %v4701, %v4714
    %v4716 = vpop.f32.mrf.mxu0
    %v4717 = vadd.f32 %v4703, %v4716
    %4718 = vdwg.mxu0
    %4719 = vmatpush.bf16.msra.mxu0 %v3779
    %4720 = vmatpush.bf16.msra.mxu0 %v3771
    %4721 = vmatpush.bf16.msra.mxu0 %v3763
    %4722 = vmatpush.bf16.msra.mxu0 %v3755
    %4723 = vmatpush.bf16.msra.mxu0 %v3747
    %4724 = vmatpush.bf16.msra.mxu0 %v3739
    %4725 = vmatpush.bf16.msra.mxu0 %v3731
    %4726 = vmatpush.bf16.msra.mxu0 %v3723
    %4727 = vmatmul.bf16.gmra.mxu0 %v1332
    %v4728 = vpop.f32.mrf.mxu0
    %v4729 = vadd.f32 %v4715, %v4728
    %v4730 = vpop.f32.mrf.mxu0
    %v4731 = vadd.f32 %v4717, %v4730
    %4732 = vdwg.mxu0
    %4733 = vmatpush.bf16.msra.mxu0 %v3843
    %4734 = vmatpush.bf16.msra.mxu0 %v3835
    %4735 = vmatpush.bf16.msra.mxu0 %v3827
    %4736 = vmatpush.bf16.msra.mxu0 %v3819
    %4737 = vmatpush.bf16.msra.mxu0 %v3811
    %4738 = vmatpush.bf16.msra.mxu0 %v3803
    %4739 = vmatpush.bf16.msra.mxu0 %v3795
    %4740 = vmatpush.bf16.msra.mxu0 %v3787
    %4741 = vmatmul.bf16.gmra.mxu0 %v1333
    %v4742 = vpop.f32.mrf.mxu0
    %v4743 = vadd.f32 %v4729, %v4742
    %v4744 = vpop.f32.mrf.mxu0
    %v4745 = vadd.f32 %v4731, %v4744
    %4746 = vdwg.mxu0
    %4747 = vmatpush.bf16.msra.mxu0 %v3907
    %4748 = vmatpush.bf16.msra.mxu0 %v3899
    %4749 = vmatpush.bf16.msra.mxu0 %v3891
    %4750 = vmatpush.bf16.msra.mxu0 %v3883
    %4751 = vmatpush.bf16.msra.mxu0 %v3875
    %4752 = vmatpush.bf16.msra.mxu0 %v3867
    %4753 = vmatpush.bf16.msra.mxu0 %v3859
    %4754 = vmatpush.bf16.msra.mxu0 %v3851
    %4755 = vmatmul.bf16.gmra.mxu0 %v1334
    %v4756 = vpop.f32.mrf.mxu0
    %v4757 = vadd.f32 %v4743, %v4756
    %v4758 = vpop.f32.mrf.mxu0
    %v4759 = vadd.f32 %v4745, %v4758
    %4760 = vdwg.mxu0
    %4761 = vmatpush.bf16.msra.mxu0 %v3460
    %4762 = vmatpush.bf16.msra.mxu0 %v3452
    %4763 = vmatpush.bf16.msra.mxu0 %v3444
    %4764 = vmatpush.bf16.msra.mxu0 %v3436
    %4765 = vmatpush.bf16.msra.mxu0 %v3428
    %4766 = vmatpush.bf16.msra.mxu0 %v3420
    %4767 = vmatpush.bf16.msra.mxu0 %v3412
    %4768 = vmatpush.bf16.msra.mxu0 %v3404
    %4769 = vmatmul.bf16.gmra.mxu0 %v1327
    %v4770 = vpop.f32.mrf.mxu0
    %v4771 = vadd.f32 %v1852, %v4770
    %v4772 = vpop.f32.mrf.mxu0
    %v4773 = vadd.f32 %v1852, %v4772
    %4774 = vdwg.mxu0
    %4775 = vmatpush.bf16.msra.mxu0 %v3524
    %4776 = vmatpush.bf16.msra.mxu0 %v3516
    %4777 = vmatpush.bf16.msra.mxu0 %v3508
    %4778 = vmatpush.bf16.msra.mxu0 %v3500
    %4779 = vmatpush.bf16.msra.mxu0 %v3492
    %4780 = vmatpush.bf16.msra.mxu0 %v3484
    %4781 = vmatpush.bf16.msra.mxu0 %v3476
    %4782 = vmatpush.bf16.msra.mxu0 %v3468
    %4783 = vmatmul.bf16.gmra.mxu0 %v1328
    %v4784 = vpop.f32.mrf.mxu0
    %v4785 = vadd.f32 %v4771, %v4784
    %v4786 = vpop.f32.mrf.mxu0
    %v4787 = vadd.f32 %v4773, %v4786
    %4788 = vdwg.mxu0
    %4789 = vmatpush.bf16.msra.mxu0 %v3588
    %4790 = vmatpush.bf16.msra.mxu0 %v3580
    %4791 = vmatpush.bf16.msra.mxu0 %v3572
    %4792 = vmatpush.bf16.msra.mxu0 %v3564
    %4793 = vmatpush.bf16.msra.mxu0 %v3556
    %4794 = vmatpush.bf16.msra.mxu0 %v3548
    %4795 = vmatpush.bf16.msra.mxu0 %v3540
    %4796 = vmatpush.bf16.msra.mxu0 %v3532
    %4797 = vmatmul.bf16.gmra.mxu0 %v1329
    %v4798 = vpop.f32.mrf.mxu0
    %v4799 = vadd.f32 %v4785, %v4798
    %v4800 = vpop.f32.mrf.mxu0
    %v4801 = vadd.f32 %v4787, %v4800
    %4802 = vdwg.mxu0
    %4803 = vmatpush.bf16.msra.mxu0 %v3652
    %4804 = vmatpush.bf16.msra.mxu0 %v3644
    %4805 = vmatpush.bf16.msra.mxu0 %v3636
    %4806 = vmatpush.bf16.msra.mxu0 %v3628
    %4807 = vmatpush.bf16.msra.mxu0 %v3620
    %4808 = vmatpush.bf16.msra.mxu0 %v3612
    %4809 = vmatpush.bf16.msra.mxu0 %v3604
    %4810 = vmatpush.bf16.msra.mxu0 %v3596
    %4811 = vmatmul.bf16.gmra.mxu0 %v1330
    %v4812 = vpop.f32.mrf.mxu0
    %v4813 = vadd.f32 %v4799, %v4812
    %v4814 = vpop.f32.mrf.mxu0
    %v4815 = vadd.f32 %v4801, %v4814
    %4816 = vdwg.mxu0
    %4817 = vmatpush.bf16.msra.mxu0 %v3716
    %4818 = vmatpush.bf16.msra.mxu0 %v3708
    %4819 = vmatpush.bf16.msra.mxu0 %v3700
    %4820 = vmatpush.bf16.msra.mxu0 %v3692
    %4821 = vmatpush.bf16.msra.mxu0 %v3684
    %4822 = vmatpush.bf16.msra.mxu0 %v3676
    %4823 = vmatpush.bf16.msra.mxu0 %v3668
    %4824 = vmatpush.bf16.msra.mxu0 %v3660
    %4825 = vmatmul.bf16.gmra.mxu0 %v1331
    %v4826 = vpop.f32.mrf.mxu0
    %v4827 = vadd.f32 %v4813, %v4826
    %v4828 = vpop.f32.mrf.mxu0
    %v4829 = vadd.f32 %v4815, %v4828
    %4830 = vdwg.mxu0
    %4831 = vmatpush.bf16.msra.mxu0 %v3780
    %4832 = vmatpush.bf16.msra.mxu0 %v3772
    %4833 = vmatpush.bf16.msra.mxu0 %v3764
    %4834 = vmatpush.bf16.msra.mxu0 %v3756
    %4835 = vmatpush.bf16.msra.mxu0 %v3748
    %4836 = vmatpush.bf16.msra.mxu0 %v3740
    %4837 = vmatpush.bf16.msra.mxu0 %v3732
    %4838 = vmatpush.bf16.msra.mxu0 %v3724
    %4839 = vmatmul.bf16.gmra.mxu0 %v1332
    %v4840 = vpop.f32.mrf.mxu0
    %v4841 = vadd.f32 %v4827, %v4840
    %v4842 = vpop.f32.mrf.mxu0
    %v4843 = vadd.f32 %v4829, %v4842
    %4844 = vdwg.mxu0
    %4845 = vmatpush.bf16.msra.mxu0 %v3844
    %4846 = vmatpush.bf16.msra.mxu0 %v3836
    %4847 = vmatpush.bf16.msra.mxu0 %v3828
    %4848 = vmatpush.bf16.msra.mxu0 %v3820
    %4849 = vmatpush.bf16.msra.mxu0 %v3812
    %4850 = vmatpush.bf16.msra.mxu0 %v3804
    %4851 = vmatpush.bf16.msra.mxu0 %v3796
    %4852 = vmatpush.bf16.msra.mxu0 %v3788
    %4853 = vmatmul.bf16.gmra.mxu0 %v1333
    %v4854 = vpop.f32.mrf.mxu0
    %v4855 = vadd.f32 %v4841, %v4854
    %v4856 = vpop.f32.mrf.mxu0
    %v4857 = vadd.f32 %v4843, %v4856
    %4858 = vdwg.mxu0
    %4859 = vmatpush.bf16.msra.mxu0 %v3908
    %4860 = vmatpush.bf16.msra.mxu0 %v3900
    %4861 = vmatpush.bf16.msra.mxu0 %v3892
    %4862 = vmatpush.bf16.msra.mxu0 %v3884
    %4863 = vmatpush.bf16.msra.mxu0 %v3876
    %4864 = vmatpush.bf16.msra.mxu0 %v3868
    %4865 = vmatpush.bf16.msra.mxu0 %v3860
    %4866 = vmatpush.bf16.msra.mxu0 %v3852
    %4867 = vmatmul.bf16.gmra.mxu0 %v1334
    %v4868 = vpop.f32.mrf.mxu0
    %v4869 = vadd.f32 %v4855, %v4868
    %v4870 = vpop.f32.mrf.mxu0
    %v4871 = vadd.f32 %v4857, %v4870
    %4872 = vdwg.mxu0
    %4873 = vmatpush.bf16.msra.mxu0 %v3461
    %4874 = vmatpush.bf16.msra.mxu0 %v3453
    %4875 = vmatpush.bf16.msra.mxu0 %v3445
    %4876 = vmatpush.bf16.msra.mxu0 %v3437
    %4877 = vmatpush.bf16.msra.mxu0 %v3429
    %4878 = vmatpush.bf16.msra.mxu0 %v3421
    %4879 = vmatpush.bf16.msra.mxu0 %v3413
    %4880 = vmatpush.bf16.msra.mxu0 %v3405
    %4881 = vmatmul.bf16.gmra.mxu0 %v1327
    %v4882 = vpop.f32.mrf.mxu0
    %v4883 = vadd.f32 %v1853, %v4882
    %v4884 = vpop.f32.mrf.mxu0
    %v4885 = vadd.f32 %v1853, %v4884
    %4886 = vdwg.mxu0
    %4887 = vmatpush.bf16.msra.mxu0 %v3525
    %4888 = vmatpush.bf16.msra.mxu0 %v3517
    %4889 = vmatpush.bf16.msra.mxu0 %v3509
    %4890 = vmatpush.bf16.msra.mxu0 %v3501
    %4891 = vmatpush.bf16.msra.mxu0 %v3493
    %4892 = vmatpush.bf16.msra.mxu0 %v3485
    %4893 = vmatpush.bf16.msra.mxu0 %v3477
    %4894 = vmatpush.bf16.msra.mxu0 %v3469
    %4895 = vmatmul.bf16.gmra.mxu0 %v1328
    %v4896 = vpop.f32.mrf.mxu0
    %v4897 = vadd.f32 %v4883, %v4896
    %v4898 = vpop.f32.mrf.mxu0
    %v4899 = vadd.f32 %v4885, %v4898
    %4900 = vdwg.mxu0
    %4901 = vmatpush.bf16.msra.mxu0 %v3589
    %4902 = vmatpush.bf16.msra.mxu0 %v3581
    %4903 = vmatpush.bf16.msra.mxu0 %v3573
    %4904 = vmatpush.bf16.msra.mxu0 %v3565
    %4905 = vmatpush.bf16.msra.mxu0 %v3557
    %4906 = vmatpush.bf16.msra.mxu0 %v3549
    %4907 = vmatpush.bf16.msra.mxu0 %v3541
    %4908 = vmatpush.bf16.msra.mxu0 %v3533
    %4909 = vmatmul.bf16.gmra.mxu0 %v1329
    %v4910 = vpop.f32.mrf.mxu0
    %v4911 = vadd.f32 %v4897, %v4910
    %v4912 = vpop.f32.mrf.mxu0
    %v4913 = vadd.f32 %v4899, %v4912
    %4914 = vdwg.mxu0
    %4915 = vmatpush.bf16.msra.mxu0 %v3653
    %4916 = vmatpush.bf16.msra.mxu0 %v3645
    %4917 = vmatpush.bf16.msra.mxu0 %v3637
    %4918 = vmatpush.bf16.msra.mxu0 %v3629
    %4919 = vmatpush.bf16.msra.mxu0 %v3621
    %4920 = vmatpush.bf16.msra.mxu0 %v3613
    %4921 = vmatpush.bf16.msra.mxu0 %v3605
    %4922 = vmatpush.bf16.msra.mxu0 %v3597
    %4923 = vmatmul.bf16.gmra.mxu0 %v1330
    %v4924 = vpop.f32.mrf.mxu0
    %v4925 = vadd.f32 %v4911, %v4924
    %v4926 = vpop.f32.mrf.mxu0
    %v4927 = vadd.f32 %v4913, %v4926
    %4928 = vdwg.mxu0
    %4929 = vmatpush.bf16.msra.mxu0 %v3717
    %4930 = vmatpush.bf16.msra.mxu0 %v3709
    %4931 = vmatpush.bf16.msra.mxu0 %v3701
    %4932 = vmatpush.bf16.msra.mxu0 %v3693
    %4933 = vmatpush.bf16.msra.mxu0 %v3685
    %4934 = vmatpush.bf16.msra.mxu0 %v3677
    %4935 = vmatpush.bf16.msra.mxu0 %v3669
    %4936 = vmatpush.bf16.msra.mxu0 %v3661
    %4937 = vmatmul.bf16.gmra.mxu0 %v1331
    %v4938 = vpop.f32.mrf.mxu0
    %v4939 = vadd.f32 %v4925, %v4938
    %v4940 = vpop.f32.mrf.mxu0
    %v4941 = vadd.f32 %v4927, %v4940
    %4942 = vdwg.mxu0
    %4943 = vmatpush.bf16.msra.mxu0 %v3781
    %4944 = vmatpush.bf16.msra.mxu0 %v3773
    %4945 = vmatpush.bf16.msra.mxu0 %v3765
    %4946 = vmatpush.bf16.msra.mxu0 %v3757
    %4947 = vmatpush.bf16.msra.mxu0 %v3749
    %4948 = vmatpush.bf16.msra.mxu0 %v3741
    %4949 = vmatpush.bf16.msra.mxu0 %v3733
    %4950 = vmatpush.bf16.msra.mxu0 %v3725
    %4951 = vmatmul.bf16.gmra.mxu0 %v1332
    %v4952 = vpop.f32.mrf.mxu0
    %v4953 = vadd.f32 %v4939, %v4952
    %v4954 = vpop.f32.mrf.mxu0
    %v4955 = vadd.f32 %v4941, %v4954
    %4956 = vdwg.mxu0
    %4957 = vmatpush.bf16.msra.mxu0 %v3845
    %4958 = vmatpush.bf16.msra.mxu0 %v3837
    %4959 = vmatpush.bf16.msra.mxu0 %v3829
    %4960 = vmatpush.bf16.msra.mxu0 %v3821
    %4961 = vmatpush.bf16.msra.mxu0 %v3813
    %4962 = vmatpush.bf16.msra.mxu0 %v3805
    %4963 = vmatpush.bf16.msra.mxu0 %v3797
    %4964 = vmatpush.bf16.msra.mxu0 %v3789
    %4965 = vmatmul.bf16.gmra.mxu0 %v1333
    %v4966 = vpop.f32.mrf.mxu0
    %v4967 = vadd.f32 %v4953, %v4966
    %v4968 = vpop.f32.mrf.mxu0
    %v4969 = vadd.f32 %v4955, %v4968
    %4970 = vdwg.mxu0
    %4971 = vmatpush.bf16.msra.mxu0 %v3909
    %4972 = vmatpush.bf16.msra.mxu0 %v3901
    %4973 = vmatpush.bf16.msra.mxu0 %v3893
    %4974 = vmatpush.bf16.msra.mxu0 %v3885
    %4975 = vmatpush.bf16.msra.mxu0 %v3877
    %4976 = vmatpush.bf16.msra.mxu0 %v3869
    %4977 = vmatpush.bf16.msra.mxu0 %v3861
    %4978 = vmatpush.bf16.msra.mxu0 %v3853
    %4979 = vmatmul.bf16.gmra.mxu0 %v1334
    %v4980 = vpop.f32.mrf.mxu0
    %v4981 = vadd.f32 %v4967, %v4980
    %v4982 = vpop.f32.mrf.mxu0
    %v4983 = vadd.f32 %v4969, %v4982
    %4984 = vdwg.mxu0
    %4985 = vmatpush.bf16.msra.mxu0 %v3462
    %4986 = vmatpush.bf16.msra.mxu0 %v3454
    %4987 = vmatpush.bf16.msra.mxu0 %v3446
    %4988 = vmatpush.bf16.msra.mxu0 %v3438
    %4989 = vmatpush.bf16.msra.mxu0 %v3430
    %4990 = vmatpush.bf16.msra.mxu0 %v3422
    %4991 = vmatpush.bf16.msra.mxu0 %v3414
    %4992 = vmatpush.bf16.msra.mxu0 %v3406
    %4993 = vmatmul.bf16.gmra.mxu0 %v1327
    %v4994 = vpop.f32.mrf.mxu0
    %v4995 = vadd.f32 %v1854, %v4994
    %v4996 = vpop.f32.mrf.mxu0
    %v4997 = vadd.f32 %v1854, %v4996
    %4998 = vdwg.mxu0
    %4999 = vmatpush.bf16.msra.mxu0 %v3526
    %5000 = vmatpush.bf16.msra.mxu0 %v3518
    %5001 = vmatpush.bf16.msra.mxu0 %v3510
    %5002 = vmatpush.bf16.msra.mxu0 %v3502
    %5003 = vmatpush.bf16.msra.mxu0 %v3494
    %5004 = vmatpush.bf16.msra.mxu0 %v3486
    %5005 = vmatpush.bf16.msra.mxu0 %v3478
    %5006 = vmatpush.bf16.msra.mxu0 %v3470
    %5007 = vmatmul.bf16.gmra.mxu0 %v1328
    %v5008 = vpop.f32.mrf.mxu0
    %v5009 = vadd.f32 %v4995, %v5008
    %v5010 = vpop.f32.mrf.mxu0
    %v5011 = vadd.f32 %v4997, %v5010
    %5012 = vdwg.mxu0
    %5013 = vmatpush.bf16.msra.mxu0 %v3590
    %5014 = vmatpush.bf16.msra.mxu0 %v3582
    %5015 = vmatpush.bf16.msra.mxu0 %v3574
    %5016 = vmatpush.bf16.msra.mxu0 %v3566
    %5017 = vmatpush.bf16.msra.mxu0 %v3558
    %5018 = vmatpush.bf16.msra.mxu0 %v3550
    %5019 = vmatpush.bf16.msra.mxu0 %v3542
    %5020 = vmatpush.bf16.msra.mxu0 %v3534
    %5021 = vmatmul.bf16.gmra.mxu0 %v1329
    %v5022 = vpop.f32.mrf.mxu0
    %v5023 = vadd.f32 %v5009, %v5022
    %v5024 = vpop.f32.mrf.mxu0
    %v5025 = vadd.f32 %v5011, %v5024
    %5026 = vdwg.mxu0
    %5027 = vmatpush.bf16.msra.mxu0 %v3654
    %5028 = vmatpush.bf16.msra.mxu0 %v3646
    %5029 = vmatpush.bf16.msra.mxu0 %v3638
    %5030 = vmatpush.bf16.msra.mxu0 %v3630
    %5031 = vmatpush.bf16.msra.mxu0 %v3622
    %5032 = vmatpush.bf16.msra.mxu0 %v3614
    %5033 = vmatpush.bf16.msra.mxu0 %v3606
    %5034 = vmatpush.bf16.msra.mxu0 %v3598
    %5035 = vmatmul.bf16.gmra.mxu0 %v1330
    %v5036 = vpop.f32.mrf.mxu0
    %v5037 = vadd.f32 %v5023, %v5036
    %v5038 = vpop.f32.mrf.mxu0
    %v5039 = vadd.f32 %v5025, %v5038
    %5040 = vdwg.mxu0
    %5041 = vmatpush.bf16.msra.mxu0 %v3718
    %5042 = vmatpush.bf16.msra.mxu0 %v3710
    %5043 = vmatpush.bf16.msra.mxu0 %v3702
    %5044 = vmatpush.bf16.msra.mxu0 %v3694
    %5045 = vmatpush.bf16.msra.mxu0 %v3686
    %5046 = vmatpush.bf16.msra.mxu0 %v3678
    %5047 = vmatpush.bf16.msra.mxu0 %v3670
    %5048 = vmatpush.bf16.msra.mxu0 %v3662
    %5049 = vmatmul.bf16.gmra.mxu0 %v1331
    %v5050 = vpop.f32.mrf.mxu0
    %v5051 = vadd.f32 %v5037, %v5050
    %v5052 = vpop.f32.mrf.mxu0
    %v5053 = vadd.f32 %v5039, %v5052
    %5054 = vdwg.mxu0
    %5055 = vmatpush.bf16.msra.mxu0 %v3782
    %5056 = vmatpush.bf16.msra.mxu0 %v3774
    %5057 = vmatpush.bf16.msra.mxu0 %v3766
    %5058 = vmatpush.bf16.msra.mxu0 %v3758
    %5059 = vmatpush.bf16.msra.mxu0 %v3750
    %5060 = vmatpush.bf16.msra.mxu0 %v3742
    %5061 = vmatpush.bf16.msra.mxu0 %v3734
    %5062 = vmatpush.bf16.msra.mxu0 %v3726
    %5063 = vmatmul.bf16.gmra.mxu0 %v1332
    %v5064 = vpop.f32.mrf.mxu0
    %v5065 = vadd.f32 %v5051, %v5064
    %v5066 = vpop.f32.mrf.mxu0
    %v5067 = vadd.f32 %v5053, %v5066
    %5068 = vdwg.mxu0
    %5069 = vmatpush.bf16.msra.mxu0 %v3846
    %5070 = vmatpush.bf16.msra.mxu0 %v3838
    %5071 = vmatpush.bf16.msra.mxu0 %v3830
    %5072 = vmatpush.bf16.msra.mxu0 %v3822
    %5073 = vmatpush.bf16.msra.mxu0 %v3814
    %5074 = vmatpush.bf16.msra.mxu0 %v3806
    %5075 = vmatpush.bf16.msra.mxu0 %v3798
    %5076 = vmatpush.bf16.msra.mxu0 %v3790
    %5077 = vmatmul.bf16.gmra.mxu0 %v1333
    %v5078 = vpop.f32.mrf.mxu0
    %v5079 = vadd.f32 %v5065, %v5078
    %v5080 = vpop.f32.mrf.mxu0
    %v5081 = vadd.f32 %v5067, %v5080
    %5082 = vdwg.mxu0
    %5083 = vmatpush.bf16.msra.mxu0 %v3910
    %5084 = vmatpush.bf16.msra.mxu0 %v3902
    %5085 = vmatpush.bf16.msra.mxu0 %v3894
    %5086 = vmatpush.bf16.msra.mxu0 %v3886
    %5087 = vmatpush.bf16.msra.mxu0 %v3878
    %5088 = vmatpush.bf16.msra.mxu0 %v3870
    %5089 = vmatpush.bf16.msra.mxu0 %v3862
    %5090 = vmatpush.bf16.msra.mxu0 %v3854
    %5091 = vmatmul.bf16.gmra.mxu0 %v1334
    %v5092 = vpop.f32.mrf.mxu0
    %v5093 = vadd.f32 %v5079, %v5092
    %v5094 = vpop.f32.mrf.mxu0
    %v5095 = vadd.f32 %v5081, %v5094
    %5096 = vdwg.mxu0
    %5097 = vmatpush.bf16.msra.mxu0 %v3463
    %5098 = vmatpush.bf16.msra.mxu0 %v3455
    %5099 = vmatpush.bf16.msra.mxu0 %v3447
    %5100 = vmatpush.bf16.msra.mxu0 %v3439
    %5101 = vmatpush.bf16.msra.mxu0 %v3431
    %5102 = vmatpush.bf16.msra.mxu0 %v3423
    %5103 = vmatpush.bf16.msra.mxu0 %v3415
    %5104 = vmatpush.bf16.msra.mxu0 %v3407
    %5105 = vmatmul.bf16.gmra.mxu0 %v1327
    %v5106 = vpop.f32.mrf.mxu0
    %v5107 = vadd.f32 %v1855, %v5106
    %v5108 = vpop.f32.mrf.mxu0
    %v5109 = vadd.f32 %v1855, %v5108
    %5110 = vdwg.mxu0
    %5111 = vmatpush.bf16.msra.mxu0 %v3527
    %5112 = vmatpush.bf16.msra.mxu0 %v3519
    %5113 = vmatpush.bf16.msra.mxu0 %v3511
    %5114 = vmatpush.bf16.msra.mxu0 %v3503
    %5115 = vmatpush.bf16.msra.mxu0 %v3495
    %5116 = vmatpush.bf16.msra.mxu0 %v3487
    %5117 = vmatpush.bf16.msra.mxu0 %v3479
    %5118 = vmatpush.bf16.msra.mxu0 %v3471
    %5119 = vmatmul.bf16.gmra.mxu0 %v1328
    %v5120 = vpop.f32.mrf.mxu0
    %v5121 = vadd.f32 %v5107, %v5120
    %v5122 = vpop.f32.mrf.mxu0
    %v5123 = vadd.f32 %v5109, %v5122
    %5124 = vdwg.mxu0
    %5125 = vmatpush.bf16.msra.mxu0 %v3591
    %5126 = vmatpush.bf16.msra.mxu0 %v3583
    %5127 = vmatpush.bf16.msra.mxu0 %v3575
    %5128 = vmatpush.bf16.msra.mxu0 %v3567
    %5129 = vmatpush.bf16.msra.mxu0 %v3559
    %5130 = vmatpush.bf16.msra.mxu0 %v3551
    %5131 = vmatpush.bf16.msra.mxu0 %v3543
    %5132 = vmatpush.bf16.msra.mxu0 %v3535
    %5133 = vmatmul.bf16.gmra.mxu0 %v1329
    %v5134 = vpop.f32.mrf.mxu0
    %v5135 = vadd.f32 %v5121, %v5134
    %v5136 = vpop.f32.mrf.mxu0
    %v5137 = vadd.f32 %v5123, %v5136
    %5138 = vdwg.mxu0
    %5139 = vmatpush.bf16.msra.mxu0 %v3655
    %5140 = vmatpush.bf16.msra.mxu0 %v3647
    %5141 = vmatpush.bf16.msra.mxu0 %v3639
    %5142 = vmatpush.bf16.msra.mxu0 %v3631
    %5143 = vmatpush.bf16.msra.mxu0 %v3623
    %5144 = vmatpush.bf16.msra.mxu0 %v3615
    %5145 = vmatpush.bf16.msra.mxu0 %v3607
    %5146 = vmatpush.bf16.msra.mxu0 %v3599
    %5147 = vmatmul.bf16.gmra.mxu0 %v1330
    %v5148 = vpop.f32.mrf.mxu0
    %v5149 = vadd.f32 %v5135, %v5148
    %v5150 = vpop.f32.mrf.mxu0
    %v5151 = vadd.f32 %v5137, %v5150
    %5152 = vdwg.mxu0
    %5153 = vmatpush.bf16.msra.mxu0 %v3719
    %5154 = vmatpush.bf16.msra.mxu0 %v3711
    %5155 = vmatpush.bf16.msra.mxu0 %v3703
    %5156 = vmatpush.bf16.msra.mxu0 %v3695
    %5157 = vmatpush.bf16.msra.mxu0 %v3687
    %5158 = vmatpush.bf16.msra.mxu0 %v3679
    %5159 = vmatpush.bf16.msra.mxu0 %v3671
    %5160 = vmatpush.bf16.msra.mxu0 %v3663
    %5161 = vmatmul.bf16.gmra.mxu0 %v1331
    %v5162 = vpop.f32.mrf.mxu0
    %v5163 = vadd.f32 %v5149, %v5162
    %v5164 = vpop.f32.mrf.mxu0
    %v5165 = vadd.f32 %v5151, %v5164
    %5166 = vdwg.mxu0
    %5167 = vmatpush.bf16.msra.mxu0 %v3783
    %5168 = vmatpush.bf16.msra.mxu0 %v3775
    %5169 = vmatpush.bf16.msra.mxu0 %v3767
    %5170 = vmatpush.bf16.msra.mxu0 %v3759
    %5171 = vmatpush.bf16.msra.mxu0 %v3751
    %5172 = vmatpush.bf16.msra.mxu0 %v3743
    %5173 = vmatpush.bf16.msra.mxu0 %v3735
    %5174 = vmatpush.bf16.msra.mxu0 %v3727
    %5175 = vmatmul.bf16.gmra.mxu0 %v1332
    %v5176 = vpop.f32.mrf.mxu0
    %v5177 = vadd.f32 %v5163, %v5176
    %v5178 = vpop.f32.mrf.mxu0
    %v5179 = vadd.f32 %v5165, %v5178
    %5180 = vdwg.mxu0
    %5181 = vmatpush.bf16.msra.mxu0 %v3847
    %5182 = vmatpush.bf16.msra.mxu0 %v3839
    %5183 = vmatpush.bf16.msra.mxu0 %v3831
    %5184 = vmatpush.bf16.msra.mxu0 %v3823
    %5185 = vmatpush.bf16.msra.mxu0 %v3815
    %5186 = vmatpush.bf16.msra.mxu0 %v3807
    %5187 = vmatpush.bf16.msra.mxu0 %v3799
    %5188 = vmatpush.bf16.msra.mxu0 %v3791
    %5189 = vmatmul.bf16.gmra.mxu0 %v1333
    %v5190 = vpop.f32.mrf.mxu0
    %v5191 = vadd.f32 %v5177, %v5190
    %v5192 = vpop.f32.mrf.mxu0
    %v5193 = vadd.f32 %v5179, %v5192
    %5194 = vdwg.mxu0
    %5195 = vmatpush.bf16.msra.mxu0 %v3911
    %5196 = vmatpush.bf16.msra.mxu0 %v3903
    %5197 = vmatpush.bf16.msra.mxu0 %v3895
    %5198 = vmatpush.bf16.msra.mxu0 %v3887
    %5199 = vmatpush.bf16.msra.mxu0 %v3879
    %5200 = vmatpush.bf16.msra.mxu0 %v3871
    %5201 = vmatpush.bf16.msra.mxu0 %v3863
    %5202 = vmatpush.bf16.msra.mxu0 %v3855
    %5203 = vmatmul.bf16.gmra.mxu0 %v1334
    %v5204 = vpop.f32.mrf.mxu0
    %v5205 = vadd.f32 %v5191, %v5204
    %v5206 = vpop.f32.mrf.mxu0
    %v5207 = vadd.f32 %v5193, %v5206
    %5208 = vdwg.mxu0
    %5209 = vmatpush.bf16.msra.mxu0 %v3464
    %5210 = vmatpush.bf16.msra.mxu0 %v3456
    %5211 = vmatpush.bf16.msra.mxu0 %v3448
    %5212 = vmatpush.bf16.msra.mxu0 %v3440
    %5213 = vmatpush.bf16.msra.mxu0 %v3432
    %5214 = vmatpush.bf16.msra.mxu0 %v3424
    %5215 = vmatpush.bf16.msra.mxu0 %v3416
    %5216 = vmatpush.bf16.msra.mxu0 %v3408
    %5217 = vmatmul.bf16.gmra.mxu0 %v1327
    %v5218 = vpop.f32.mrf.mxu0
    %v5219 = vadd.f32 %v1856, %v5218
    %v5220 = vpop.f32.mrf.mxu0
    %v5221 = vadd.f32 %v1856, %v5220
    %5222 = vdwg.mxu0
    %5223 = vmatpush.bf16.msra.mxu0 %v3528
    %5224 = vmatpush.bf16.msra.mxu0 %v3520
    %5225 = vmatpush.bf16.msra.mxu0 %v3512
    %5226 = vmatpush.bf16.msra.mxu0 %v3504
    %5227 = vmatpush.bf16.msra.mxu0 %v3496
    %5228 = vmatpush.bf16.msra.mxu0 %v3488
    %5229 = vmatpush.bf16.msra.mxu0 %v3480
    %5230 = vmatpush.bf16.msra.mxu0 %v3472
    %5231 = vmatmul.bf16.gmra.mxu0 %v1328
    %v5232 = vpop.f32.mrf.mxu0
    %v5233 = vadd.f32 %v5219, %v5232
    %v5234 = vpop.f32.mrf.mxu0
    %v5235 = vadd.f32 %v5221, %v5234
    %5236 = vdwg.mxu0
    %5237 = vmatpush.bf16.msra.mxu0 %v3592
    %5238 = vmatpush.bf16.msra.mxu0 %v3584
    %5239 = vmatpush.bf16.msra.mxu0 %v3576
    %5240 = vmatpush.bf16.msra.mxu0 %v3568
    %5241 = vmatpush.bf16.msra.mxu0 %v3560
    %5242 = vmatpush.bf16.msra.mxu0 %v3552
    %5243 = vmatpush.bf16.msra.mxu0 %v3544
    %5244 = vmatpush.bf16.msra.mxu0 %v3536
    %5245 = vmatmul.bf16.gmra.mxu0 %v1329
    %v5246 = vpop.f32.mrf.mxu0
    %v5247 = vadd.f32 %v5233, %v5246
    %v5248 = vpop.f32.mrf.mxu0
    %v5249 = vadd.f32 %v5235, %v5248
    %5250 = vdwg.mxu0
    %5251 = vmatpush.bf16.msra.mxu0 %v3656
    %5252 = vmatpush.bf16.msra.mxu0 %v3648
    %5253 = vmatpush.bf16.msra.mxu0 %v3640
    %5254 = vmatpush.bf16.msra.mxu0 %v3632
    %5255 = vmatpush.bf16.msra.mxu0 %v3624
    %5256 = vmatpush.bf16.msra.mxu0 %v3616
    %5257 = vmatpush.bf16.msra.mxu0 %v3608
    %5258 = vmatpush.bf16.msra.mxu0 %v3600
    %5259 = vmatmul.bf16.gmra.mxu0 %v1330
    %v5260 = vpop.f32.mrf.mxu0
    %v5261 = vadd.f32 %v5247, %v5260
    %v5262 = vpop.f32.mrf.mxu0
    %v5263 = vadd.f32 %v5249, %v5262
    %5264 = vdwg.mxu0
    %5265 = vmatpush.bf16.msra.mxu0 %v3720
    %5266 = vmatpush.bf16.msra.mxu0 %v3712
    %5267 = vmatpush.bf16.msra.mxu0 %v3704
    %5268 = vmatpush.bf16.msra.mxu0 %v3696
    %5269 = vmatpush.bf16.msra.mxu0 %v3688
    %5270 = vmatpush.bf16.msra.mxu0 %v3680
    %5271 = vmatpush.bf16.msra.mxu0 %v3672
    %5272 = vmatpush.bf16.msra.mxu0 %v3664
    %5273 = vmatmul.bf16.gmra.mxu0 %v1331
    %v5274 = vpop.f32.mrf.mxu0
    %v5275 = vadd.f32 %v5261, %v5274
    %v5276 = vpop.f32.mrf.mxu0
    %v5277 = vadd.f32 %v5263, %v5276
    %5278 = vdwg.mxu0
    %5279 = vmatpush.bf16.msra.mxu0 %v3784
    %5280 = vmatpush.bf16.msra.mxu0 %v3776
    %5281 = vmatpush.bf16.msra.mxu0 %v3768
    %5282 = vmatpush.bf16.msra.mxu0 %v3760
    %5283 = vmatpush.bf16.msra.mxu0 %v3752
    %5284 = vmatpush.bf16.msra.mxu0 %v3744
    %5285 = vmatpush.bf16.msra.mxu0 %v3736
    %5286 = vmatpush.bf16.msra.mxu0 %v3728
    %5287 = vmatmul.bf16.gmra.mxu0 %v1332
    %v5288 = vpop.f32.mrf.mxu0
    %v5289 = vadd.f32 %v5275, %v5288
    %v5290 = vpop.f32.mrf.mxu0
    %v5291 = vadd.f32 %v5277, %v5290
    %5292 = vdwg.mxu0
    %5293 = vmatpush.bf16.msra.mxu0 %v3848
    %5294 = vmatpush.bf16.msra.mxu0 %v3840
    %5295 = vmatpush.bf16.msra.mxu0 %v3832
    %5296 = vmatpush.bf16.msra.mxu0 %v3824
    %5297 = vmatpush.bf16.msra.mxu0 %v3816
    %5298 = vmatpush.bf16.msra.mxu0 %v3808
    %5299 = vmatpush.bf16.msra.mxu0 %v3800
    %5300 = vmatpush.bf16.msra.mxu0 %v3792
    %5301 = vmatmul.bf16.gmra.mxu0 %v1333
    %v5302 = vpop.f32.mrf.mxu0
    %v5303 = vadd.f32 %v5289, %v5302
    %v5304 = vpop.f32.mrf.mxu0
    %v5305 = vadd.f32 %v5291, %v5304
    %5306 = vdwg.mxu0
    %5307 = vmatpush.bf16.msra.mxu0 %v3912
    %5308 = vmatpush.bf16.msra.mxu0 %v3904
    %5309 = vmatpush.bf16.msra.mxu0 %v3896
    %5310 = vmatpush.bf16.msra.mxu0 %v3888
    %5311 = vmatpush.bf16.msra.mxu0 %v3880
    %5312 = vmatpush.bf16.msra.mxu0 %v3872
    %5313 = vmatpush.bf16.msra.mxu0 %v3864
    %5314 = vmatpush.bf16.msra.mxu0 %v3856
    %5315 = vmatmul.bf16.gmra.mxu0 %v1334
    %v5316 = vpop.f32.mrf.mxu0
    %v5317 = vadd.f32 %v5303, %v5316
    %v5318 = vpop.f32.mrf.mxu0
    %v5319 = vadd.f32 %v5305, %v5318
    %5320 = vdwg.mxu0
    %v5321 = vmax.f32 %v4533, 0.0
    %v5322 = vmax.f32 %v4645, 0.0
    %v5323 = vmax.f32 %v4757, 0.0
    %v5324 = vmax.f32 %v4869, 0.0
    %v5325 = vmax.f32 %v4981, 0.0
    %v5326 = vmax.f32 %v5093, 0.0
    %v5327 = vmax.f32 %v5205, 0.0
    %v5328 = vmax.f32 %v5317, 0.0
    %v5329 = vmax.f32 %v4535, 0.0
    %v5330 = vmax.f32 %v4647, 0.0
    %v5331 = vmax.f32 %v4759, 0.0
    %v5332 = vmax.f32 %v4871, 0.0
    %v5333 = vmax.f32 %v4983, 0.0
    %v5334 = vmax.f32 %v5095, 0.0
    %v5335 = vmax.f32 %v5207, 0.0
    %v5336 = vmax.f32 %v5319, 0.0
    %v5337 = vld [vmem:[#allocation15] sm:$0xff]
    %v5339 = vperm.slane %v5337, 0
    %v5340 = vperm.slane %v5337, 1
    %v5341 = vperm.slane %v5337, 2
    %v5342 = vperm.slane %v5337, 3
    %v5343 = vperm.slane %v5337, 4
    %v5344 = vperm.slane %v5337, 5
    %v5345 = vperm.slane %v5337, 6
    %v5346 = vperm.slane %v5337, 7
    %v5355 = vmul.f32 %v5321, %v5339
    %v5356 = vmul.f32 %v5322, %v5340
    %v5357 = vmul.f32 %v5323, %v5341
    %v5358 = vmul.f32 %v5324, %v5342
    %v5359 = vmul.f32 %v5325, %v5343
    %v5360 = vmul.f32 %v5326, %v5344
    %v5361 = vmul.f32 %v5327, %v5345
    %v5362 = vmul.f32 %v5328, %v5346
    %v5363 = vmul.f32 %v5329, %v5339
    %v5364 = vmul.f32 %v5330, %v5340
    %v5365 = vmul.f32 %v5331, %v5341
    %v5366 = vmul.f32 %v5332, %v5342
    %v5367 = vmul.f32 %v5333, %v5343
    %v5368 = vmul.f32 %v5334, %v5344
    %v5369 = vmul.f32 %v5335, %v5345
    %v5370 = vmul.f32 %v5336, %v5346
    %v5371 = vadd.f32 %v5355, %v5356
    %v5372 = vadd.f32 %v5371, %v5357
    %v5373 = vadd.f32 %v5372, %v5358
    %v5374 = vadd.f32 %v5373, %v5359
    %v5375 = vadd.f32 %v5374, %v5360
    %v5376 = vadd.f32 %v5375, %v5361
    %v5377 = vadd.f32 %v5376, %v5362
    %5378 = vadd.xlane.f32.xlu0 %v5377
    %v5379 = vpop.xlane.xlu0 %5378
    %v5380 = vadd.f32 %v5363, %v5364
    %v5381 = vadd.f32 %v5380, %v5365
    %v5382 = vadd.f32 %v5381, %v5366
    %v5383 = vadd.f32 %v5382, %v5367
    %v5384 = vadd.f32 %v5383, %v5368
    %v5385 = vadd.f32 %v5384, %v5369
    %v5386 = vadd.f32 %v5385, %v5370
    %5387 = vadd.xlane.f32.xlu0 %v5386
    %v5388 = vpop.xlane.xlu0 %5387
    %s5389 = sld [smem:[#allocation2]]
    %v5390 = vstv %s5389
    %v5391 = vadd.f32 %v5379, %v5390
    %v5392 = vadd.f32 %v5388, %v5390
    %v5393 = vand.u32 2147483647, %v5391
    %v5394 = vand.u32 2147483647, %v5392
    %v5395 = vsub.f32 0.0, %v5393
    %v5396 = vsub.f32 0.0, %v5394
    %v5397 = vmul.f32 %v5395, 1.442695
    %v5398 = vpow.pop %v5397
    %v5399 = vmul.f32 %v5396, 1.442695
    %v5400 = vpow.pop %v5399
    %v5401 = vadd.f32 %v5398, 1.0
    %v5402 = vadd.f32 %v5400, 1.0
    %v5403 = vrcp.pop %v5401
    %v5404 = vrcp.pop %v5402
    %vm5405 = vcmp.ge.f32.partialorder %v5391, 0.0
    %vm5406 = vcmp.ge.f32.partialorder %v5392, 0.0
    %v5407 = vmul.f32 %v5398, %v5403
    %v5408 = vmul.f32 %v5400, %v5404
    %v5409 = vsel %vm5405, %v5403, %v5407
    %v5410 = vsel %vm5406, %v5404, %v5408
    %vm5411 = vcmask 7168
    %5412 = vst.msk [vmem:[%s9] sm:$0xff] %vm5411, %v5409
    %5413 = vst.msk [vmem:[%s9 + $0x8] sm:$0xff] %vm5411, %v5410
    // Predicated region
    $region70: #{tpu_custom_call.1} parent=1 // pred_check
      _
    $region71: #{tpu_custom_call.1} parent=1 // pred_check_branch
      %5415 = sbr.rel (0) target = $region73
    $region72: #{tpu_custom_call.1} parent=1 // pred_region
      _
    $region73: #{tpu_custom_call.1} parent=1 // pred_fallthru
      _
    // Predicated region
    $region74: #{tpu_custom_call.1} parent=1 // pred_check
      _
    $region75: #{tpu_custom_call.1} parent=1 // pred_check_branch
      %5417 = sbr.rel (0) target = $region77
    $region76: #{tpu_custom_call.1} parent=1 // pred_region
      %5419 = vsyncadd [#allocation5], 0
      %s5420 = sshll.u32 [#allocation17], 4
      %s5421 = int_to_ptr.vmem [resolvable:$true] %s5420
      %s5422 = sshll.u32 %s10, 4
      %s5423 = int_to_ptr.hbm [resolvable:$true] %s5422
      %5428 = dma.vmem_to_hbm [thread:$0]  %s5421, 512, %s5423, [#allocation5], 256, 256, 16
    $region77: #{tpu_custom_call.1} parent=1 // pred_fallthru
      _
    // Predicated region
    $region78: #{tpu_custom_call.1} parent=1 // pred_check
      _
    $region79: #{tpu_custom_call.1} parent=1 // pred_check_branch
      %5430 = sbr.rel (0) target = $region81
    $region80: #{tpu_custom_call.1} parent=1 // pred_region
      _
    $region81: #{tpu_custom_call.1} parent=1 // pred_fallthru
      _
    // Predicated region
    $region82: #{tpu_custom_call.1} parent=1 // pred_check
      _
    $region83: #{tpu_custom_call.1} parent=1 // pred_check_branch
      %5432 = sbr.rel (0) target = $region85
    $region84: #{tpu_custom_call.1} parent=1 // pred_region
      %5434 = dma.done [#allocation5], 512
    $region85: #{tpu_custom_call.1} parent=1 // pred_fallthru
      _
    %5435 = vsyncpa [#allocation4], 1
    %5436 = vsyncpa [#allocation7], 1
    %5437 = vsyncpa [#allocation10], 1
    %5438 = vsyncpa [#allocation13], 1
    %5439 = vsyncpa [#allocation16], 1
    %5440 = vsyncpa [#allocation5], 1

</llo_original>
